<compile_context>
chip_gen: v6e
topology: v6e:2x2x1
jax: 0.10.0
libtpu: 0.0.40
codegen_flags: <defaults>
</compile_context>

<pallas_src>
import jax
import jax.numpy as jnp
from jax import lax
from jax.experimental import pallas as pl
from jax.experimental.pallas import tpu as pltpu


CFG = dict(in_channels=4, o1=4, o2=8, o3=8,
           k1=3, k2=3, k3=3, p1=1, p2=1, p3=1, size=16, fc_out=512)

_CP = 8          # every channel dimension is zero-padded to this many sublanes
_LANE_PAD = 128  # lane padding of the conv staging buffer (one full vreg width)


# ----------------------------------------------------------------------------
# Fused kernel
# ----------------------------------------------------------------------------
def _make_encoder_kernel(H, W, ksizes, n_fc_chunks):
    """Builds the fused (conv+bn+relu)x3 + flatten + fc kernel (one image/step)."""
    CP = _CP
    M = H * W
    LP = _LANE_PAD
    PW = M + 2 * LP
    for K in ksizes:
        assert (K // 2) * W + K // 2 <= LP, "conv kernel too large for lane pad"
    n_pat_rows = max(ksizes) ** 2 * CP

    def kernel(x_ref, w1_ref, s1_ref, w2_ref, s2_ref, w3_ref, s3_ref,
               wfc_ref, bfc_ref, o_ref, pad_scr, pat_scr):
        # x_ref:   (1, CP, M)   one image, channels padded to CP, NCHW-flat
        # wN_ref:  (CP, K*K*CP) BN-scale-folded conv weights
        # sN_ref:  (CP, 1)      folded conv-bias/BN shift per output channel
        # wfc_ref: (CP, M, NF)  fc weight (bf16), chunked by conv-3 channel
        # bfc_ref: (1, NF)      fc bias (f32)
        # o_ref:   (1, 1, NF)   fc output
        # pad_scr: (CP, PW) f32 lane-padded staging buffer for the tap slices
        # pat_scr: (n_pat_rows, M) f32  im2col patches (taps on sublanes, M lanes)

        # x coordinate of every flattened spatial position (for edge masking).
        xx = lax.broadcasted_iota(jnp.int32, (CP, M), 1) % W

        # Zero the staging buffer once: its zero wings give the top/bottom
        # (y-direction) zero padding of the convolution for every layer.
        pad_scr[...] = jnp.zeros((CP, PW), jnp.float32)

        def conv_bn_relu(a, w_ref, s_ref, K):
            # Stage the activation in the middle of the lane-padded buffer.
            pad_scr[:, LP:LP + M] = a
            stage = pad_scr[...]                              # (CP, PW)
            # Build the K*K shifted copies ("im2col") with x-edge masking.
            for kh in range(K):
                for kw in range(K):
                    dy = kh - K // 2
                    dx = kw - K // 2
                    off = dy * W + dx                         # flat lane shift
                    chunk = stage[:, LP + off:LP + off + M]   # static slice
                    if dx > 0:
                        chunk = jnp.where(xx < W - dx, chunk, 0.0)
                    elif dx < 0:
                        chunk = jnp.where(xx >= -dx, chunk, 0.0)
                    kidx = kh * K + kw
                    pat_scr[kidx * CP:(kidx + 1) * CP, :] = chunk
            # Conv as a single MXU matmul; BN scale already folded into w.
            y = jnp.dot(w_ref[...], pat_scr[0:K * K * CP, :],
                        preferred_element_type=jnp.float32)   # (CP, M)
            return jnp.maximum(y + s_ref[...], 0.0)

        a = x_ref[0]                                          # (CP, M) f32
        a = conv_bn_relu(a, w1_ref, s1_ref, ksizes[0])
        a = conv_bn_relu(a, w2_ref, s2_ref, ksizes[1])
        a = conv_bn_relu(a, w3_ref, s3_ref, ksizes[2])

        # (C, H*W) is already the PyTorch NCHW flatten order, so the FC is a
        # sum of per-channel (1, M) @ (M, NF) matmuls: bf16 in, f32 accumulate.
        acc = bfc_ref[...]                                    # (1, NF) f32
        for c in range(n_fc_chunks):
            row = a[c:c + 1, :].astype(jnp.bfloat16)          # (1, M)
            acc = acc + jnp.dot(row, wfc_ref[c],
                                preferred_element_type=jnp.float32)
        o_ref[0] = acc

    return kernel, n_pat_rows, PW


# ----------------------------------------------------------------------------
# Parameter preparation (BN folding, channel padding, layout packing)
# ----------------------------------------------------------------------------
def _fold_conv_bn(w, b, bn, eps=1e-5):
    """Fold conv bias + inference BatchNorm into the conv weight and a shift.

    w: (KH, KW, Cin, Cout) -> w_mat: (CP, KH*KW*CP)   (tap-major, channel-minor)
                              shift: (CP, 1)
    """
    KH, KW, Cin, Cout = w.shape
    CP = _CP
    scale = bn["gamma"] * lax.rsqrt(bn["var"] + eps)           # (Cout,)
    shift = bn["beta"] + scale * (b - bn["mean"])              # (Cout,)
    wf = w * scale[None, None, None, :]                        # fold BN scale
    wf = jnp.pad(wf, ((0, 0), (0, 0), (0, CP - Cin), (0, CP - Cout)))
    w_mat = jnp.transpose(wf, (3, 0, 1, 2)).reshape(CP, KH * KW * CP)
    shift = jnp.pad(shift, (0, CP - Cout)).reshape(CP, 1)
    return w_mat.astype(jnp.float32), shift.astype(jnp.float32)


# ----------------------------------------------------------------------------
# Encoder forward (single fused pallas_call)
# ----------------------------------------------------------------------------
def encoder_forward(params, x_nchw, cfg=CFG):
    B, Cin, H, W = x_nchw.shape
    CP = _CP
    NF = cfg["fc_out"]
    ks = (cfg["k1"], cfg["k2"], cfg["k3"])
    pads = (cfg["p1"], cfg["p2"], cfg["p3"])
    for k, p in zip(ks, pads):
        assert k % 2 == 1 and p == (k - 1) // 2, \
            "fused kernel assumes 'same' convolutions (odd k, pad=(k-1)//2)"
    assert Cin <= CP
    for wname in ("w1", "w2", "w3"):
        assert params[wname].shape[2] <= CP and params[wname].shape[3] <= CP

    # Input: zero-pad channels to CP and flatten spatially (still NCHW order).
    xk = jnp.pad(x_nchw, ((0, 0), (0, CP - Cin), (0, 0), (0, 0)))
    xk = xk.reshape(B, CP, H * W).astype(jnp.float32)

    w1m, s1 = _fold_conv_bn(params["w1"], params["b1"], params["bn1"])
    w2m, s2 = _fold_conv_bn(params["w2"], params["b2"], params["bn2"])
    w3m, s3 = _fold_conv_bn(params["w3"], params["b3"], params["bn3"])

    # FC weight: (o3*H*W, NF) -> (CP, H*W, NF) chunks matching the (C, H*W)
    # activation layout.  bf16 halves the dominant HBM transfer of the model.
    o3 = params["w3"].shape[-1]
    assert params["fc_w"].shape[0] == o3 * H * W
    wfc = params["fc_w"].reshape(o3, H * W, NF)
    if o3 < CP:
        wfc = jnp.pad(wfc, ((0, CP - o3), (0, 0), (0, 0)))
    wfc = wfc.astype(jnp.bfloat16)
    bfc = params["fc_b"].reshape(1, NF).astype(jnp.float32)

    kernel, n_pat_rows, PW = _make_encoder_kernel(H, W, ks, CP)

    out = pl.pallas_call(
        kernel,
        out_shape=jax.ShapeDtypeStruct((B, 1, NF), jnp.float32),
        grid=(B,),
        in_specs=[
            pl.BlockSpec((1, CP, H * W), lambda b: (b, 0, 0)),   # image
            pl.BlockSpec(w1m.shape, lambda b: (0, 0)),
            pl.BlockSpec(s1.shape, lambda b: (0, 0)),
            pl.BlockSpec(w2m.shape, lambda b: (0, 0)),
            pl.BlockSpec(s2.shape, lambda b: (0, 0)),
            pl.BlockSpec(w3m.shape, lambda b: (0, 0)),
            pl.BlockSpec(s3.shape, lambda b: (0, 0)),
            pl.BlockSpec(wfc.shape, lambda b: (0, 0, 0)),        # fc weight
            pl.BlockSpec(bfc.shape, lambda b: (0, 0)),           # fc bias
        ],
        out_specs=pl.BlockSpec((1, 1, NF), lambda b: (b, 0, 0)),
        scratch_shapes=[
            pltpu.VMEM((_CP, PW), jnp.float32),                  # staging buf
            pltpu.VMEM((n_pat_rows, H * W), jnp.float32),        # im2col patches
        ],
        compiler_params=pltpu.CompilerParams(
            dimension_semantics=("parallel",)),
    )(xk, w1m, s1, w2m, s2, w3m, s3, wfc, bfc)

    return out[:, 0, :]


# ----------------------------------------------------------------------------
# Parameters (deterministic, kaiming-normal weights like the PyTorch __init__)
# ----------------------------------------------------------------------------
def make_params(key, cfg=CFG):
    keys = jax.random.split(key, 8)

    def kaiming(k, shape, fan_in):
        return jax.random.normal(k, shape, jnp.float32) * jnp.sqrt(2.0 / fan_in)

    def bias(k, n, fan_in):
        bound = 1.0 / jnp.sqrt(fan_in)
        return jax.random.uniform(k, (n,), jnp.float32, -bound, bound)

    def bn(c):
        return dict(gamma=jnp.ones((c,), jnp.float32),
                    beta=jnp.zeros((c,), jnp.float32),
                    mean=jnp.zeros((c,), jnp.float32),
                    var=jnp.ones((c,), jnp.float32))

    cin, o1, o2, o3 = cfg["in_channels"], cfg["o1"], cfg["o2"], cfg["o3"]
    k1, k2, k3 = cfg["k1"], cfg["k2"], cfg["k3"]
    size = cfg["size"]
    out_hw = size - (k1 - 1) - (k2 - 1) - (k3 - 1) \
        + 2 * (cfg["p1"] + cfg["p2"] + cfg["p3"])
    in_linear = o3 * out_hw ** 2

    params = {
        # conv weights stored as (KH, KW, Cin, Cout)
        "w1": kaiming(keys[0], (k1, k1, cin, o1), cin * k1 * k1),
        "b1": bias(keys[1], o1, cin * k1 * k1),
        "bn1": bn(o1),
        "w2": kaiming(keys[2], (k2, k2, o1, o2), o1 * k2 * k2),
        "b2": bias(keys[3], o2, o1 * k2 * k2),
        "bn2": bn(o2),
        "w3": kaiming(keys[4], (k3, k3, o2, o3), o2 * k3 * k3),
        "b3": bias(keys[5], o3, o2 * k3 * k3),
        "bn3": bn(o3),
        # fc weight stored as (in_linear, 512) == torch_weight.T
        "fc_w": kaiming(keys[6], (in_linear, cfg["fc_out"]), in_linear),
        "fc_b": bias(keys[7], cfg["fc_out"], in_linear),
    }
    return params, in_linear


# ----------------------------------------------------------------------------
# Plain-JAX reference (for a correctness cross-check in __main__)
# ----------------------------------------------------------------------------
def encoder_reference(params, x_nchw, cfg=CFG, eps=1e-5):
    hp = lax.Precision.HIGHEST

    def conv_bn_relu(x, w, b, bn, pad):
        w_oihw = jnp.transpose(w, (3, 2, 0, 1))
        y = lax.conv_general_dilated(
            x, w_oihw, window_strides=(1, 1),
            padding=((pad, pad), (pad, pad)),
            dimension_numbers=("NCHW", "OIHW", "NCHW"),
            precision=hp)
        y = y + b[None, :, None, None]
        scale = bn["gamma"] / jnp.sqrt(bn["var"] + eps)
        y = (y - bn["mean"][None, :, None, None]) * scale[None, :, None, None] \
            + bn["beta"][None, :, None, None]
        return jnp.maximum(y, 0.0)

    x = conv_bn_relu(x_nchw, params["w1"], params["b1"], params["bn1"], cfg["p1"])
    x = conv_bn_relu(x, params["w2"], params["b2"], params["bn2"], cfg["p2"])
    x = conv_bn_relu(x, params["w3"], params["b3"], params["bn3"], cfg["p3"])
    feat = x.reshape(x.shape[0], -1)
    return jnp.dot(feat, params["fc_w"], precision=hp) + params["fc_b"][None, :]


# ----------------------------------------------------------------------------
if __name__ == "__main__":
    key = jax.random.PRNGKey(0)
    k_x, k_p = jax.random.split(key)

    B = 2
    x = jax.random.normal(
        k_x, (B, CFG["in_channels"], CFG["size"], CFG["size"]), jnp.float32)

    params, in_linear = make_params(k_p)
    assert in_linear == CFG["o3"] * CFG["size"] ** 2

    fwd = jax.jit(encoder_forward)
    out = jax.block_until_ready(fwd(params, x))

    assert out.shape == (B, CFG["fc_out"]), out.shape
    assert out.dtype == jnp.float32
    assert bool(jnp.all(jnp.isfinite(out)))

    # Cross-check against a plain-JAX reference of the same forward pass.
    # Tolerance covers the intentional bf16 fc weights inside the kernel.
    ref = encoder_reference(params, x)
    max_err = float(jnp.max(jnp.abs(out - ref)))
    assert max_err < 2e-1, f"kernel vs reference mismatch: max abs err {max_err}"

    print("KERNEL_OK")
</pallas_src>

<mosaic_0001>
module attributes {stable_mosaic.version = 11 : i64} {
  func.func @kernel(%arg0: i32, %arg1: memref<1x8x256xf32, #tpu.memory_space<vmem>>, %arg2: memref<8x72xf32, #tpu.memory_space<vmem>>, %arg3: memref<8x1xf32, #tpu.memory_space<vmem>>, %arg4: memref<8x72xf32, #tpu.memory_space<vmem>>, %arg5: memref<8x1xf32, #tpu.memory_space<vmem>>, %arg6: memref<8x72xf32, #tpu.memory_space<vmem>>, %arg7: memref<8x1xf32, #tpu.memory_space<vmem>>, %arg8: memref<8x256x512xbf16, #tpu.memory_space<vmem>>, %arg9: memref<1x512xf32, #tpu.memory_space<vmem>>, %arg10: memref<1x1x512xf32, #tpu.memory_space<vmem>>, %arg11: memref<8x512xf32, #tpu.memory_space<vmem>>, %arg12: memref<72x256xf32, #tpu.memory_space<vmem>>) attributes {dimension_semantics = [#tpu.dimension_semantics<parallel>], iteration_bounds = array<i64: 2>, scalar_prefetch = 0 : i64, scratch_operands = 2 : i64, tpu.core_type = #tpu.core_type<tc>, window_params = [{transform_indices = @transform_0, window_bounds = array<i64: 1, 8, 256>}, {pipeline_mode = #tpu.pipeline_mode<synchronous>, transform_indices = @transform_1, window_bounds = array<i64: 8, 72>}, {pipeline_mode = #tpu.pipeline_mode<synchronous>, transform_indices = @transform_2, window_bounds = array<i64: 8, 1>}, {pipeline_mode = #tpu.pipeline_mode<synchronous>, transform_indices = @transform_3, window_bounds = array<i64: 8, 72>}, {pipeline_mode = #tpu.pipeline_mode<synchronous>, transform_indices = @transform_4, window_bounds = array<i64: 8, 1>}, {pipeline_mode = #tpu.pipeline_mode<synchronous>, transform_indices = @transform_5, window_bounds = array<i64: 8, 72>}, {pipeline_mode = #tpu.pipeline_mode<synchronous>, transform_indices = @transform_6, window_bounds = array<i64: 8, 1>}, {pipeline_mode = #tpu.pipeline_mode<synchronous>, transform_indices = @transform_7, window_bounds = array<i64: 8, 256, 512>}, {pipeline_mode = #tpu.pipeline_mode<synchronous>, transform_indices = @transform_8, window_bounds = array<i64: 1, 512>}, {transform_indices = @transform_9, window_bounds = array<i64: 1, 1, 512>}]} {
    %0 = tpu.iota {dimensions = array<i32: 1>} : vector<8x256xi32>
    %c16_i32 = arith.constant 16 : i32
    %c0_i32 = arith.constant 0 : i32
    %1 = arith.cmpi eq, %c16_i32, %c0_i32 : i32
    %c1_i32 = arith.constant 1 : i32
    %2 = arith.select %1, %c1_i32, %c16_i32 : i32
    %3 = vector.broadcast %2 : i32 to vector<8x256xi32>
    %4 = arith.remsi %0, %3 : vector<8x256xi32>
    %c0_i32_0 = arith.constant 0 : i32
    %5 = vector.broadcast %c0_i32_0 : i32 to vector<8x256xi32>
    %6 = arith.cmpi ne, %4, %5 : vector<8x256xi32>
    %c0_i32_1 = arith.constant 0 : i32
    %7 = vector.broadcast %c0_i32_1 : i32 to vector<8x256xi32>
    %8 = arith.cmpi slt, %4, %7 : vector<8x256xi32>
    %c0_i32_2 = arith.constant 0 : i32
    %9 = arith.cmpi slt, %2, %c0_i32_2 : i32
    %10 = vector.broadcast %9 : i1 to vector<8x256xi1>
    %11 = vector.broadcast %10 : vector<8x256xi1> to vector<8x256xi1>
    %12 = arith.xori %8, %11 : vector<8x256xi1>
    %13 = arith.andi %12, %6 : vector<8x256xi1>
    %14 = vector.broadcast %2 : i32 to vector<8x256xi32>
    %15 = arith.addi %4, %14 : vector<8x256xi32>
    %16 = arith.select %13, %15, %4 : vector<8x256xi1>, vector<8x256xi32>
    %cst = arith.constant 0.000000e+00 : f32
    %17 = vector.broadcast %cst : f32 to vector<8x512xf32>
    %c0 = arith.constant 0 : index
    %c0_3 = arith.constant 0 : index
    %18 = vector.load %arg11[%c0, %c0_3] : memref<8x512xf32, #tpu.memory_space<vmem>>, vector<8x512xf32>
    tpu.vector_store %arg11[%c0, %c0_3], %17 {strides = array<i32>} : memref<8x512xf32, #tpu.memory_space<vmem>>, vector<8x512xf32>,
    %c0_4 = arith.constant 0 : index
    %c0_5 = arith.constant 0 : index
    %c0_6 = arith.constant 0 : index
    %19 = vector.load %arg1[%c0_4, %c0_5, %c0_6] : memref<1x8x256xf32, #tpu.memory_space<vmem>>, vector<1x8x256xf32>
    %20 = vector.shape_cast %19 : vector<1x8x256xf32> to vector<8x256xf32>
    %c0_7 = arith.constant 0 : index
    %c128 = arith.constant 128 : index
    %21 = vector.load %arg11[%c0_7, %c128] : memref<8x512xf32, #tpu.memory_space<vmem>>, vector<8x256xf32>
    tpu.vector_store %arg11[%c0_7, %c128], %20 {strides = array<i32>} : memref<8x512xf32, #tpu.memory_space<vmem>>, vector<8x256xf32>,
    %c0_8 = arith.constant 0 : index
    %c0_9 = arith.constant 0 : index
    %22 = vector.load %arg11[%c0_8, %c0_9] : memref<8x512xf32, #tpu.memory_space<vmem>>, vector<8x512xf32>
    %23 = vector.extract_strided_slice %22 {offsets = [0, 111], sizes = [8, 256], strides = [1, 1]} : vector<8x512xf32> to vector<8x256xf32>
    %c1_i32_10 = arith.constant 1 : i32
    %24 = vector.broadcast %c1_i32_10 : i32 to vector<8x256xi32>
    %25 = arith.cmpi sge, %16, %24 : vector<8x256xi32>
    %cst_11 = arith.constant 0.000000e+00 : f32
    %26 = vector.broadcast %cst_11 : f32 to vector<8x256xf32>
    %27 = arith.select %25, %23, %26 : vector<8x256xi1>, vector<8x256xf32>
    %c0_12 = arith.constant 0 : index
    %c0_13 = arith.constant 0 : index
    %28 = vector.load %arg12[%c0_12, %c0_13] : memref<72x256xf32, #tpu.memory_space<vmem>>, vector<8x256xf32>
    tpu.vector_store %arg12[%c0_12, %c0_13], %27 {strides = array<i32>} : memref<72x256xf32, #tpu.memory_space<vmem>>, vector<8x256xf32>,
    %29 = vector.extract_strided_slice %22 {offsets = [0, 112], sizes = [8, 256], strides = [1, 1]} : vector<8x512xf32> to vector<8x256xf32>
    %c8 = arith.constant 8 : index
    %c0_14 = arith.constant 0 : index
    %30 = vector.load %arg12[%c8, %c0_14] : memref<72x256xf32, #tpu.memory_space<vmem>>, vector<8x256xf32>
    tpu.vector_store %arg12[%c8, %c0_14], %29 {strides = array<i32>} : memref<72x256xf32, #tpu.memory_space<vmem>>, vector<8x256xf32>,
    %31 = vector.extract_strided_slice %22 {offsets = [0, 113], sizes = [8, 256], strides = [1, 1]} : vector<8x512xf32> to vector<8x256xf32>
    %c15_i32 = arith.constant 15 : i32
    %32 = vector.broadcast %c15_i32 : i32 to vector<8x256xi32>
    %33 = arith.cmpi slt, %16, %32 : vector<8x256xi32>
    %cst_15 = arith.constant 0.000000e+00 : f32
    %34 = vector.broadcast %cst_15 : f32 to vector<8x256xf32>
    %35 = arith.select %33, %31, %34 : vector<8x256xi1>, vector<8x256xf32>
    %c16 = arith.constant 16 : index
    %c0_16 = arith.constant 0 : index
    %36 = vector.load %arg12[%c16, %c0_16] : memref<72x256xf32, #tpu.memory_space<vmem>>, vector<8x256xf32>
    tpu.vector_store %arg12[%c16, %c0_16], %35 {strides = array<i32>} : memref<72x256xf32, #tpu.memory_space<vmem>>, vector<8x256xf32>,
    %37 = vector.extract_strided_slice %22 {offsets = [0, 127], sizes = [8, 256], strides = [1, 1]} : vector<8x512xf32> to vector<8x256xf32>
    %c1_i32_17 = arith.constant 1 : i32
    %38 = vector.broadcast %c1_i32_17 : i32 to vector<8x256xi32>
    %39 = arith.cmpi sge, %16, %38 : vector<8x256xi32>
    %cst_18 = arith.constant 0.000000e+00 : f32
    %40 = vector.broadcast %cst_18 : f32 to vector<8x256xf32>
    %41 = arith.select %39, %37, %40 : vector<8x256xi1>, vector<8x256xf32>
    %c24 = arith.constant 24 : index
    %c0_19 = arith.constant 0 : index
    %42 = vector.load %arg12[%c24, %c0_19] : memref<72x256xf32, #tpu.memory_space<vmem>>, vector<8x256xf32>
    tpu.vector_store %arg12[%c24, %c0_19], %41 {strides = array<i32>} : memref<72x256xf32, #tpu.memory_space<vmem>>, vector<8x256xf32>,
    %43 = vector.extract_strided_slice %22 {offsets = [0, 128], sizes = [8, 256], strides = [1, 1]} : vector<8x512xf32> to vector<8x256xf32>
    %c32 = arith.constant 32 : index
    %c0_20 = arith.constant 0 : index
    %44 = vector.load %arg12[%c32, %c0_20] : memref<72x256xf32, #tpu.memory_space<vmem>>, vector<8x256xf32>
    tpu.vector_store %arg12[%c32, %c0_20], %43 {strides = array<i32>} : memref<72x256xf32, #tpu.memory_space<vmem>>, vector<8x256xf32>,
    %45 = vector.extract_strided_slice %22 {offsets = [0, 129], sizes = [8, 256], strides = [1, 1]} : vector<8x512xf32> to vector<8x256xf32>
    %c15_i32_21 = arith.constant 15 : i32
    %46 = vector.broadcast %c15_i32_21 : i32 to vector<8x256xi32>
    %47 = arith.cmpi slt, %16, %46 : vector<8x256xi32>
    %cst_22 = arith.constant 0.000000e+00 : f32
    %48 = vector.broadcast %cst_22 : f32 to vector<8x256xf32>
    %49 = arith.select %47, %45, %48 : vector<8x256xi1>, vector<8x256xf32>
    %c40 = arith.constant 40 : index
    %c0_23 = arith.constant 0 : index
    %50 = vector.load %arg12[%c40, %c0_23] : memref<72x256xf32, #tpu.memory_space<vmem>>, vector<8x256xf32>
    tpu.vector_store %arg12[%c40, %c0_23], %49 {strides = array<i32>} : memref<72x256xf32, #tpu.memory_space<vmem>>, vector<8x256xf32>,
    %51 = vector.extract_strided_slice %22 {offsets = [0, 143], sizes = [8, 256], strides = [1, 1]} : vector<8x512xf32> to vector<8x256xf32>
    %c1_i32_24 = arith.constant 1 : i32
    %52 = vector.broadcast %c1_i32_24 : i32 to vector<8x256xi32>
    %53 = arith.cmpi sge, %16, %52 : vector<8x256xi32>
    %cst_25 = arith.constant 0.000000e+00 : f32
    %54 = vector.broadcast %cst_25 : f32 to vector<8x256xf32>
    %55 = arith.select %53, %51, %54 : vector<8x256xi1>, vector<8x256xf32>
    %c48 = arith.constant 48 : index
    %c0_26 = arith.constant 0 : index
    %56 = vector.load %arg12[%c48, %c0_26] : memref<72x256xf32, #tpu.memory_space<vmem>>, vector<8x256xf32>
    tpu.vector_store %arg12[%c48, %c0_26], %55 {strides = array<i32>} : memref<72x256xf32, #tpu.memory_space<vmem>>, vector<8x256xf32>,
    %57 = vector.extract_strided_slice %22 {offsets = [0, 144], sizes = [8, 256], strides = [1, 1]} : vector<8x512xf32> to vector<8x256xf32>
    %c56 = arith.constant 56 : index
    %c0_27 = arith.constant 0 : index
    %58 = vector.load %arg12[%c56, %c0_27] : memref<72x256xf32, #tpu.memory_space<vmem>>, vector<8x256xf32>
    tpu.vector_store %arg12[%c56, %c0_27], %57 {strides = array<i32>} : memref<72x256xf32, #tpu.memory_space<vmem>>, vector<8x256xf32>,
    %59 = vector.extract_strided_slice %22 {offsets = [0, 145], sizes = [8, 256], strides = [1, 1]} : vector<8x512xf32> to vector<8x256xf32>
    %c15_i32_28 = arith.constant 15 : i32
    %60 = vector.broadcast %c15_i32_28 : i32 to vector<8x256xi32>
    %61 = arith.cmpi slt, %16, %60 : vector<8x256xi32>
    %cst_29 = arith.constant 0.000000e+00 : f32
    %62 = vector.broadcast %cst_29 : f32 to vector<8x256xf32>
    %63 = arith.select %61, %59, %62 : vector<8x256xi1>, vector<8x256xf32>
    %c64 = arith.constant 64 : index
    %c0_30 = arith.constant 0 : index
    %64 = vector.load %arg12[%c64, %c0_30] : memref<72x256xf32, #tpu.memory_space<vmem>>, vector<8x256xf32>
    tpu.vector_store %arg12[%c64, %c0_30], %63 {strides = array<i32>} : memref<72x256xf32, #tpu.memory_space<vmem>>, vector<8x256xf32>,
    %c0_31 = arith.constant 0 : index
    %c0_32 = arith.constant 0 : index
    %65 = vector.load %arg2[%c0_31, %c0_32] : memref<8x72xf32, #tpu.memory_space<vmem>>, vector<8x72xf32>
    %c0_33 = arith.constant 0 : index
    %c0_34 = arith.constant 0 : index
    %66 = vector.load %arg12[%c0_33, %c0_34] : memref<72x256xf32, #tpu.memory_space<vmem>>, vector<72x256xf32>
    %cst_35 = arith.constant dense<0.000000e+00> : vector<8x256xf32>
    %67 = tpu.matmul %65, %66, %cst_35 {dimension_numbers = #tpu.dot_dimension_numbers<[1], [0], [0], [1], [0, 0, 1, 1], [], []>} : vector<8x72xf32>, vector<72x256xf32>, vector<8x256xf32> -> vector<8x256xf32>
    %c0_36 = arith.constant 0 : index
    %c0_37 = arith.constant 0 : index
    %68 = vector.load %arg3[%c0_36, %c0_37] : memref<8x1xf32, #tpu.memory_space<vmem>>, vector<8x1xf32>
    %69 = vector.broadcast %68 : vector<8x1xf32> to vector<8x256xf32>
    %70 = arith.addf %67, %69 : vector<8x256xf32>
    %cst_38 = arith.constant 0.000000e+00 : f32
    %71 = vector.broadcast %cst_38 : f32 to vector<8x256xf32>
    %72 = arith.maximumf %70, %71 : vector<8x256xf32>
    %c0_39 = arith.constant 0 : index
    %c128_40 = arith.constant 128 : index
    %73 = vector.load %arg11[%c0_39, %c128_40] : memref<8x512xf32, #tpu.memory_space<vmem>>, vector<8x256xf32>
    tpu.vector_store %arg11[%c0_39, %c128_40], %72 {strides = array<i32>} : memref<8x512xf32, #tpu.memory_space<vmem>>, vector<8x256xf32>,
    %c0_41 = arith.constant 0 : index
    %c0_42 = arith.constant 0 : index
    %74 = vector.load %arg11[%c0_41, %c0_42] : memref<8x512xf32, #tpu.memory_space<vmem>>, vector<8x512xf32>
    %75 = vector.extract_strided_slice %74 {offsets = [0, 111], sizes = [8, 256], strides = [1, 1]} : vector<8x512xf32> to vector<8x256xf32>
    %c1_i32_43 = arith.constant 1 : i32
    %76 = vector.broadcast %c1_i32_43 : i32 to vector<8x256xi32>
    %77 = arith.cmpi sge, %16, %76 : vector<8x256xi32>
    %cst_44 = arith.constant 0.000000e+00 : f32
    %78 = vector.broadcast %cst_44 : f32 to vector<8x256xf32>
    %79 = arith.select %77, %75, %78 : vector<8x256xi1>, vector<8x256xf32>
    %c0_45 = arith.constant 0 : index
    %c0_46 = arith.constant 0 : index
    %80 = vector.load %arg12[%c0_45, %c0_46] : memref<72x256xf32, #tpu.memory_space<vmem>>, vector<8x256xf32>
    tpu.vector_store %arg12[%c0_45, %c0_46], %79 {strides = array<i32>} : memref<72x256xf32, #tpu.memory_space<vmem>>, vector<8x256xf32>,
    %81 = vector.extract_strided_slice %74 {offsets = [0, 112], sizes = [8, 256], strides = [1, 1]} : vector<8x512xf32> to vector<8x256xf32>
    %c8_47 = arith.constant 8 : index
    %c0_48 = arith.constant 0 : index
    %82 = vector.load %arg12[%c8_47, %c0_48] : memref<72x256xf32, #tpu.memory_space<vmem>>, vector<8x256xf32>
    tpu.vector_store %arg12[%c8_47, %c0_48], %81 {strides = array<i32>} : memref<72x256xf32, #tpu.memory_space<vmem>>, vector<8x256xf32>,
    %83 = vector.extract_strided_slice %74 {offsets = [0, 113], sizes = [8, 256], strides = [1, 1]} : vector<8x512xf32> to vector<8x256xf32>
    %c15_i32_49 = arith.constant 15 : i32
    %84 = vector.broadcast %c15_i32_49 : i32 to vector<8x256xi32>
    %85 = arith.cmpi slt, %16, %84 : vector<8x256xi32>
    %cst_50 = arith.constant 0.000000e+00 : f32
    %86 = vector.broadcast %cst_50 : f32 to vector<8x256xf32>
    %87 = arith.select %85, %83, %86 : vector<8x256xi1>, vector<8x256xf32>
    %c16_51 = arith.constant 16 : index
    %c0_52 = arith.constant 0 : index
    %88 = vector.load %arg12[%c16_51, %c0_52] : memref<72x256xf32, #tpu.memory_space<vmem>>, vector<8x256xf32>
    tpu.vector_store %arg12[%c16_51, %c0_52], %87 {strides = array<i32>} : memref<72x256xf32, #tpu.memory_space<vmem>>, vector<8x256xf32>,
    %89 = vector.extract_strided_slice %74 {offsets = [0, 127], sizes = [8, 256], strides = [1, 1]} : vector<8x512xf32> to vector<8x256xf32>
    %c1_i32_53 = arith.constant 1 : i32
    %90 = vector.broadcast %c1_i32_53 : i32 to vector<8x256xi32>
    %91 = arith.cmpi sge, %16, %90 : vector<8x256xi32>
    %cst_54 = arith.constant 0.000000e+00 : f32
    %92 = vector.broadcast %cst_54 : f32 to vector<8x256xf32>
    %93 = arith.select %91, %89, %92 : vector<8x256xi1>, vector<8x256xf32>
    %c24_55 = arith.constant 24 : index
    %c0_56 = arith.constant 0 : index
    %94 = vector.load %arg12[%c24_55, %c0_56] : memref<72x256xf32, #tpu.memory_space<vmem>>, vector<8x256xf32>
    tpu.vector_store %arg12[%c24_55, %c0_56], %93 {strides = array<i32>} : memref<72x256xf32, #tpu.memory_space<vmem>>, vector<8x256xf32>,
    %95 = vector.extract_strided_slice %74 {offsets = [0, 128], sizes = [8, 256], strides = [1, 1]} : vector<8x512xf32> to vector<8x256xf32>
    %c32_57 = arith.constant 32 : index
    %c0_58 = arith.constant 0 : index
    %96 = vector.load %arg12[%c32_57, %c0_58] : memref<72x256xf32, #tpu.memory_space<vmem>>, vector<8x256xf32>
    tpu.vector_store %arg12[%c32_57, %c0_58], %95 {strides = array<i32>} : memref<72x256xf32, #tpu.memory_space<vmem>>, vector<8x256xf32>,
    %97 = vector.extract_strided_slice %74 {offsets = [0, 129], sizes = [8, 256], strides = [1, 1]} : vector<8x512xf32> to vector<8x256xf32>
    %c15_i32_59 = arith.constant 15 : i32
    %98 = vector.broadcast %c15_i32_59 : i32 to vector<8x256xi32>
    %99 = arith.cmpi slt, %16, %98 : vector<8x256xi32>
    %cst_60 = arith.constant 0.000000e+00 : f32
    %100 = vector.broadcast %cst_60 : f32 to vector<8x256xf32>
    %101 = arith.select %99, %97, %100 : vector<8x256xi1>, vector<8x256xf32>
    %c40_61 = arith.constant 40 : index
    %c0_62 = arith.constant 0 : index
    %102 = vector.load %arg12[%c40_61, %c0_62] : memref<72x256xf32, #tpu.memory_space<vmem>>, vector<8x256xf32>
    tpu.vector_store %arg12[%c40_61, %c0_62], %101 {strides = array<i32>} : memref<72x256xf32, #tpu.memory_space<vmem>>, vector<8x256xf32>,
    %103 = vector.extract_strided_slice %74 {offsets = [0, 143], sizes = [8, 256], strides = [1, 1]} : vector<8x512xf32> to vector<8x256xf32>
    %c1_i32_63 = arith.constant 1 : i32
    %104 = vector.broadcast %c1_i32_63 : i32 to vector<8x256xi32>
    %105 = arith.cmpi sge, %16, %104 : vector<8x256xi32>
    %cst_64 = arith.constant 0.000000e+00 : f32
    %106 = vector.broadcast %cst_64 : f32 to vector<8x256xf32>
    %107 = arith.select %105, %103, %106 : vector<8x256xi1>, vector<8x256xf32>
    %c48_65 = arith.constant 48 : index
    %c0_66 = arith.constant 0 : index
    %108 = vector.load %arg12[%c48_65, %c0_66] : memref<72x256xf32, #tpu.memory_space<vmem>>, vector<8x256xf32>
    tpu.vector_store %arg12[%c48_65, %c0_66], %107 {strides = array<i32>} : memref<72x256xf32, #tpu.memory_space<vmem>>, vector<8x256xf32>,
    %109 = vector.extract_strided_slice %74 {offsets = [0, 144], sizes = [8, 256], strides = [1, 1]} : vector<8x512xf32> to vector<8x256xf32>
    %c56_67 = arith.constant 56 : index
    %c0_68 = arith.constant 0 : index
    %110 = vector.load %arg12[%c56_67, %c0_68] : memref<72x256xf32, #tpu.memory_space<vmem>>, vector<8x256xf32>
    tpu.vector_store %arg12[%c56_67, %c0_68], %109 {strides = array<i32>} : memref<72x256xf32, #tpu.memory_space<vmem>>, vector<8x256xf32>,
    %111 = vector.extract_strided_slice %74 {offsets = [0, 145], sizes = [8, 256], strides = [1, 1]} : vector<8x512xf32> to vector<8x256xf32>
    %c15_i32_69 = arith.constant 15 : i32
    %112 = vector.broadcast %c15_i32_69 : i32 to vector<8x256xi32>
    %113 = arith.cmpi slt, %16, %112 : vector<8x256xi32>
    %cst_70 = arith.constant 0.000000e+00 : f32
    %114 = vector.broadcast %cst_70 : f32 to vector<8x256xf32>
    %115 = arith.select %113, %111, %114 : vector<8x256xi1>, vector<8x256xf32>
    %c64_71 = arith.constant 64 : index
    %c0_72 = arith.constant 0 : index
    %116 = vector.load %arg12[%c64_71, %c0_72] : memref<72x256xf32, #tpu.memory_space<vmem>>, vector<8x256xf32>
    tpu.vector_store %arg12[%c64_71, %c0_72], %115 {strides = array<i32>} : memref<72x256xf32, #tpu.memory_space<vmem>>, vector<8x256xf32>,
    %c0_73 = arith.constant 0 : index
    %c0_74 = arith.constant 0 : index
    %117 = vector.load %arg4[%c0_73, %c0_74] : memref<8x72xf32, #tpu.memory_space<vmem>>, vector<8x72xf32>
    %c0_75 = arith.constant 0 : index
    %c0_76 = arith.constant 0 : index
    %118 = vector.load %arg12[%c0_75, %c0_76] : memref<72x256xf32, #tpu.memory_space<vmem>>, vector<72x256xf32>
    %cst_77 = arith.constant dense<0.000000e+00> : vector<8x256xf32>
    %119 = tpu.matmul %117, %118, %cst_77 {dimension_numbers = #tpu.dot_dimension_numbers<[1], [0], [0], [1], [0, 0, 1, 1], [], []>} : vector<8x72xf32>, vector<72x256xf32>, vector<8x256xf32> -> vector<8x256xf32>
    %c0_78 = arith.constant 0 : index
    %c0_79 = arith.constant 0 : index
    %120 = vector.load %arg5[%c0_78, %c0_79] : memref<8x1xf32, #tpu.memory_space<vmem>>, vector<8x1xf32>
    %121 = vector.broadcast %120 : vector<8x1xf32> to vector<8x256xf32>
    %122 = arith.addf %119, %121 : vector<8x256xf32>
    %cst_80 = arith.constant 0.000000e+00 : f32
    %123 = vector.broadcast %cst_80 : f32 to vector<8x256xf32>
    %124 = arith.maximumf %122, %123 : vector<8x256xf32>
    %c0_81 = arith.constant 0 : index
    %c128_82 = arith.constant 128 : index
    %125 = vector.load %arg11[%c0_81, %c128_82] : memref<8x512xf32, #tpu.memory_space<vmem>>, vector<8x256xf32>
    tpu.vector_store %arg11[%c0_81, %c128_82], %124 {strides = array<i32>} : memref<8x512xf32, #tpu.memory_space<vmem>>, vector<8x256xf32>,
    %c0_83 = arith.constant 0 : index
    %c0_84 = arith.constant 0 : index
    %126 = vector.load %arg11[%c0_83, %c0_84] : memref<8x512xf32, #tpu.memory_space<vmem>>, vector<8x512xf32>
    %127 = vector.extract_strided_slice %126 {offsets = [0, 111], sizes = [8, 256], strides = [1, 1]} : vector<8x512xf32> to vector<8x256xf32>
    %c1_i32_85 = arith.constant 1 : i32
    %128 = vector.broadcast %c1_i32_85 : i32 to vector<8x256xi32>
    %129 = arith.cmpi sge, %16, %128 : vector<8x256xi32>
    %cst_86 = arith.constant 0.000000e+00 : f32
    %130 = vector.broadcast %cst_86 : f32 to vector<8x256xf32>
    %131 = arith.select %129, %127, %130 : vector<8x256xi1>, vector<8x256xf32>
    %c0_87 = arith.constant 0 : index
    %c0_88 = arith.constant 0 : index
    %132 = vector.load %arg12[%c0_87, %c0_88] : memref<72x256xf32, #tpu.memory_space<vmem>>, vector<8x256xf32>
    tpu.vector_store %arg12[%c0_87, %c0_88], %131 {strides = array<i32>} : memref<72x256xf32, #tpu.memory_space<vmem>>, vector<8x256xf32>,
    %133 = vector.extract_strided_slice %126 {offsets = [0, 112], sizes = [8, 256], strides = [1, 1]} : vector<8x512xf32> to vector<8x256xf32>
    %c8_89 = arith.constant 8 : index
    %c0_90 = arith.constant 0 : index
    %134 = vector.load %arg12[%c8_89, %c0_90] : memref<72x256xf32, #tpu.memory_space<vmem>>, vector<8x256xf32>
    tpu.vector_store %arg12[%c8_89, %c0_90], %133 {strides = array<i32>} : memref<72x256xf32, #tpu.memory_space<vmem>>, vector<8x256xf32>,
    %135 = vector.extract_strided_slice %126 {offsets = [0, 113], sizes = [8, 256], strides = [1, 1]} : vector<8x512xf32> to vector<8x256xf32>
    %c15_i32_91 = arith.constant 15 : i32
    %136 = vector.broadcast %c15_i32_91 : i32 to vector<8x256xi32>
    %137 = arith.cmpi slt, %16, %136 : vector<8x256xi32>
    %cst_92 = arith.constant 0.000000e+00 : f32
    %138 = vector.broadcast %cst_92 : f32 to vector<8x256xf32>
    %139 = arith.select %137, %135, %138 : vector<8x256xi1>, vector<8x256xf32>
    %c16_93 = arith.constant 16 : index
    %c0_94 = arith.constant 0 : index
    %140 = vector.load %arg12[%c16_93, %c0_94] : memref<72x256xf32, #tpu.memory_space<vmem>>, vector<8x256xf32>
    tpu.vector_store %arg12[%c16_93, %c0_94], %139 {strides = array<i32>} : memref<72x256xf32, #tpu.memory_space<vmem>>, vector<8x256xf32>,
    %141 = vector.extract_strided_slice %126 {offsets = [0, 127], sizes = [8, 256], strides = [1, 1]} : vector<8x512xf32> to vector<8x256xf32>
    %c1_i32_95 = arith.constant 1 : i32
    %142 = vector.broadcast %c1_i32_95 : i32 to vector<8x256xi32>
    %143 = arith.cmpi sge, %16, %142 : vector<8x256xi32>
    %cst_96 = arith.constant 0.000000e+00 : f32
    %144 = vector.broadcast %cst_96 : f32 to vector<8x256xf32>
    %145 = arith.select %143, %141, %144 : vector<8x256xi1>, vector<8x256xf32>
    %c24_97 = arith.constant 24 : index
    %c0_98 = arith.constant 0 : index
    %146 = vector.load %arg12[%c24_97, %c0_98] : memref<72x256xf32, #tpu.memory_space<vmem>>, vector<8x256xf32>
    tpu.vector_store %arg12[%c24_97, %c0_98], %145 {strides = array<i32>} : memref<72x256xf32, #tpu.memory_space<vmem>>, vector<8x256xf32>,
    %147 = vector.extract_strided_slice %126 {offsets = [0, 128], sizes = [8, 256], strides = [1, 1]} : vector<8x512xf32> to vector<8x256xf32>
    %c32_99 = arith.constant 32 : index
    %c0_100 = arith.constant 0 : index
    %148 = vector.load %arg12[%c32_99, %c0_100] : memref<72x256xf32, #tpu.memory_space<vmem>>, vector<8x256xf32>
    tpu.vector_store %arg12[%c32_99, %c0_100], %147 {strides = array<i32>} : memref<72x256xf32, #tpu.memory_space<vmem>>, vector<8x256xf32>,
    %149 = vector.extract_strided_slice %126 {offsets = [0, 129], sizes = [8, 256], strides = [1, 1]} : vector<8x512xf32> to vector<8x256xf32>
    %c15_i32_101 = arith.constant 15 : i32
    %150 = vector.broadcast %c15_i32_101 : i32 to vector<8x256xi32>
    %151 = arith.cmpi slt, %16, %150 : vector<8x256xi32>
    %cst_102 = arith.constant 0.000000e+00 : f32
    %152 = vector.broadcast %cst_102 : f32 to vector<8x256xf32>
    %153 = arith.select %151, %149, %152 : vector<8x256xi1>, vector<8x256xf32>
    %c40_103 = arith.constant 40 : index
    %c0_104 = arith.constant 0 : index
    %154 = vector.load %arg12[%c40_103, %c0_104] : memref<72x256xf32, #tpu.memory_space<vmem>>, vector<8x256xf32>
    tpu.vector_store %arg12[%c40_103, %c0_104], %153 {strides = array<i32>} : memref<72x256xf32, #tpu.memory_space<vmem>>, vector<8x256xf32>,
    %155 = vector.extract_strided_slice %126 {offsets = [0, 143], sizes = [8, 256], strides = [1, 1]} : vector<8x512xf32> to vector<8x256xf32>
    %c1_i32_105 = arith.constant 1 : i32
    %156 = vector.broadcast %c1_i32_105 : i32 to vector<8x256xi32>
    %157 = arith.cmpi sge, %16, %156 : vector<8x256xi32>
    %cst_106 = arith.constant 0.000000e+00 : f32
    %158 = vector.broadcast %cst_106 : f32 to vector<8x256xf32>
    %159 = arith.select %157, %155, %158 : vector<8x256xi1>, vector<8x256xf32>
    %c48_107 = arith.constant 48 : index
    %c0_108 = arith.constant 0 : index
    %160 = vector.load %arg12[%c48_107, %c0_108] : memref<72x256xf32, #tpu.memory_space<vmem>>, vector<8x256xf32>
    tpu.vector_store %arg12[%c48_107, %c0_108], %159 {strides = array<i32>} : memref<72x256xf32, #tpu.memory_space<vmem>>, vector<8x256xf32>,
    %161 = vector.extract_strided_slice %126 {offsets = [0, 144], sizes = [8, 256], strides = [1, 1]} : vector<8x512xf32> to vector<8x256xf32>
    %c56_109 = arith.constant 56 : index
    %c0_110 = arith.constant 0 : index
    %162 = vector.load %arg12[%c56_109, %c0_110] : memref<72x256xf32, #tpu.memory_space<vmem>>, vector<8x256xf32>
    tpu.vector_store %arg12[%c56_109, %c0_110], %161 {strides = array<i32>} : memref<72x256xf32, #tpu.memory_space<vmem>>, vector<8x256xf32>,
    %163 = vector.extract_strided_slice %126 {offsets = [0, 145], sizes = [8, 256], strides = [1, 1]} : vector<8x512xf32> to vector<8x256xf32>
    %c15_i32_111 = arith.constant 15 : i32
    %164 = vector.broadcast %c15_i32_111 : i32 to vector<8x256xi32>
    %165 = arith.cmpi slt, %16, %164 : vector<8x256xi32>
    %cst_112 = arith.constant 0.000000e+00 : f32
    %166 = vector.broadcast %cst_112 : f32 to vector<8x256xf32>
    %167 = arith.select %165, %163, %166 : vector<8x256xi1>, vector<8x256xf32>
    %c64_113 = arith.constant 64 : index
    %c0_114 = arith.constant 0 : index
    %168 = vector.load %arg12[%c64_113, %c0_114] : memref<72x256xf32, #tpu.memory_space<vmem>>, vector<8x256xf32>
    tpu.vector_store %arg12[%c64_113, %c0_114], %167 {strides = array<i32>} : memref<72x256xf32, #tpu.memory_space<vmem>>, vector<8x256xf32>,
    %c0_115 = arith.constant 0 : index
    %c0_116 = arith.constant 0 : index
    %169 = vector.load %arg6[%c0_115, %c0_116] : memref<8x72xf32, #tpu.memory_space<vmem>>, vector<8x72xf32>
    %c0_117 = arith.constant 0 : index
    %c0_118 = arith.constant 0 : index
    %170 = vector.load %arg12[%c0_117, %c0_118] : memref<72x256xf32, #tpu.memory_space<vmem>>, vector<72x256xf32>
    %cst_119 = arith.constant dense<0.000000e+00> : vector<8x256xf32>
    %171 = tpu.matmul %169, %170, %cst_119 {dimension_numbers = #tpu.dot_dimension_numbers<[1], [0], [0], [1], [0, 0, 1, 1], [], []>} : vector<8x72xf32>, vector<72x256xf32>, vector<8x256xf32> -> vector<8x256xf32>
    %c0_120 = arith.constant 0 : index
    %c0_121 = arith.constant 0 : index
    %172 = vector.load %arg7[%c0_120, %c0_121] : memref<8x1xf32, #tpu.memory_space<vmem>>, vector<8x1xf32>
    %173 = vector.broadcast %172 : vector<8x1xf32> to vector<8x256xf32>
    %174 = arith.addf %171, %173 : vector<8x256xf32>
    %cst_122 = arith.constant 0.000000e+00 : f32
    %175 = vector.broadcast %cst_122 : f32 to vector<8x256xf32>
    %176 = arith.maximumf %174, %175 : vector<8x256xf32>
    %c0_123 = arith.constant 0 : index
    %c0_124 = arith.constant 0 : index
    %177 = vector.load %arg9[%c0_123, %c0_124] : memref<1x512xf32, #tpu.memory_space<vmem>>, vector<1x512xf32>
    %178 = vector.extract_strided_slice %176 {offsets = [0, 0], sizes = [1, 256], strides = [1, 1]} : vector<8x256xf32> to vector<1x256xf32>
    %179 = arith.truncf %178 : vector<1x256xf32> to vector<1x256xbf16>
    %c0_125 = arith.constant 0 : index
    %c0_126 = arith.constant 0 : index
    %c0_127 = arith.constant 0 : index
    %180 = vector.load %arg8[%c0_125, %c0_126, %c0_127] : memref<8x256x512xbf16, #tpu.memory_space<vmem>>, vector<1x256x512xbf16>
    %181 = vector.shape_cast %180 : vector<1x256x512xbf16> to vector<256x512xbf16>
    %cst_128 = arith.constant dense<0.000000e+00> : vector<1x512xf32>
    %182 = tpu.matmul %179, %181, %cst_128 {dimension_numbers = #tpu.dot_dimension_numbers<[1], [0], [0], [1], [0, 0, 1, 1], [], []>} : vector<1x256xbf16>, vector<256x512xbf16>, vector<1x512xf32> -> vector<1x512xf32>
    %183 = arith.addf %177, %182 : vector<1x512xf32>
    %184 = vector.extract_strided_slice %176 {offsets = [1, 0], sizes = [1, 256], strides = [1, 1]} : vector<8x256xf32> to vector<1x256xf32>
    %185 = arith.truncf %184 : vector<1x256xf32> to vector<1x256xbf16>
    %c1 = arith.constant 1 : index
    %c0_129 = arith.constant 0 : index
    %c0_130 = arith.constant 0 : index
    %186 = vector.load %arg8[%c1, %c0_129, %c0_130] : memref<8x256x512xbf16, #tpu.memory_space<vmem>>, vector<1x256x512xbf16>
    %187 = vector.shape_cast %186 : vector<1x256x512xbf16> to vector<256x512xbf16>
    %cst_131 = arith.constant dense<0.000000e+00> : vector<1x512xf32>
    %188 = tpu.matmul %185, %187, %cst_131 {dimension_numbers = #tpu.dot_dimension_numbers<[1], [0], [0], [1], [0, 0, 1, 1], [], []>} : vector<1x256xbf16>, vector<256x512xbf16>, vector<1x512xf32> -> vector<1x512xf32>
    %189 = arith.addf %183, %188 : vector<1x512xf32>
    %190 = vector.extract_strided_slice %176 {offsets = [2, 0], sizes = [1, 256], strides = [1, 1]} : vector<8x256xf32> to vector<1x256xf32>
    %191 = arith.truncf %190 : vector<1x256xf32> to vector<1x256xbf16>
    %c2 = arith.constant 2 : index
    %c0_132 = arith.constant 0 : index
    %c0_133 = arith.constant 0 : index
    %192 = vector.load %arg8[%c2, %c0_132, %c0_133] : memref<8x256x512xbf16, #tpu.memory_space<vmem>>, vector<1x256x512xbf16>
    %193 = vector.shape_cast %192 : vector<1x256x512xbf16> to vector<256x512xbf16>
    %cst_134 = arith.constant dense<0.000000e+00> : vector<1x512xf32>
    %194 = tpu.matmul %191, %193, %cst_134 {dimension_numbers = #tpu.dot_dimension_numbers<[1], [0], [0], [1], [0, 0, 1, 1], [], []>} : vector<1x256xbf16>, vector<256x512xbf16>, vector<1x512xf32> -> vector<1x512xf32>
    %195 = arith.addf %189, %194 : vector<1x512xf32>
    %196 = vector.extract_strided_slice %176 {offsets = [3, 0], sizes = [1, 256], strides = [1, 1]} : vector<8x256xf32> to vector<1x256xf32>
    %197 = arith.truncf %196 : vector<1x256xf32> to vector<1x256xbf16>
    %c3 = arith.constant 3 : index
    %c0_135 = arith.constant 0 : index
    %c0_136 = arith.constant 0 : index
    %198 = vector.load %arg8[%c3, %c0_135, %c0_136] : memref<8x256x512xbf16, #tpu.memory_space<vmem>>, vector<1x256x512xbf16>
    %199 = vector.shape_cast %198 : vector<1x256x512xbf16> to vector<256x512xbf16>
    %cst_137 = arith.constant dense<0.000000e+00> : vector<1x512xf32>
    %200 = tpu.matmul %197, %199, %cst_137 {dimension_numbers = #tpu.dot_dimension_numbers<[1], [0], [0], [1], [0, 0, 1, 1], [], []>} : vector<1x256xbf16>, vector<256x512xbf16>, vector<1x512xf32> -> vector<1x512xf32>
    %201 = arith.addf %195, %200 : vector<1x512xf32>
    %202 = vector.extract_strided_slice %176 {offsets = [4, 0], sizes = [1, 256], strides = [1, 1]} : vector<8x256xf32> to vector<1x256xf32>
    %203 = arith.truncf %202 : vector<1x256xf32> to vector<1x256xbf16>
    %c4 = arith.constant 4 : index
    %c0_138 = arith.constant 0 : index
    %c0_139 = arith.constant 0 : index
    %204 = vector.load %arg8[%c4, %c0_138, %c0_139] : memref<8x256x512xbf16, #tpu.memory_space<vmem>>, vector<1x256x512xbf16>
    %205 = vector.shape_cast %204 : vector<1x256x512xbf16> to vector<256x512xbf16>
    %cst_140 = arith.constant dense<0.000000e+00> : vector<1x512xf32>
    %206 = tpu.matmul %203, %205, %cst_140 {dimension_numbers = #tpu.dot_dimension_numbers<[1], [0], [0], [1], [0, 0, 1, 1], [], []>} : vector<1x256xbf16>, vector<256x512xbf16>, vector<1x512xf32> -> vector<1x512xf32>
    %207 = arith.addf %201, %206 : vector<1x512xf32>
    %208 = vector.extract_strided_slice %176 {offsets = [5, 0], sizes = [1, 256], strides = [1, 1]} : vector<8x256xf32> to vector<1x256xf32>
    %209 = arith.truncf %208 : vector<1x256xf32> to vector<1x256xbf16>
    %c5 = arith.constant 5 : index
    %c0_141 = arith.constant 0 : index
    %c0_142 = arith.constant 0 : index
    %210 = vector.load %arg8[%c5, %c0_141, %c0_142] : memref<8x256x512xbf16, #tpu.memory_space<vmem>>, vector<1x256x512xbf16>
    %211 = vector.shape_cast %210 : vector<1x256x512xbf16> to vector<256x512xbf16>
    %cst_143 = arith.constant dense<0.000000e+00> : vector<1x512xf32>
    %212 = tpu.matmul %209, %211, %cst_143 {dimension_numbers = #tpu.dot_dimension_numbers<[1], [0], [0], [1], [0, 0, 1, 1], [], []>} : vector<1x256xbf16>, vector<256x512xbf16>, vector<1x512xf32> -> vector<1x512xf32>
    %213 = arith.addf %207, %212 : vector<1x512xf32>
    %214 = vector.extract_strided_slice %176 {offsets = [6, 0], sizes = [1, 256], strides = [1, 1]} : vector<8x256xf32> to vector<1x256xf32>
    %215 = arith.truncf %214 : vector<1x256xf32> to vector<1x256xbf16>
    %c6 = arith.constant 6 : index
    %c0_144 = arith.constant 0 : index
    %c0_145 = arith.constant 0 : index
    %216 = vector.load %arg8[%c6, %c0_144, %c0_145] : memref<8x256x512xbf16, #tpu.memory_space<vmem>>, vector<1x256x512xbf16>
    %217 = vector.shape_cast %216 : vector<1x256x512xbf16> to vector<256x512xbf16>
    %cst_146 = arith.constant dense<0.000000e+00> : vector<1x512xf32>
    %218 = tpu.matmul %215, %217, %cst_146 {dimension_numbers = #tpu.dot_dimension_numbers<[1], [0], [0], [1], [0, 0, 1, 1], [], []>} : vector<1x256xbf16>, vector<256x512xbf16>, vector<1x512xf32> -> vector<1x512xf32>
    %219 = arith.addf %213, %218 : vector<1x512xf32>
    %220 = vector.extract_strided_slice %176 {offsets = [7, 0], sizes = [1, 256], strides = [1, 1]} : vector<8x256xf32> to vector<1x256xf32>
    %221 = arith.truncf %220 : vector<1x256xf32> to vector<1x256xbf16>
    %c7 = arith.constant 7 : index
    %c0_147 = arith.constant 0 : index
    %c0_148 = arith.constant 0 : index
    %222 = vector.load %arg8[%c7, %c0_147, %c0_148] : memref<8x256x512xbf16, #tpu.memory_space<vmem>>, vector<1x256x512xbf16>
    %223 = vector.shape_cast %222 : vector<1x256x512xbf16> to vector<256x512xbf16>
    %cst_149 = arith.constant dense<0.000000e+00> : vector<1x512xf32>
    %224 = tpu.matmul %221, %223, %cst_149 {dimension_numbers = #tpu.dot_dimension_numbers<[1], [0], [0], [1], [0, 0, 1, 1], [], []>} : vector<1x256xbf16>, vector<256x512xbf16>, vector<1x512xf32> -> vector<1x512xf32>
    %225 = arith.addf %219, %224 : vector<1x512xf32>
    %c0_150 = arith.constant 0 : index
    %c0_151 = arith.constant 0 : index
    %c0_152 = arith.constant 0 : index
    %226 = vector.load %arg10[%c0_150, %c0_151, %c0_152] : memref<1x1x512xf32, #tpu.memory_space<vmem>>, vector<1x1x512xf32>
    %227 = vector.shape_cast %226 : vector<1x1x512xf32> to vector<1x512xf32>
    %228 = vector.shape_cast %225 : vector<1x512xf32> to vector<1x1x512xf32>
    tpu.vector_store %arg10[%c0_150, %c0_151, %c0_152], %228 {strides = array<i32>} : memref<1x1x512xf32, #tpu.memory_space<vmem>>, vector<1x1x512xf32>,
    return
  }
  func.func @transform_0(%arg0: i32) -> (i32, i32, i32) {
    %c0_i32 = arith.constant 0 : i32
    %c0_i32_0 = arith.constant 0 : i32
    %c0_i32_1 = arith.constant 0 : i32
    return %arg0, %c0_i32, %c0_i32_0 : i32, i32, i32
  }
  func.func @transform_1(%arg0: i32) -> (i32, i32) {
    %c0_i32 = arith.constant 0 : i32
    %c0_i32_0 = arith.constant 0 : i32
    %c0_i32_1 = arith.constant 0 : i32
    return %c0_i32, %c0_i32_0 : i32, i32
  }
  func.func @transform_2(%arg0: i32) -> (i32, i32) {
    %c0_i32 = arith.constant 0 : i32
    %c0_i32_0 = arith.constant 0 : i32
    %c0_i32_1 = arith.constant 0 : i32
    return %c0_i32, %c0_i32_0 : i32, i32
  }
  func.func @transform_3(%arg0: i32) -> (i32, i32) {
    %c0_i32 = arith.constant 0 : i32
    %c0_i32_0 = arith.constant 0 : i32
    %c0_i32_1 = arith.constant 0 : i32
    return %c0_i32, %c0_i32_0 : i32, i32
  }
  func.func @transform_4(%arg0: i32) -> (i32, i32) {
    %c0_i32 = arith.constant 0 : i32
    %c0_i32_0 = arith.constant 0 : i32
    %c0_i32_1 = arith.constant 0 : i32
    return %c0_i32, %c0_i32_0 : i32, i32
  }
  func.func @transform_5(%arg0: i32) -> (i32, i32) {
    %c0_i32 = arith.constant 0 : i32
    %c0_i32_0 = arith.constant 0 : i32
    %c0_i32_1 = arith.constant 0 : i32
    return %c0_i32, %c0_i32_0 : i32, i32
  }
  func.func @transform_6(%arg0: i32) -> (i32, i32) {
    %c0_i32 = arith.constant 0 : i32
    %c0_i32_0 = arith.constant 0 : i32
    %c0_i32_1 = arith.constant 0 : i32
    return %c0_i32, %c0_i32_0 : i32, i32
  }
  func.func @transform_7(%arg0: i32) -> (i32, i32, i32) {
    %c0_i32 = arith.constant 0 : i32
    %c0_i32_0 = arith.constant 0 : i32
    %c0_i32_1 = arith.constant 0 : i32
    %c0_i32_2 = arith.constant 0 : i32
    return %c0_i32, %c0_i32_0, %c0_i32_1 : i32, i32, i32
  }
  func.func @transform_8(%arg0: i32) -> (i32, i32) {
    %c0_i32 = arith.constant 0 : i32
    %c0_i32_0 = arith.constant 0 : i32
    %c0_i32_1 = arith.constant 0 : i32
    return %c0_i32, %c0_i32_0 : i32, i32
  }
  func.func @transform_9(%arg0: i32) -> (i32, i32, i32) {
    %c0_i32 = arith.constant 0 : i32
    %c0_i32_0 = arith.constant 0 : i32
    %c0_i32_1 = arith.constant 0 : i32
    return %arg0, %c0_i32, %c0_i32_0 : i32, i32, i32
  }
}

</mosaic_0001>

<llo_original>
// kernel: encoder_forward.1
$region0: #{encoder_forward.1}
  #allocation0 [shape = 'u32[]', space=smem, size = 0x4, offset = 0x4, fixed_abs, tag = 'smem constant byte address 0x4 - core index']
  #allocation1 [shape = 'u32[144,128]{1,0:T(1,128)}', space=vmem, size = 0x12000, scoped, tag = 'internal scratch']
  #allocation2 [shape = 'f32[8,512]{1,0:T(8,128)}', space=vmem, size = 0x4000, scoped, tag = 'scratch operand']
  #allocation3 [shape = 'f32[72,256]{1,0:T(8,128)}', space=vmem, size = 0x12000, scoped, tag = 'scratch operand']
  %s0 = inlined_call_operand.vmem [shape: f32[2,8,256], index: 0, kind: input, shape index: {}]
  %s1 = inlined_call_operand.vmem [shape: f32[8,72], index: 1, kind: input, shape index: {}]
  %s2 = inlined_call_operand.vmem [shape: f32[8,1], index: 2, kind: input, shape index: {}]
  %s3 = inlined_call_operand.vmem [shape: f32[8,72], index: 3, kind: input, shape index: {}]
  %s4 = inlined_call_operand.vmem [shape: f32[8,1], index: 4, kind: input, shape index: {}]
  %s5 = inlined_call_operand.vmem [shape: f32[8,72], index: 5, kind: input, shape index: {}]
  %s6 = inlined_call_operand.vmem [shape: f32[8,1], index: 6, kind: input, shape index: {}]
  %s7 = inlined_call_operand.vmem [shape: bf16[8,256,512], index: 7, kind: input, shape index: {}]
  %s8 = inlined_call_operand.vmem [shape: f32[1,512], index: 8, kind: input, shape index: {}]
  %s9 = inlined_call_operand.vmem [shape: f32[2,1,512], index: 9, kind: output, shape index: {}]
  %s10 = sld [smem:[#allocation0]]
  $region69: #{encoder_forward.1} parent=0
    _
  %s12 = ssub.s32 1, %s10
  %s13 = scalar_select 0, %s12, %s10
  loop: start=0, step=1, limit=4
  $region2: #{encoder_forward.1} parent=0 // loop_pre_header
    _
  $region3: #{encoder_forward.1} parent=0 // loop_header
    %s15 = sphi 0, %s19
    %p16 = scmp.ge.s32.totalorder %s15, 4
    %s25 = sphi 0, %s27
    %s28 = sphi 0, %s25
    %s29 = sphi 0, %s28
    %s45 = sphi 0, %s29
    %s49 = sphi 0, %s49
    %s51 = sphi 0, %s49
    %s52 = sphi 0, %s51
    %s66 = sphi 0, %s52
    %s70 = sphi 0, %s70
    %s72 = sphi 0, %s70
    %s73 = sphi 0, %s72
    %s87 = sphi 0, %s73
    %s91 = sphi 0, %s91
    %s93 = sphi 0, %s91
    %s94 = sphi 0, %s93
    %s108 = sphi 0, %s94
    %s112 = sphi 0, %s112
    %s114 = sphi 0, %s112
    %s115 = sphi 0, %s114
    %s129 = sphi 0, %s115
    %s133 = sphi 0, %s133
    %s135 = sphi 0, %s133
    %s136 = sphi 0, %s135
    %s150 = sphi 0, %s136
    %s154 = sphi 0, %s154
    %s156 = sphi 0, %s154
    %s157 = sphi 0, %s156
    %s171 = sphi 0, %s157
    %s175 = sphi 0, %s175
    %s177 = sphi 0, %s175
    %s178 = sphi 0, %s177
    %s192 = sphi 0, %s178
    %s196 = sphi 0, %s196
    %s198 = sphi 0, %s196
    %s199 = sphi 0, %s198
    %s213 = sphi 0, %s199
    %s219 = sphi 0, %s221
    %s222 = sphi 0, %s219
    %s223 = sphi 0, %s222
    %s239 = sphi 0, %s223
  $region4: #{encoder_forward.1} parent=0 // loop_header_branch
    %18 = sbr.rel (%p16) target = $region8
  $region5: #{encoder_forward.1} parent=0 // loop_body
    %s20 = ssub.s32 %s15, 1
    %s21 = ssub.s32 %s15, 2
    %s22 = sadd.s32 %s15, 1
    %s23 = ssub.s32 %s15, %s22
    %p24 = scmp.eq.s32.totalorder %s23, 0
    %s26 = sadd.s32 %s25, 1
    %s27 = scalar_select %p24, %s25, %s26
    %p30 = pneg %p24
    %p31 = scmp.eq.s32.totalorder %s15, 1
    %p32 = por %p30, %p31
    %p33 = scmp.ne.s32.totalorder %s25, %s28
    %p34 = scmp.eq.s32.totalorder %s15, 0
    %p35 = por %p33, %p34
    %p36 = scmp.ne.s32.totalorder %s25, %s28
    %p37 = scmp.eq.s32.totalorder %s20, 1
    %p38 = por %p36, %p37
    %p39 = scmp.ne.s32.totalorder %s28, %s29
    %p40 = scmp.eq.s32.totalorder %s20, 0
    %p41 = por %p39, %p40
    %p42 = scmp.ne.s32.totalorder %s28, %s29
    %p43 = scmp.eq.s32.totalorder %s21, 1
    %p44 = por %p42, %p43
    %p46 = scmp.ne.s32.totalorder %s29, %s45
    %p47 = scmp.eq.s32.totalorder %s21, 0
    %p48 = por %p46, %p47
    %s50 = sadd.s32 %s49, 1
    %p53 = scmp.eq.s32.totalorder %s15, 1
    %p54 = scmp.ne.s32.totalorder %s49, %s51
    %p55 = scmp.eq.s32.totalorder %s15, 0
    %p56 = por %p54, %p55
    %p57 = scmp.ne.s32.totalorder %s49, %s51
    %p58 = scmp.eq.s32.totalorder %s20, 1
    %p59 = por %p57, %p58
    %p60 = scmp.ne.s32.totalorder %s51, %s52
    %p61 = scmp.eq.s32.totalorder %s20, 0
    %p62 = por %p60, %p61
    %p63 = scmp.ne.s32.totalorder %s51, %s52
    %p64 = scmp.eq.s32.totalorder %s21, 1
    %p65 = por %p63, %p64
    %p67 = scmp.ne.s32.totalorder %s52, %s66
    %p68 = scmp.eq.s32.totalorder %s21, 0
    %p69 = por %p67, %p68
    %s71 = sadd.s32 %s70, 1
    %p74 = scmp.eq.s32.totalorder %s15, 1
    %p75 = scmp.ne.s32.totalorder %s70, %s72
    %p76 = scmp.eq.s32.totalorder %s15, 0
    %p77 = por %p75, %p76
    %p78 = scmp.ne.s32.totalorder %s70, %s72
    %p79 = scmp.eq.s32.totalorder %s20, 1
    %p80 = por %p78, %p79
    %p81 = scmp.ne.s32.totalorder %s72, %s73
    %p82 = scmp.eq.s32.totalorder %s20, 0
    %p83 = por %p81, %p82
    %p84 = scmp.ne.s32.totalorder %s72, %s73
    %p85 = scmp.eq.s32.totalorder %s21, 1
    %p86 = por %p84, %p85
    %p88 = scmp.ne.s32.totalorder %s73, %s87
    %p89 = scmp.eq.s32.totalorder %s21, 0
    %p90 = por %p88, %p89
    %s92 = sadd.s32 %s91, 1
    %p95 = scmp.eq.s32.totalorder %s15, 1
    %p96 = scmp.ne.s32.totalorder %s91, %s93
    %p97 = scmp.eq.s32.totalorder %s15, 0
    %p98 = por %p96, %p97
    %p99 = scmp.ne.s32.totalorder %s91, %s93
    %p100 = scmp.eq.s32.totalorder %s20, 1
    %p101 = por %p99, %p100
    %p102 = scmp.ne.s32.totalorder %s93, %s94
    %p103 = scmp.eq.s32.totalorder %s20, 0
    %p104 = por %p102, %p103
    %p105 = scmp.ne.s32.totalorder %s93, %s94
    %p106 = scmp.eq.s32.totalorder %s21, 1
    %p107 = por %p105, %p106
    %p109 = scmp.ne.s32.totalorder %s94, %s108
    %p110 = scmp.eq.s32.totalorder %s21, 0
    %p111 = por %p109, %p110
    %s113 = sadd.s32 %s112, 1
    %p116 = scmp.eq.s32.totalorder %s15, 1
    %p117 = scmp.ne.s32.totalorder %s112, %s114
    %p118 = scmp.eq.s32.totalorder %s15, 0
    %p119 = por %p117, %p118
    %p120 = scmp.ne.s32.totalorder %s112, %s114
    %p121 = scmp.eq.s32.totalorder %s20, 1
    %p122 = por %p120, %p121
    %p123 = scmp.ne.s32.totalorder %s114, %s115
    %p124 = scmp.eq.s32.totalorder %s20, 0
    %p125 = por %p123, %p124
    %p126 = scmp.ne.s32.totalorder %s114, %s115
    %p127 = scmp.eq.s32.totalorder %s21, 1
    %p128 = por %p126, %p127
    %p130 = scmp.ne.s32.totalorder %s115, %s129
    %p131 = scmp.eq.s32.totalorder %s21, 0
    %p132 = por %p130, %p131
    %s134 = sadd.s32 %s133, 1
    %p137 = scmp.eq.s32.totalorder %s15, 1
    %p138 = scmp.ne.s32.totalorder %s133, %s135
    %p139 = scmp.eq.s32.totalorder %s15, 0
    %p140 = por %p138, %p139
    %p141 = scmp.ne.s32.totalorder %s133, %s135
    %p142 = scmp.eq.s32.totalorder %s20, 1
    %p143 = por %p141, %p142
    %p144 = scmp.ne.s32.totalorder %s135, %s136
    %p145 = scmp.eq.s32.totalorder %s20, 0
    %p146 = por %p144, %p145
    %p147 = scmp.ne.s32.totalorder %s135, %s136
    %p148 = scmp.eq.s32.totalorder %s21, 1
    %p149 = por %p147, %p148
    %p151 = scmp.ne.s32.totalorder %s136, %s150
    %p152 = scmp.eq.s32.totalorder %s21, 0
    %p153 = por %p151, %p152
    %s155 = sadd.s32 %s154, 1
    %p158 = scmp.eq.s32.totalorder %s15, 1
    %p159 = scmp.ne.s32.totalorder %s154, %s156
    %p160 = scmp.eq.s32.totalorder %s15, 0
    %p161 = por %p159, %p160
    %p162 = scmp.ne.s32.totalorder %s154, %s156
    %p163 = scmp.eq.s32.totalorder %s20, 1
    %p164 = por %p162, %p163
    %p165 = scmp.ne.s32.totalorder %s156, %s157
    %p166 = scmp.eq.s32.totalorder %s20, 0
    %p167 = por %p165, %p166
    %p168 = scmp.ne.s32.totalorder %s156, %s157
    %p169 = scmp.eq.s32.totalorder %s21, 1
    %p170 = por %p168, %p169
    %p172 = scmp.ne.s32.totalorder %s157, %s171
    %p173 = scmp.eq.s32.totalorder %s21, 0
    %p174 = por %p172, %p173
    %s176 = sadd.s32 %s175, 1
    %p179 = scmp.eq.s32.totalorder %s15, 1
    %p180 = scmp.ne.s32.totalorder %s175, %s177
    %p181 = scmp.eq.s32.totalorder %s15, 0
    %p182 = por %p180, %p181
    %p183 = scmp.ne.s32.totalorder %s175, %s177
    %p184 = scmp.eq.s32.totalorder %s20, 1
    %p185 = por %p183, %p184
    %p186 = scmp.ne.s32.totalorder %s177, %s178
    %p187 = scmp.eq.s32.totalorder %s20, 0
    %p188 = por %p186, %p187
    %p189 = scmp.ne.s32.totalorder %s177, %s178
    %p190 = scmp.eq.s32.totalorder %s21, 1
    %p191 = por %p189, %p190
    %p193 = scmp.ne.s32.totalorder %s178, %s192
    %p194 = scmp.eq.s32.totalorder %s21, 0
    %p195 = por %p193, %p194
    %s197 = sadd.s32 %s196, 1
    %p200 = scmp.eq.s32.totalorder %s15, 1
    %p201 = scmp.ne.s32.totalorder %s196, %s198
    %p202 = scmp.eq.s32.totalorder %s15, 0
    %p203 = por %p201, %p202
    %p204 = scmp.ne.s32.totalorder %s196, %s198
    %p205 = scmp.eq.s32.totalorder %s20, 1
    %p206 = por %p204, %p205
    %p207 = scmp.ne.s32.totalorder %s198, %s199
    %p208 = scmp.eq.s32.totalorder %s20, 0
    %p209 = por %p207, %p208
    %p210 = scmp.ne.s32.totalorder %s198, %s199
    %p211 = scmp.eq.s32.totalorder %s21, 1
    %p212 = por %p210, %p211
    %p214 = scmp.ne.s32.totalorder %s199, %s213
    %p215 = scmp.eq.s32.totalorder %s21, 0
    %p216 = por %p214, %p215
    %s217 = ssub.s32 %s15, %s22
    %p218 = scmp.eq.s32.totalorder %s217, 0
    %s220 = sadd.s32 %s219, 1
    %s221 = scalar_select %p218, %s219, %s220
    %p224 = pneg %p218
    %p225 = scmp.eq.s32.totalorder %s15, 1
    %p226 = por %p224, %p225
    %p227 = scmp.ne.s32.totalorder %s219, %s222
    %p228 = scmp.eq.s32.totalorder %s15, 0
    %p229 = por %p227, %p228
    %p230 = scmp.ne.s32.totalorder %s219, %s222
    %p231 = scmp.eq.s32.totalorder %s20, 1
    %p232 = por %p230, %p231
    %p233 = scmp.ne.s32.totalorder %s222, %s223
    %p234 = scmp.eq.s32.totalorder %s20, 0
    %p235 = por %p233, %p234
    %p236 = scmp.ne.s32.totalorder %s222, %s223
    %p237 = scmp.eq.s32.totalorder %s21, 1
    %p238 = por %p236, %p237
    %p240 = scmp.ne.s32.totalorder %s223, %s239
    %p241 = scmp.eq.s32.totalorder %s21, 0
    %p242 = por %p240, %p241
    %p243 = scmp.le.s32.totalorder 1, %s15
    %p244 = scmp.lt.s32.totalorder %s15, 3
    %p245 = pnand %p243, %p244
    %p246 = pneg %p245
    // Predicated region
    $region9: #{encoder_forward.1} parent=5 // pred_check
      _
    $region10: #{encoder_forward.1} parent=5 // pred_check_branch
      %248 = sbr.rel (%p245) target = $region12
    $region11: #{encoder_forward.1} parent=5 // pred_region
      %s249 = ssub.s32 %s15, 1
      // Predicated region
      $region13: #{encoder_forward.1} parent=11 // pred_check
        %p250 = pneg %p62
      $region14: #{encoder_forward.1} parent=11 // pred_check_branch
        %252 = sbr.rel (%p250) target = $region16
      $region15: #{encoder_forward.1} parent=11 // pred_region
        _
      $region16: #{encoder_forward.1} parent=11 // pred_fallthru
        _
      // Predicated region
      $region17: #{encoder_forward.1} parent=11 // pred_check
        %p253 = pneg %p83
      $region18: #{encoder_forward.1} parent=11 // pred_check_branch
        %255 = sbr.rel (%p253) target = $region20
      $region19: #{encoder_forward.1} parent=11 // pred_region
        _
      $region20: #{encoder_forward.1} parent=11 // pred_fallthru
        _
      // Predicated region
      $region21: #{encoder_forward.1} parent=11 // pred_check
        %p256 = pneg %p104
      $region22: #{encoder_forward.1} parent=11 // pred_check_branch
        %258 = sbr.rel (%p256) target = $region24
      $region23: #{encoder_forward.1} parent=11 // pred_region
        _
      $region24: #{encoder_forward.1} parent=11 // pred_fallthru
        _
      // Predicated region
      $region25: #{encoder_forward.1} parent=11 // pred_check
        %p259 = pneg %p125
      $region26: #{encoder_forward.1} parent=11 // pred_check_branch
        %261 = sbr.rel (%p259) target = $region28
      $region27: #{encoder_forward.1} parent=11 // pred_region
        _
      $region28: #{encoder_forward.1} parent=11 // pred_fallthru
        _
      // Predicated region
      $region29: #{encoder_forward.1} parent=11 // pred_check
        %p262 = pneg %p146
      $region30: #{encoder_forward.1} parent=11 // pred_check_branch
        %264 = sbr.rel (%p262) target = $region32
      $region31: #{encoder_forward.1} parent=11 // pred_region
        _
      $region32: #{encoder_forward.1} parent=11 // pred_fallthru
        _
      // Predicated region
      $region33: #{encoder_forward.1} parent=11 // pred_check
        %p265 = pneg %p167
      $region34: #{encoder_forward.1} parent=11 // pred_check_branch
        %267 = sbr.rel (%p265) target = $region36
      $region35: #{encoder_forward.1} parent=11 // pred_region
        _
      $region36: #{encoder_forward.1} parent=11 // pred_fallthru
        _
      // Predicated region
      $region37: #{encoder_forward.1} parent=11 // pred_check
        %p268 = pneg %p188
      $region38: #{encoder_forward.1} parent=11 // pred_check_branch
        %270 = sbr.rel (%p268) target = $region40
      $region39: #{encoder_forward.1} parent=11 // pred_region
        _
      $region40: #{encoder_forward.1} parent=11 // pred_fallthru
        _
      // Predicated region
      $region41: #{encoder_forward.1} parent=11 // pred_check
        %p271 = pneg %p209
      $region42: #{encoder_forward.1} parent=11 // pred_check_branch
        %273 = sbr.rel (%p271) target = $region44
      $region43: #{encoder_forward.1} parent=11 // pred_region
        _
      $region44: #{encoder_forward.1} parent=11 // pred_fallthru
        _
    $region12: #{encoder_forward.1} parent=5 // pred_fallthru
      _
    %p274 = scmp.lt.s32.totalorder %s15, 2
    // Predicated region
    $region45: #{encoder_forward.1} parent=5 // pred_check
      %p275 = pneg %p274
    $region46: #{encoder_forward.1} parent=5 // pred_check_branch
      %277 = sbr.rel (%p275) target = $region48
    $region47: #{encoder_forward.1} parent=5 // pred_region
      // Predicated region
      $region49: #{encoder_forward.1} parent=47 // pred_check
        %p278 = pneg %p35
      $region50: #{encoder_forward.1} parent=47 // pred_check_branch
        %280 = sbr.rel (%p278) target = $region52
      $region51: #{encoder_forward.1} parent=47 // pred_region
        %p281 = scmp.lt.s32.totalorder %s15, 1
        %s282 = scalar_select %p281, %s15, 1
        %s283 = smul.addr %s282, 2
        %s284 = smul.addr %s283, 8
        %s285 = scalar_lea.vmem %s0, %s284
      $region52: #{encoder_forward.1} parent=47 // pred_fallthru
        _
    $region48: #{encoder_forward.1} parent=5 // pred_fallthru
      _
    %p286 = scmp.le.s32.totalorder 1, %s15
    %p287 = scmp.lt.s32.totalorder %s15, 3
    %p288 = pnand %p286, %p287
    %p289 = pneg %p288
    // Predicated region
    $region53: #{encoder_forward.1} parent=5 // pred_check
      _
    $region54: #{encoder_forward.1} parent=5 // pred_check_branch
      %291 = sbr.rel (%p288) target = $region56
    $region55: #{encoder_forward.1} parent=5 // pred_region
      %s292 = ssub.s32 %s15, 1
      %p293 = scmp.lt.s32.totalorder %s20, 1
      %s294 = scalar_select %p293, %s20, 1
      %s295 = smul.addr %s294, 2
      %s296 = smul.addr %s295, 8
      %s297 = scalar_lea.vmem %s0, %s296
      %p298 = pneg %p41
      %p299 = pneg %p38
      %p300 = pneg %p62
      %p301 = pneg %p59
      %p302 = pneg %p83
      %p303 = pneg %p80
      %p304 = pneg %p104
      %p305 = pneg %p101
      %p306 = pneg %p125
      %p307 = pneg %p122
      %p308 = pneg %p146
      %p309 = pneg %p143
      %p310 = pneg %p167
      %p311 = pneg %p164
      %p312 = pneg %p188
      %p313 = pneg %p185
      %p314 = pneg %p209
      %p315 = pneg %p206
      %p316 = pneg %p235
      %p317 = pneg %p232
      %p318 = scmp.lt.s32.totalorder %s20, 1
      %s319 = scalar_select %p318, %s20, 1
      %s320 = smul.addr %s319, 4
      %s321 = scalar_lea.vmem %s9, %s320
      %p322 = scmp.lt.s32.totalorder %s20, 1
      %s323 = scalar_select %p322, %s20, 1
      %s324 = smul.addr %s323, 2
      %s325 = smul.addr %s324, 8
      %s326 = scalar_lea.vmem %s0, %s325
      %p327 = scmp.lt.s32.totalorder %s20, 1
      %s328 = scalar_select %p327, %s20, 1
      %s329 = smul.addr %s328, 4
      %s330 = scalar_lea.vmem %s9, %s329
      %v331 = vlaneseq
      %v332 = vand.u32 %v331, 127
      %v333 = vadd.s32 %v332, 128
      %vm334 = vcmp.lt.s32.totalorder %v332, 0
      %v335 = vsub.s32 0, %v332
      %v336 = vsel %vm334, %v335, %v332
      %v337 = vshrl.u32 %v336, 4
      %v338 = vand.u32 %v336, 15
      %v339 = vsub.s32 0, %v338
      %v340 = vsel %vm334, %v339, %v338
      %vm341 = vcmp.lt.s32.totalorder %v333, 0
      %v342 = vsub.s32 0, %v333
      %v343 = vsel %vm341, %v342, %v333
      %v344 = vshrl.u32 %v343, 4
      %v345 = vand.u32 %v343, 15
      %v346 = vsub.s32 0, %v345
      %v347 = vsel %vm341, %v346, %v345
      %vm348 = vcmp.ne.s32.totalorder %v340, 0
      %vm349 = vcmp.ne.s32.totalorder %v347, 0
      %vm350 = vcmp.lt.s32.totalorder %v340, 0
      %vm351 = vcmp.lt.s32.totalorder %v347, 0
      %vm352 = vmand %vm350, %vm348
      %vm353 = vmand %vm351, %vm349
      %v354 = vadd.s32 %v340, 16
      %v355 = vadd.s32 %v347, 16
      %v356 = vsel %vm352, %v354, %v340
      %v357 = vsel %vm353, %v355, %v347
      %358 = vst [vmem:[#allocation2] sm:$0xff] 0.0
      %359 = vst [vmem:[#allocation2 + $0x8] sm:$0xff] 0.0
      %360 = vst [vmem:[#allocation2 + $0x10] sm:$0xff] 0.0
      %361 = vst [vmem:[#allocation2 + $0x18] sm:$0xff] 0.0
      %v362 = vld [vmem:[%s326] sm:$0xff]
      %v363 = vld [vmem:[%s326 + $0x8] sm:$0xff]
      %364 = vst [vmem:[#allocation2 + $0x8] sm:$0xff] %v362
      %365 = vst [vmem:[#allocation2 + $0x10] sm:$0xff] %v363
      %v366 = vld [vmem:[#allocation2] sm:$0xff]
      %v367 = vld [vmem:[#allocation2 + $0x8] sm:$0xff]
      %v368 = vld [vmem:[#allocation2 + $0x10] sm:$0xff]
      %v369 = vld [vmem:[#allocation2 + $0x18] sm:$0xff]
      %vm370 = vcmp.ge.s32.totalorder %v356, 1
      %vm371 = vcmp.ge.s32.totalorder %v357, 1
      %375 = vrot.lane.b32.xlu0 %v366, 17
      %v376 = vpop.permute.xlu0 %375
      %377 = vrot.lane.b32.xlu0 %v367, 17
      %v378 = vpop.permute.xlu0 %377
      %379 = vrot.lane.b32.xlu0 %v368, 17
      %v380 = vpop.permute.xlu0 %379
      %vm381 = vcmask 138240
      %v382 = vsel %vm381, %v376, %v378
      %v383 = vsel %vm381, %v378, %v380
      %v386 = vsel %vm370, %v382, 0.0
      %v387 = vsel %vm371, %v383, 0.0
      %388 = vst [vmem:[#allocation3] sm:$0xff] %v386
      %389 = vst [vmem:[#allocation3 + $0x8] sm:$0xff] %v387
      %390 = vrot.lane.b32.xlu0 %v366, 16
      %v391 = vpop.permute.xlu0 %390
      %392 = vrot.lane.b32.xlu0 %v367, 16
      %v393 = vpop.permute.xlu0 %392
      %394 = vrot.lane.b32.xlu0 %v368, 16
      %v395 = vpop.permute.xlu0 %394
      %vm396 = vcmask 130048
      %v397 = vsel %vm396, %v391, %v393
      %v398 = vsel %vm396, %v393, %v395
      %401 = vst [vmem:[#allocation3 + $0x10] sm:$0xff] %v397
      %402 = vst [vmem:[#allocation3 + $0x18] sm:$0xff] %v398
      %vm403 = vcmp.lt.s32.totalorder %v356, 15
      %vm404 = vcmp.lt.s32.totalorder %v357, 15
      %405 = vrot.lane.b32.xlu0 %v366, 15
      %v406 = vpop.permute.xlu0 %405
      %407 = vrot.lane.b32.xlu0 %v367, 15
      %v408 = vpop.permute.xlu0 %407
      %409 = vrot.lane.b32.xlu0 %v368, 15
      %v410 = vpop.permute.xlu0 %409
      %vm411 = vcmask 121856
      %v412 = vsel %vm411, %v406, %v408
      %v413 = vsel %vm411, %v408, %v410
      %v416 = vsel %vm403, %v412, 0.0
      %v417 = vsel %vm404, %v413, 0.0
      %418 = vst [vmem:[#allocation3 + $0x20] sm:$0xff] %v416
      %419 = vst [vmem:[#allocation3 + $0x28] sm:$0xff] %v417
      %420 = vrot.lane.b32.xlu0 %v366, 1
      %v421 = vpop.permute.xlu0 %420
      %422 = vrot.lane.b32.xlu0 %v367, 1
      %v423 = vpop.permute.xlu0 %422
      %424 = vrot.lane.b32.xlu0 %v368, 1
      %v425 = vpop.permute.xlu0 %424
      %vm426 = vcmask 7168
      %v427 = vsel %vm426, %v421, %v423
      %v428 = vsel %vm426, %v423, %v425
      %v431 = vsel %vm370, %v427, 0.0
      %v432 = vsel %vm371, %v428, 0.0
      %433 = vst [vmem:[#allocation3 + $0x30] sm:$0xff] %v431
      %434 = vst [vmem:[#allocation3 + $0x38] sm:$0xff] %v432
      %435 = vst [vmem:[#allocation3 + $0x40] sm:$0xff] %v367
      %436 = vst [vmem:[#allocation3 + $0x48] sm:$0xff] %v368
      %438 = vrot.lane.b32.xlu0 %v367, 127
      %v439 = vpop.permute.xlu0 %438
      %440 = vrot.lane.b32.xlu0 %v368, 127
      %v441 = vpop.permute.xlu0 %440
      %442 = vrot.lane.b32.xlu0 %v369, 127
      %v443 = vpop.permute.xlu0 %442
      %vm444 = vcmask 1039360
      %v445 = vsel %vm444, %v439, %v441
      %v446 = vsel %vm444, %v441, %v443
      %v449 = vsel %vm403, %v445, 0.0
      %v450 = vsel %vm404, %v446, 0.0
      %451 = vst [vmem:[#allocation3 + $0x50] sm:$0xff] %v449
      %452 = vst [vmem:[#allocation3 + $0x58] sm:$0xff] %v450
      %453 = vrot.lane.b32.xlu0 %v367, 113
      %v454 = vpop.permute.xlu0 %453
      %455 = vrot.lane.b32.xlu0 %v368, 113
      %v456 = vpop.permute.xlu0 %455
      %457 = vrot.lane.b32.xlu0 %v369, 113
      %v458 = vpop.permute.xlu0 %457
      %vm459 = vcmask 924672
      %v460 = vsel %vm459, %v454, %v456
      %v461 = vsel %vm459, %v456, %v458
      %v464 = vsel %vm370, %v460, 0.0
      %v465 = vsel %vm371, %v461, 0.0
      %466 = vst [vmem:[#allocation3 + $0x60] sm:$0xff] %v464
      %467 = vst [vmem:[#allocation3 + $0x68] sm:$0xff] %v465
      %468 = vrot.lane.b32.xlu0 %v367, 112
      %v469 = vpop.permute.xlu0 %468
      %470 = vrot.lane.b32.xlu0 %v368, 112
      %v471 = vpop.permute.xlu0 %470
      %472 = vrot.lane.b32.xlu0 %v369, 112
      %v473 = vpop.permute.xlu0 %472
      %vm474 = vcmask 916480
      %v475 = vsel %vm474, %v469, %v471
      %v476 = vsel %vm474, %v471, %v473
      %479 = vst [vmem:[#allocation3 + $0x70] sm:$0xff] %v475
      %480 = vst [vmem:[#allocation3 + $0x78] sm:$0xff] %v476
      %481 = vrot.lane.b32.xlu0 %v367, 111
      %v482 = vpop.permute.xlu0 %481
      %483 = vrot.lane.b32.xlu0 %v368, 111
      %v484 = vpop.permute.xlu0 %483
      %485 = vrot.lane.b32.xlu0 %v369, 111
      %v486 = vpop.permute.xlu0 %485
      %vm487 = vcmask 908288
      %v488 = vsel %vm487, %v482, %v484
      %v489 = vsel %vm487, %v484, %v486
      %v492 = vsel %vm403, %v488, 0.0
      %v493 = vsel %vm404, %v489, 0.0
      %494 = vst [vmem:[#allocation3 + $0x80] sm:$0xff] %v492
      %495 = vst [vmem:[#allocation3 + $0x88] sm:$0xff] %v493
      %v496 = vld [vmem:[%s1] sm:$0xff]
      %v497 = vld [vmem:[#allocation3] sm:$0xff]
      %v498 = vld [vmem:[#allocation3 + $0x8] sm:$0xff]
      %v499 = vld [vmem:[#allocation3 + $0x10] sm:$0xff]
      %v500 = vld [vmem:[#allocation3 + $0x18] sm:$0xff]
      %v501 = vld [vmem:[#allocation3 + $0x20] sm:$0xff]
      %v502 = vld [vmem:[#allocation3 + $0x28] sm:$0xff]
      %v503 = vld [vmem:[#allocation3 + $0x30] sm:$0xff]
      %v504 = vld [vmem:[#allocation3 + $0x38] sm:$0xff]
      %v505 = vld [vmem:[#allocation3 + $0x40] sm:$0xff]
      %v506 = vld [vmem:[#allocation3 + $0x48] sm:$0xff]
      %v507 = vld [vmem:[#allocation3 + $0x50] sm:$0xff]
      %v508 = vld [vmem:[#allocation3 + $0x58] sm:$0xff]
      %v509 = vld [vmem:[#allocation3 + $0x60] sm:$0xff]
      %v510 = vld [vmem:[#allocation3 + $0x68] sm:$0xff]
      %v511 = vld [vmem:[#allocation3 + $0x70] sm:$0xff]
      %v512 = vld [vmem:[#allocation3 + $0x78] sm:$0xff]
      %v513 = vld [vmem:[#allocation3 + $0x80] sm:$0xff]
      %v514 = vld [vmem:[#allocation3 + $0x88] sm:$0xff]
      %v515 = vld [vmem:[%s2] sm:$0xff]
      %517 = vset.pattern.permute.xlu0 0
      %518 = vperm.xlu0 %517, %v515
      %v519 = vpop.permute.xlu0 %518
      %vm521 = vcmask 588800
      %v523 = vsel %vm521, %v496, 0
      %525 = vmatprep.subr.mxu0 0.0
      %526 = vmatpush1.msra.mxu0 0.0
      %527 = vmatprep.subr.mxu0 0.0
      %528 = vmatpush1.msra.mxu0 0.0
      %529 = vmatprep.subr.mxu0 0.0
      %530 = vmatpush1.msra.mxu0 0.0
      %531 = vmatprep.subr.mxu0 0.0
      %532 = vmatpush1.msra.mxu0 0.0
      %533 = vmatprep.subr.mxu0 0.0
      %534 = vmatpush1.msra.mxu0 0.0
      %535 = vmatprep.subr.mxu0 0.0
      %536 = vmatpush1.msra.mxu0 0.0
      %537 = vmatprep.subr.mxu0 0.0
      %538 = vmatpush1.msra.mxu0 0.0
      %539 = vmatprep.subr.mxu0 %v514
      %540 = vmatpush1.msra.mxu0 %v513
      %541 = vmatprep.subr.mxu0 %v512
      %542 = vmatpush1.msra.mxu0 %v511
      %543 = vmatprep.subr.mxu0 %v510
      %544 = vmatpush1.msra.mxu0 %v509
      %545 = vmatprep.subr.mxu0 %v508
      %546 = vmatpush1.msra.mxu0 %v507
      %547 = vmatprep.subr.mxu0 %v506
      %548 = vmatpush1.msra.mxu0 %v505
      %549 = vmatprep.subr.mxu0 %v504
      %550 = vmatpush1.msra.mxu0 %v503
      %551 = vmatprep.subr.mxu0 %v502
      %552 = vmatpush1.msra.mxu0 %v501
      %553 = vmatprep.subr.mxu0 %v500
      %554 = vmatpush1.msra.mxu0 %v499
      %555 = vmatprep.subr.mxu0 %v498
      %556 = vmatpush1.msra.mxu0 %v497
      %557 = vmatprep.subr.mxu0 0.0
      %558 = vmatpush2.msra.mxu0 0.0
      %559 = vmatprep.subr.mxu0 0.0
      %560 = vmatpush2.msra.mxu0 0.0
      %561 = vmatprep.subr.mxu0 0.0
      %562 = vmatpush2.msra.mxu0 0.0
      %563 = vmatprep.subr.mxu0 0.0
      %564 = vmatpush2.msra.mxu0 0.0
      %565 = vmatprep.subr.mxu0 0.0
      %566 = vmatpush2.msra.mxu0 0.0
      %567 = vmatprep.subr.mxu0 0.0
      %568 = vmatpush2.msra.mxu0 0.0
      %569 = vmatprep.subr.mxu0 0.0
      %570 = vmatpush2.msra.mxu0 0.0
      %571 = vmatprep.subr.mxu0 0.0
      %572 = vmatpush2.msra.mxu0 0.0
      %573 = vmatprep.subr.mxu0 0.0
      %574 = vmatpush2.msra.mxu0 0.0
      %575 = vmatprep.subr.mxu0 0.0
      %576 = vmatpush2.msra.mxu0 0.0
      %577 = vmatprep.subr.mxu0 0.0
      %578 = vmatpush2.msra.mxu0 0.0
      %579 = vmatprep.subr.mxu0 0.0
      %580 = vmatpush2.msra.mxu0 0.0
      %581 = vmatprep.subr.mxu0 0.0
      %582 = vmatpush2.msra.mxu0 0.0
      %583 = vmatprep.subr.mxu0 0.0
      %584 = vmatpush2.msra.mxu0 0.0
      %585 = vmatprep.subr.mxu0 0.0
      %586 = vmatpush2.msra.mxu0 0.0
      %587 = vmatprep.subr.mxu0 0.0
      %588 = vmatpush2.msra.mxu0 0.0
      %589 = vmatprep.mubr.f32.mxu0 0.0
      %590 = vmatmul.mubr.f32.gmra.mxu0 %v523
      %v591 = vpop.f32.mrf.mxu0
      %v592 = vadd.f32 %v519, %v591
      %v593 = vpop.f32.mrf.mxu0
      %v594 = vadd.f32 %v519, %v593
      %595 = vdwg.mxu0
      %v596 = vmax.f32 %v592, 0.0
      %v597 = vmax.f32 %v594, 0.0
      %598 = vst [vmem:[#allocation2 + $0x8] sm:$0xff] %v596
      %599 = vst [vmem:[#allocation2 + $0x10] sm:$0xff] %v597
      %v600 = vld [vmem:[#allocation2] sm:$0xff]
      %v601 = vld [vmem:[#allocation2 + $0x8] sm:$0xff]
      %v602 = vld [vmem:[#allocation2 + $0x10] sm:$0xff]
      %v603 = vld [vmem:[#allocation2 + $0x18] sm:$0xff]
      %607 = vrot.lane.b32.xlu0 %v600, 17
      %v608 = vpop.permute.xlu0 %607
      %609 = vrot.lane.b32.xlu0 %v601, 17
      %v610 = vpop.permute.xlu0 %609
      %611 = vrot.lane.b32.xlu0 %v602, 17
      %v612 = vpop.permute.xlu0 %611
      %v613 = vsel %vm381, %v608, %v610
      %v614 = vsel %vm381, %v610, %v612
      %v617 = vsel %vm370, %v613, 0.0
      %v618 = vsel %vm371, %v614, 0.0
      %619 = vst [vmem:[#allocation3] sm:$0xff] %v617
      %620 = vst [vmem:[#allocation3 + $0x8] sm:$0xff] %v618
      %621 = vrot.lane.b32.xlu0 %v600, 16
      %v622 = vpop.permute.xlu0 %621
      %623 = vrot.lane.b32.xlu0 %v601, 16
      %v624 = vpop.permute.xlu0 %623
      %625 = vrot.lane.b32.xlu0 %v602, 16
      %v626 = vpop.permute.xlu0 %625
      %v627 = vsel %vm396, %v622, %v624
      %v628 = vsel %vm396, %v624, %v626
      %631 = vst [vmem:[#allocation3 + $0x10] sm:$0xff] %v627
      %632 = vst [vmem:[#allocation3 + $0x18] sm:$0xff] %v628
      %633 = vrot.lane.b32.xlu0 %v600, 15
      %v634 = vpop.permute.xlu0 %633
      %635 = vrot.lane.b32.xlu0 %v601, 15
      %v636 = vpop.permute.xlu0 %635
      %637 = vrot.lane.b32.xlu0 %v602, 15
      %v638 = vpop.permute.xlu0 %637
      %v639 = vsel %vm411, %v634, %v636
      %v640 = vsel %vm411, %v636, %v638
      %v643 = vsel %vm403, %v639, 0.0
      %v644 = vsel %vm404, %v640, 0.0
      %645 = vst [vmem:[#allocation3 + $0x20] sm:$0xff] %v643
      %646 = vst [vmem:[#allocation3 + $0x28] sm:$0xff] %v644
      %647 = vrot.lane.b32.xlu0 %v600, 1
      %v648 = vpop.permute.xlu0 %647
      %649 = vrot.lane.b32.xlu0 %v601, 1
      %v650 = vpop.permute.xlu0 %649
      %651 = vrot.lane.b32.xlu0 %v602, 1
      %v652 = vpop.permute.xlu0 %651
      %v653 = vsel %vm426, %v648, %v650
      %v654 = vsel %vm426, %v650, %v652
      %v657 = vsel %vm370, %v653, 0.0
      %v658 = vsel %vm371, %v654, 0.0
      %659 = vst [vmem:[#allocation3 + $0x30] sm:$0xff] %v657
      %660 = vst [vmem:[#allocation3 + $0x38] sm:$0xff] %v658
      %661 = vst [vmem:[#allocation3 + $0x40] sm:$0xff] %v601
      %662 = vst [vmem:[#allocation3 + $0x48] sm:$0xff] %v602
      %664 = vrot.lane.b32.xlu0 %v601, 127
      %v665 = vpop.permute.xlu0 %664
      %666 = vrot.lane.b32.xlu0 %v602, 127
      %v667 = vpop.permute.xlu0 %666
      %668 = vrot.lane.b32.xlu0 %v603, 127
      %v669 = vpop.permute.xlu0 %668
      %v670 = vsel %vm444, %v665, %v667
      %v671 = vsel %vm444, %v667, %v669
      %v674 = vsel %vm403, %v670, 0.0
      %v675 = vsel %vm404, %v671, 0.0
      %676 = vst [vmem:[#allocation3 + $0x50] sm:$0xff] %v674
      %677 = vst [vmem:[#allocation3 + $0x58] sm:$0xff] %v675
      %678 = vrot.lane.b32.xlu0 %v601, 113
      %v679 = vpop.permute.xlu0 %678
      %680 = vrot.lane.b32.xlu0 %v602, 113
      %v681 = vpop.permute.xlu0 %680
      %682 = vrot.lane.b32.xlu0 %v603, 113
      %v683 = vpop.permute.xlu0 %682
      %v684 = vsel %vm459, %v679, %v681
      %v685 = vsel %vm459, %v681, %v683
      %v688 = vsel %vm370, %v684, 0.0
      %v689 = vsel %vm371, %v685, 0.0
      %690 = vst [vmem:[#allocation3 + $0x60] sm:$0xff] %v688
      %691 = vst [vmem:[#allocation3 + $0x68] sm:$0xff] %v689
      %692 = vrot.lane.b32.xlu0 %v601, 112
      %v693 = vpop.permute.xlu0 %692
      %694 = vrot.lane.b32.xlu0 %v602, 112
      %v695 = vpop.permute.xlu0 %694
      %696 = vrot.lane.b32.xlu0 %v603, 112
      %v697 = vpop.permute.xlu0 %696
      %v698 = vsel %vm474, %v693, %v695
      %v699 = vsel %vm474, %v695, %v697
      %702 = vst [vmem:[#allocation3 + $0x70] sm:$0xff] %v698
      %703 = vst [vmem:[#allocation3 + $0x78] sm:$0xff] %v699
      %704 = vrot.lane.b32.xlu0 %v601, 111
      %v705 = vpop.permute.xlu0 %704
      %706 = vrot.lane.b32.xlu0 %v602, 111
      %v707 = vpop.permute.xlu0 %706
      %708 = vrot.lane.b32.xlu0 %v603, 111
      %v709 = vpop.permute.xlu0 %708
      %v710 = vsel %vm487, %v705, %v707
      %v711 = vsel %vm487, %v707, %v709
      %v714 = vsel %vm403, %v710, 0.0
      %v715 = vsel %vm404, %v711, 0.0
      %716 = vst [vmem:[#allocation3 + $0x80] sm:$0xff] %v714
      %717 = vst [vmem:[#allocation3 + $0x88] sm:$0xff] %v715
      %v718 = vld [vmem:[%s3] sm:$0xff]
      %v719 = vld [vmem:[#allocation3] sm:$0xff]
      %v720 = vld [vmem:[#allocation3 + $0x8] sm:$0xff]
      %v721 = vld [vmem:[#allocation3 + $0x10] sm:$0xff]
      %v722 = vld [vmem:[#allocation3 + $0x18] sm:$0xff]
      %v723 = vld [vmem:[#allocation3 + $0x20] sm:$0xff]
      %v724 = vld [vmem:[#allocation3 + $0x28] sm:$0xff]
      %v725 = vld [vmem:[#allocation3 + $0x30] sm:$0xff]
      %v726 = vld [vmem:[#allocation3 + $0x38] sm:$0xff]
      %v727 = vld [vmem:[#allocation3 + $0x40] sm:$0xff]
      %v728 = vld [vmem:[#allocation3 + $0x48] sm:$0xff]
      %v729 = vld [vmem:[#allocation3 + $0x50] sm:$0xff]
      %v730 = vld [vmem:[#allocation3 + $0x58] sm:$0xff]
      %v731 = vld [vmem:[#allocation3 + $0x60] sm:$0xff]
      %v732 = vld [vmem:[#allocation3 + $0x68] sm:$0xff]
      %v733 = vld [vmem:[#allocation3 + $0x70] sm:$0xff]
      %v734 = vld [vmem:[#allocation3 + $0x78] sm:$0xff]
      %v735 = vld [vmem:[#allocation3 + $0x80] sm:$0xff]
      %v736 = vld [vmem:[#allocation3 + $0x88] sm:$0xff]
      %v737 = vld [vmem:[%s4] sm:$0xff]
      %739 = vset.pattern.permute.xlu0 0
      %740 = vperm.xlu0 %739, %v737
      %v741 = vpop.permute.xlu0 %740
      %v744 = vsel %vm521, %v718, 0
      %746 = vmatprep.subr.mxu0 0.0
      %747 = vmatpush1.msra.mxu0 0.0
      %748 = vmatprep.subr.mxu0 0.0
      %749 = vmatpush1.msra.mxu0 0.0
      %750 = vmatprep.subr.mxu0 0.0
      %751 = vmatpush1.msra.mxu0 0.0
      %752 = vmatprep.subr.mxu0 0.0
      %753 = vmatpush1.msra.mxu0 0.0
      %754 = vmatprep.subr.mxu0 0.0
      %755 = vmatpush1.msra.mxu0 0.0
      %756 = vmatprep.subr.mxu0 0.0
      %757 = vmatpush1.msra.mxu0 0.0
      %758 = vmatprep.subr.mxu0 0.0
      %759 = vmatpush1.msra.mxu0 0.0
      %760 = vmatprep.subr.mxu0 %v736
      %761 = vmatpush1.msra.mxu0 %v735
      %762 = vmatprep.subr.mxu0 %v734
      %763 = vmatpush1.msra.mxu0 %v733
      %764 = vmatprep.subr.mxu0 %v732
      %765 = vmatpush1.msra.mxu0 %v731
      %766 = vmatprep.subr.mxu0 %v730
      %767 = vmatpush1.msra.mxu0 %v729
      %768 = vmatprep.subr.mxu0 %v728
      %769 = vmatpush1.msra.mxu0 %v727
      %770 = vmatprep.subr.mxu0 %v726
      %771 = vmatpush1.msra.mxu0 %v725
      %772 = vmatprep.subr.mxu0 %v724
      %773 = vmatpush1.msra.mxu0 %v723
      %774 = vmatprep.subr.mxu0 %v722
      %775 = vmatpush1.msra.mxu0 %v721
      %776 = vmatprep.subr.mxu0 %v720
      %777 = vmatpush1.msra.mxu0 %v719
      %778 = vmatprep.subr.mxu0 0.0
      %779 = vmatpush2.msra.mxu0 0.0
      %780 = vmatprep.subr.mxu0 0.0
      %781 = vmatpush2.msra.mxu0 0.0
      %782 = vmatprep.subr.mxu0 0.0
      %783 = vmatpush2.msra.mxu0 0.0
      %784 = vmatprep.subr.mxu0 0.0
      %785 = vmatpush2.msra.mxu0 0.0
      %786 = vmatprep.subr.mxu0 0.0
      %787 = vmatpush2.msra.mxu0 0.0
      %788 = vmatprep.subr.mxu0 0.0
      %789 = vmatpush2.msra.mxu0 0.0
      %790 = vmatprep.subr.mxu0 0.0
      %791 = vmatpush2.msra.mxu0 0.0
      %792 = vmatprep.subr.mxu0 0.0
      %793 = vmatpush2.msra.mxu0 0.0
      %794 = vmatprep.subr.mxu0 0.0
      %795 = vmatpush2.msra.mxu0 0.0
      %796 = vmatprep.subr.mxu0 0.0
      %797 = vmatpush2.msra.mxu0 0.0
      %798 = vmatprep.subr.mxu0 0.0
      %799 = vmatpush2.msra.mxu0 0.0
      %800 = vmatprep.subr.mxu0 0.0
      %801 = vmatpush2.msra.mxu0 0.0
      %802 = vmatprep.subr.mxu0 0.0
      %803 = vmatpush2.msra.mxu0 0.0
      %804 = vmatprep.subr.mxu0 0.0
      %805 = vmatpush2.msra.mxu0 0.0
      %806 = vmatprep.subr.mxu0 0.0
      %807 = vmatpush2.msra.mxu0 0.0
      %808 = vmatprep.subr.mxu0 0.0
      %809 = vmatpush2.msra.mxu0 0.0
      %810 = vmatprep.mubr.f32.mxu0 0.0
      %811 = vmatmul.mubr.f32.gmra.mxu0 %v744
      %v812 = vpop.f32.mrf.mxu0
      %v813 = vadd.f32 %v741, %v812
      %v814 = vpop.f32.mrf.mxu0
      %v815 = vadd.f32 %v741, %v814
      %816 = vdwg.mxu0
      %v817 = vmax.f32 %v813, 0.0
      %v818 = vmax.f32 %v815, 0.0
      %819 = vst [vmem:[#allocation2 + $0x8] sm:$0xff] %v817
      %820 = vst [vmem:[#allocation2 + $0x10] sm:$0xff] %v818
      %v821 = vld [vmem:[#allocation2] sm:$0xff]
      %v822 = vld [vmem:[#allocation2 + $0x8] sm:$0xff]
      %v823 = vld [vmem:[#allocation2 + $0x10] sm:$0xff]
      %v824 = vld [vmem:[#allocation2 + $0x18] sm:$0xff]
      %828 = vrot.lane.b32.xlu0 %v821, 17
      %v829 = vpop.permute.xlu0 %828
      %830 = vrot.lane.b32.xlu0 %v822, 17
      %v831 = vpop.permute.xlu0 %830
      %832 = vrot.lane.b32.xlu0 %v823, 17
      %v833 = vpop.permute.xlu0 %832
      %v834 = vsel %vm381, %v829, %v831
      %v835 = vsel %vm381, %v831, %v833
      %v838 = vsel %vm370, %v834, 0.0
      %v839 = vsel %vm371, %v835, 0.0
      %840 = vst [vmem:[#allocation3] sm:$0xff] %v838
      %841 = vst [vmem:[#allocation3 + $0x8] sm:$0xff] %v839
      %842 = vrot.lane.b32.xlu0 %v821, 16
      %v843 = vpop.permute.xlu0 %842
      %844 = vrot.lane.b32.xlu0 %v822, 16
      %v845 = vpop.permute.xlu0 %844
      %846 = vrot.lane.b32.xlu0 %v823, 16
      %v847 = vpop.permute.xlu0 %846
      %v848 = vsel %vm396, %v843, %v845
      %v849 = vsel %vm396, %v845, %v847
      %852 = vst [vmem:[#allocation3 + $0x10] sm:$0xff] %v848
      %853 = vst [vmem:[#allocation3 + $0x18] sm:$0xff] %v849
      %854 = vrot.lane.b32.xlu0 %v821, 15
      %v855 = vpop.permute.xlu0 %854
      %856 = vrot.lane.b32.xlu0 %v822, 15
      %v857 = vpop.permute.xlu0 %856
      %858 = vrot.lane.b32.xlu0 %v823, 15
      %v859 = vpop.permute.xlu0 %858
      %v860 = vsel %vm411, %v855, %v857
      %v861 = vsel %vm411, %v857, %v859
      %v864 = vsel %vm403, %v860, 0.0
      %v865 = vsel %vm404, %v861, 0.0
      %866 = vst [vmem:[#allocation3 + $0x20] sm:$0xff] %v864
      %867 = vst [vmem:[#allocation3 + $0x28] sm:$0xff] %v865
      %868 = vrot.lane.b32.xlu0 %v821, 1
      %v869 = vpop.permute.xlu0 %868
      %870 = vrot.lane.b32.xlu0 %v822, 1
      %v871 = vpop.permute.xlu0 %870
      %872 = vrot.lane.b32.xlu0 %v823, 1
      %v873 = vpop.permute.xlu0 %872
      %v874 = vsel %vm426, %v869, %v871
      %v875 = vsel %vm426, %v871, %v873
      %v878 = vsel %vm370, %v874, 0.0
      %v879 = vsel %vm371, %v875, 0.0
      %880 = vst [vmem:[#allocation3 + $0x30] sm:$0xff] %v878
      %881 = vst [vmem:[#allocation3 + $0x38] sm:$0xff] %v879
      %882 = vst [vmem:[#allocation3 + $0x40] sm:$0xff] %v822
      %883 = vst [vmem:[#allocation3 + $0x48] sm:$0xff] %v823
      %885 = vrot.lane.b32.xlu0 %v822, 127
      %v886 = vpop.permute.xlu0 %885
      %887 = vrot.lane.b32.xlu0 %v823, 127
      %v888 = vpop.permute.xlu0 %887
      %889 = vrot.lane.b32.xlu0 %v824, 127
      %v890 = vpop.permute.xlu0 %889
      %v891 = vsel %vm444, %v886, %v888
      %v892 = vsel %vm444, %v888, %v890
      %v895 = vsel %vm403, %v891, 0.0
      %v896 = vsel %vm404, %v892, 0.0
      %897 = vst [vmem:[#allocation3 + $0x50] sm:$0xff] %v895
      %898 = vst [vmem:[#allocation3 + $0x58] sm:$0xff] %v896
      %899 = vrot.lane.b32.xlu0 %v822, 113
      %v900 = vpop.permute.xlu0 %899
      %901 = vrot.lane.b32.xlu0 %v823, 113
      %v902 = vpop.permute.xlu0 %901
      %903 = vrot.lane.b32.xlu0 %v824, 113
      %v904 = vpop.permute.xlu0 %903
      %v905 = vsel %vm459, %v900, %v902
      %v906 = vsel %vm459, %v902, %v904
      %v909 = vsel %vm370, %v905, 0.0
      %v910 = vsel %vm371, %v906, 0.0
      %911 = vst [vmem:[#allocation3 + $0x60] sm:$0xff] %v909
      %912 = vst [vmem:[#allocation3 + $0x68] sm:$0xff] %v910
      %913 = vrot.lane.b32.xlu0 %v822, 112
      %v914 = vpop.permute.xlu0 %913
      %915 = vrot.lane.b32.xlu0 %v823, 112
      %v916 = vpop.permute.xlu0 %915
      %917 = vrot.lane.b32.xlu0 %v824, 112
      %v918 = vpop.permute.xlu0 %917
      %v919 = vsel %vm474, %v914, %v916
      %v920 = vsel %vm474, %v916, %v918
      %923 = vst [vmem:[#allocation3 + $0x70] sm:$0xff] %v919
      %924 = vst [vmem:[#allocation3 + $0x78] sm:$0xff] %v920
      %925 = vrot.lane.b32.xlu0 %v822, 111
      %v926 = vpop.permute.xlu0 %925
      %927 = vrot.lane.b32.xlu0 %v823, 111
      %v928 = vpop.permute.xlu0 %927
      %929 = vrot.lane.b32.xlu0 %v824, 111
      %v930 = vpop.permute.xlu0 %929
      %v931 = vsel %vm487, %v926, %v928
      %v932 = vsel %vm487, %v928, %v930
      %v935 = vsel %vm403, %v931, 0.0
      %v936 = vsel %vm404, %v932, 0.0
      %937 = vst [vmem:[#allocation3 + $0x80] sm:$0xff] %v935
      %938 = vst [vmem:[#allocation3 + $0x88] sm:$0xff] %v936
      %v939 = vld [vmem:[%s5] sm:$0xff]
      %v940 = vld [vmem:[#allocation3] sm:$0xff]
      %v941 = vld [vmem:[#allocation3 + $0x8] sm:$0xff]
      %v942 = vld [vmem:[#allocation3 + $0x10] sm:$0xff]
      %v943 = vld [vmem:[#allocation3 + $0x18] sm:$0xff]
      %v944 = vld [vmem:[#allocation3 + $0x20] sm:$0xff]
      %v945 = vld [vmem:[#allocation3 + $0x28] sm:$0xff]
      %v946 = vld [vmem:[#allocation3 + $0x30] sm:$0xff]
      %v947 = vld [vmem:[#allocation3 + $0x38] sm:$0xff]
      %v948 = vld [vmem:[#allocation3 + $0x40] sm:$0xff]
      %v949 = vld [vmem:[#allocation3 + $0x48] sm:$0xff]
      %v950 = vld [vmem:[#allocation3 + $0x50] sm:$0xff]
      %v951 = vld [vmem:[#allocation3 + $0x58] sm:$0xff]
      %v952 = vld [vmem:[#allocation3 + $0x60] sm:$0xff]
      %v953 = vld [vmem:[#allocation3 + $0x68] sm:$0xff]
      %v954 = vld [vmem:[#allocation3 + $0x70] sm:$0xff]
      %v955 = vld [vmem:[#allocation3 + $0x78] sm:$0xff]
      %v956 = vld [vmem:[#allocation3 + $0x80] sm:$0xff]
      %v957 = vld [vmem:[#allocation3 + $0x88] sm:$0xff]
      %v958 = vld [vmem:[%s6] sm:$0xff]
      %960 = vset.pattern.permute.xlu0 0
      %961 = vperm.xlu0 %960, %v958
      %v962 = vpop.permute.xlu0 %961
      %v965 = vsel %vm521, %v939, 0
      %967 = vmatprep.subr.mxu0 0.0
      %968 = vmatpush1.msra.mxu0 0.0
      %969 = vmatprep.subr.mxu0 0.0
      %970 = vmatpush1.msra.mxu0 0.0
      %971 = vmatprep.subr.mxu0 0.0
      %972 = vmatpush1.msra.mxu0 0.0
      %973 = vmatprep.subr.mxu0 0.0
      %974 = vmatpush1.msra.mxu0 0.0
      %975 = vmatprep.subr.mxu0 0.0
      %976 = vmatpush1.msra.mxu0 0.0
      %977 = vmatprep.subr.mxu0 0.0
      %978 = vmatpush1.msra.mxu0 0.0
      %979 = vmatprep.subr.mxu0 0.0
      %980 = vmatpush1.msra.mxu0 0.0
      %981 = vmatprep.subr.mxu0 %v957
      %982 = vmatpush1.msra.mxu0 %v956
      %983 = vmatprep.subr.mxu0 %v955
      %984 = vmatpush1.msra.mxu0 %v954
      %985 = vmatprep.subr.mxu0 %v953
      %986 = vmatpush1.msra.mxu0 %v952
      %987 = vmatprep.subr.mxu0 %v951
      %988 = vmatpush1.msra.mxu0 %v950
      %989 = vmatprep.subr.mxu0 %v949
      %990 = vmatpush1.msra.mxu0 %v948
      %991 = vmatprep.subr.mxu0 %v947
      %992 = vmatpush1.msra.mxu0 %v946
      %993 = vmatprep.subr.mxu0 %v945
      %994 = vmatpush1.msra.mxu0 %v944
      %995 = vmatprep.subr.mxu0 %v943
      %996 = vmatpush1.msra.mxu0 %v942
      %997 = vmatprep.subr.mxu0 %v941
      %998 = vmatpush1.msra.mxu0 %v940
      %999 = vmatprep.subr.mxu0 0.0
      %1000 = vmatpush2.msra.mxu0 0.0
      %1001 = vmatprep.subr.mxu0 0.0
      %1002 = vmatpush2.msra.mxu0 0.0
      %1003 = vmatprep.subr.mxu0 0.0
      %1004 = vmatpush2.msra.mxu0 0.0
      %1005 = vmatprep.subr.mxu0 0.0
      %1006 = vmatpush2.msra.mxu0 0.0
      %1007 = vmatprep.subr.mxu0 0.0
      %1008 = vmatpush2.msra.mxu0 0.0
      %1009 = vmatprep.subr.mxu0 0.0
      %1010 = vmatpush2.msra.mxu0 0.0
      %1011 = vmatprep.subr.mxu0 0.0
      %1012 = vmatpush2.msra.mxu0 0.0
      %1013 = vmatprep.subr.mxu0 0.0
      %1014 = vmatpush2.msra.mxu0 0.0
      %1015 = vmatprep.subr.mxu0 0.0
      %1016 = vmatpush2.msra.mxu0 0.0
      %1017 = vmatprep.subr.mxu0 0.0
      %1018 = vmatpush2.msra.mxu0 0.0
      %1019 = vmatprep.subr.mxu0 0.0
      %1020 = vmatpush2.msra.mxu0 0.0
      %1021 = vmatprep.subr.mxu0 0.0
      %1022 = vmatpush2.msra.mxu0 0.0
      %1023 = vmatprep.subr.mxu0 0.0
      %1024 = vmatpush2.msra.mxu0 0.0
      %1025 = vmatprep.subr.mxu0 0.0
      %1026 = vmatpush2.msra.mxu0 0.0
      %1027 = vmatprep.subr.mxu0 0.0
      %1028 = vmatpush2.msra.mxu0 0.0
      %1029 = vmatprep.subr.mxu0 0.0
      %1030 = vmatpush2.msra.mxu0 0.0
      %1031 = vmatprep.mubr.f32.mxu0 0.0
      %1032 = vmatmul.mubr.f32.gmra.mxu0 %v965
      %v1033 = vpop.f32.mrf.mxu0
      %v1034 = vadd.f32 %v962, %v1033
      %v1035 = vpop.f32.mrf.mxu0
      %v1036 = vadd.f32 %v962, %v1035
      %1037 = vdwg.mxu0
      %v1038 = vmax.f32 %v1034, 0.0
      %v1039 = vmax.f32 %v1036, 0.0
      %v1040 = vld [vmem:[%s8] sm:$0xf]
      %v1041 = vpack.c.bf16 %v1038, %v1038
      %v1042 = vpack.c.bf16 %v1039, %v1039
      %v1043 = vld [vmem:[%s7] sm:$0xff]
      %v1044 = vld [vmem:[%s7 + $0x8] sm:$0xff]
      %v1045 = vld [vmem:[%s7 + $0x10] sm:$0xff]
      %v1046 = vld [vmem:[%s7 + $0x18] sm:$0xff]
      %v1047 = vld [vmem:[%s7 + $0x20] sm:$0xff]
      %v1048 = vld [vmem:[%s7 + $0x28] sm:$0xff]
      %v1049 = vld [vmem:[%s7 + $0x30] sm:$0xff]
      %v1050 = vld [vmem:[%s7 + $0x38] sm:$0xff]
      %v1051 = vld [vmem:[%s7 + $0x40] sm:$0xff]
      %v1052 = vld [vmem:[%s7 + $0x48] sm:$0xff]
      %v1053 = vld [vmem:[%s7 + $0x50] sm:$0xff]
      %v1054 = vld [vmem:[%s7 + $0x58] sm:$0xff]
      %v1055 = vld [vmem:[%s7 + $0x60] sm:$0xff]
      %v1056 = vld [vmem:[%s7 + $0x68] sm:$0xff]
      %v1057 = vld [vmem:[%s7 + $0x70] sm:$0xff]
      %v1058 = vld [vmem:[%s7 + $0x78] sm:$0xff]
      %v1059 = vld [vmem:[%s7 + $0x80] sm:$0xff]
      %v1060 = vld [vmem:[%s7 + $0x88] sm:$0xff]
      %v1061 = vld [vmem:[%s7 + $0x90] sm:$0xff]
      %v1062 = vld [vmem:[%s7 + $0x98] sm:$0xff]
      %v1063 = vld [vmem:[%s7 + $0xa0] sm:$0xff]
      %v1064 = vld [vmem:[%s7 + $0xa8] sm:$0xff]
      %v1065 = vld [vmem:[%s7 + $0xb0] sm:$0xff]
      %v1066 = vld [vmem:[%s7 + $0xb8] sm:$0xff]
      %v1067 = vld [vmem:[%s7 + $0xc0] sm:$0xff]
      %v1068 = vld [vmem:[%s7 + $0xc8] sm:$0xff]
      %v1069 = vld [vmem:[%s7 + $0xd0] sm:$0xff]
      %v1070 = vld [vmem:[%s7 + $0xd8] sm:$0xff]
      %v1071 = vld [vmem:[%s7 + $0xe0] sm:$0xff]
      %v1072 = vld [vmem:[%s7 + $0xe8] sm:$0xff]
      %v1073 = vld [vmem:[%s7 + $0xf0] sm:$0xff]
      %v1074 = vld [vmem:[%s7 + $0xf8] sm:$0xff]
      %v1075 = vld [vmem:[%s7 + $0x100] sm:$0xff]
      %v1076 = vld [vmem:[%s7 + $0x108] sm:$0xff]
      %v1077 = vld [vmem:[%s7 + $0x110] sm:$0xff]
      %v1078 = vld [vmem:[%s7 + $0x118] sm:$0xff]
      %v1079 = vld [vmem:[%s7 + $0x120] sm:$0xff]
      %v1080 = vld [vmem:[%s7 + $0x128] sm:$0xff]
      %v1081 = vld [vmem:[%s7 + $0x130] sm:$0xff]
      %v1082 = vld [vmem:[%s7 + $0x138] sm:$0xff]
      %v1083 = vld [vmem:[%s7 + $0x140] sm:$0xff]
      %v1084 = vld [vmem:[%s7 + $0x148] sm:$0xff]
      %v1085 = vld [vmem:[%s7 + $0x150] sm:$0xff]
      %v1086 = vld [vmem:[%s7 + $0x158] sm:$0xff]
      %v1087 = vld [vmem:[%s7 + $0x160] sm:$0xff]
      %v1088 = vld [vmem:[%s7 + $0x168] sm:$0xff]
      %v1089 = vld [vmem:[%s7 + $0x170] sm:$0xff]
      %v1090 = vld [vmem:[%s7 + $0x178] sm:$0xff]
      %v1091 = vld [vmem:[%s7 + $0x180] sm:$0xff]
      %v1092 = vld [vmem:[%s7 + $0x188] sm:$0xff]
      %v1093 = vld [vmem:[%s7 + $0x190] sm:$0xff]
      %v1094 = vld [vmem:[%s7 + $0x198] sm:$0xff]
      %v1095 = vld [vmem:[%s7 + $0x1a0] sm:$0xff]
      %v1096 = vld [vmem:[%s7 + $0x1a8] sm:$0xff]
      %v1097 = vld [vmem:[%s7 + $0x1b0] sm:$0xff]
      %v1098 = vld [vmem:[%s7 + $0x1b8] sm:$0xff]
      %v1099 = vld [vmem:[%s7 + $0x1c0] sm:$0xff]
      %v1100 = vld [vmem:[%s7 + $0x1c8] sm:$0xff]
      %v1101 = vld [vmem:[%s7 + $0x1d0] sm:$0xff]
      %v1102 = vld [vmem:[%s7 + $0x1d8] sm:$0xff]
      %v1103 = vld [vmem:[%s7 + $0x1e0] sm:$0xff]
      %v1104 = vld [vmem:[%s7 + $0x1e8] sm:$0xff]
      %v1105 = vld [vmem:[%s7 + $0x1f0] sm:$0xff]
      %v1106 = vld [vmem:[%s7 + $0x1f8] sm:$0xff]
      %v1171 = vunpack.c.l.b16 %v1043
      %v1172 = vunpack.c.h.b16 %v1043
      %v1173 = vunpack.c.l.b16 %v1044
      %v1174 = vunpack.c.h.b16 %v1044
      %v1175 = vunpack.c.l.b16 %v1045
      %v1176 = vunpack.c.h.b16 %v1045
      %v1177 = vunpack.c.l.b16 %v1046
      %v1178 = vunpack.c.h.b16 %v1046
      %v1179 = vunpack.c.l.b16 %v1047
      %v1180 = vunpack.c.h.b16 %v1047
      %v1181 = vunpack.c.l.b16 %v1048
      %v1182 = vunpack.c.h.b16 %v1048
      %v1183 = vunpack.c.l.b16 %v1049
      %v1184 = vunpack.c.h.b16 %v1049
      %v1185 = vunpack.c.l.b16 %v1050
      %v1186 = vunpack.c.h.b16 %v1050
      %v1187 = vunpack.c.l.b16 %v1051
      %v1188 = vunpack.c.h.b16 %v1051
      %v1189 = vunpack.c.l.b16 %v1052
      %v1190 = vunpack.c.h.b16 %v1052
      %v1191 = vunpack.c.l.b16 %v1053
      %v1192 = vunpack.c.h.b16 %v1053
      %v1193 = vunpack.c.l.b16 %v1054
      %v1194 = vunpack.c.h.b16 %v1054
      %v1195 = vunpack.c.l.b16 %v1055
      %v1196 = vunpack.c.h.b16 %v1055
      %v1197 = vunpack.c.l.b16 %v1056
      %v1198 = vunpack.c.h.b16 %v1056
      %v1199 = vunpack.c.l.b16 %v1057
      %v1200 = vunpack.c.h.b16 %v1057
      %v1201 = vunpack.c.l.b16 %v1058
      %v1202 = vunpack.c.h.b16 %v1058
      %v1203 = vunpack.c.l.b16 %v1059
      %v1204 = vunpack.c.h.b16 %v1059
      %v1205 = vunpack.c.l.b16 %v1060
      %v1206 = vunpack.c.h.b16 %v1060
      %v1207 = vunpack.c.l.b16 %v1061
      %v1208 = vunpack.c.h.b16 %v1061
      %v1209 = vunpack.c.l.b16 %v1062
      %v1210 = vunpack.c.h.b16 %v1062
      %v1211 = vunpack.c.l.b16 %v1063
      %v1212 = vunpack.c.h.b16 %v1063
      %v1213 = vunpack.c.l.b16 %v1064
      %v1214 = vunpack.c.h.b16 %v1064
      %v1215 = vunpack.c.l.b16 %v1065
      %v1216 = vunpack.c.h.b16 %v1065
      %v1217 = vunpack.c.l.b16 %v1066
      %v1218 = vunpack.c.h.b16 %v1066
      %v1219 = vunpack.c.l.b16 %v1067
      %v1220 = vunpack.c.h.b16 %v1067
      %v1221 = vunpack.c.l.b16 %v1068
      %v1222 = vunpack.c.h.b16 %v1068
      %v1223 = vunpack.c.l.b16 %v1069
      %v1224 = vunpack.c.h.b16 %v1069
      %v1225 = vunpack.c.l.b16 %v1070
      %v1226 = vunpack.c.h.b16 %v1070
      %v1227 = vunpack.c.l.b16 %v1071
      %v1228 = vunpack.c.h.b16 %v1071
      %v1229 = vunpack.c.l.b16 %v1072
      %v1230 = vunpack.c.h.b16 %v1072
      %v1231 = vunpack.c.l.b16 %v1073
      %v1232 = vunpack.c.h.b16 %v1073
      %v1233 = vunpack.c.l.b16 %v1074
      %v1234 = vunpack.c.h.b16 %v1074
      %v1235 = vunpack.c.l.b16 %v1075
      %v1236 = vunpack.c.h.b16 %v1075
      %v1237 = vunpack.c.l.b16 %v1076
      %v1238 = vunpack.c.h.b16 %v1076
      %v1239 = vunpack.c.l.b16 %v1077
      %v1240 = vunpack.c.h.b16 %v1077
      %v1241 = vunpack.c.l.b16 %v1078
      %v1242 = vunpack.c.h.b16 %v1078
      %v1243 = vunpack.c.l.b16 %v1079
      %v1244 = vunpack.c.h.b16 %v1079
      %v1245 = vunpack.c.l.b16 %v1080
      %v1246 = vunpack.c.h.b16 %v1080
      %v1247 = vunpack.c.l.b16 %v1081
      %v1248 = vunpack.c.h.b16 %v1081
      %v1249 = vunpack.c.l.b16 %v1082
      %v1250 = vunpack.c.h.b16 %v1082
      %v1251 = vunpack.c.l.b16 %v1083
      %v1252 = vunpack.c.h.b16 %v1083
      %v1253 = vunpack.c.l.b16 %v1084
      %v1254 = vunpack.c.h.b16 %v1084
      %v1255 = vunpack.c.l.b16 %v1085
      %v1256 = vunpack.c.h.b16 %v1085
      %v1257 = vunpack.c.l.b16 %v1086
      %v1258 = vunpack.c.h.b16 %v1086
      %v1259 = vunpack.c.l.b16 %v1087
      %v1260 = vunpack.c.h.b16 %v1087
      %v1261 = vunpack.c.l.b16 %v1088
      %v1262 = vunpack.c.h.b16 %v1088
      %v1263 = vunpack.c.l.b16 %v1089
      %v1264 = vunpack.c.h.b16 %v1089
      %v1265 = vunpack.c.l.b16 %v1090
      %v1266 = vunpack.c.h.b16 %v1090
      %v1267 = vunpack.c.l.b16 %v1091
      %v1268 = vunpack.c.h.b16 %v1091
      %v1269 = vunpack.c.l.b16 %v1092
      %v1270 = vunpack.c.h.b16 %v1092
      %v1271 = vunpack.c.l.b16 %v1093
      %v1272 = vunpack.c.h.b16 %v1093
      %v1273 = vunpack.c.l.b16 %v1094
      %v1274 = vunpack.c.h.b16 %v1094
      %v1275 = vunpack.c.l.b16 %v1095
      %v1276 = vunpack.c.h.b16 %v1095
      %v1277 = vunpack.c.l.b16 %v1096
      %v1278 = vunpack.c.h.b16 %v1096
      %v1279 = vunpack.c.l.b16 %v1097
      %v1280 = vunpack.c.h.b16 %v1097
      %v1281 = vunpack.c.l.b16 %v1098
      %v1282 = vunpack.c.h.b16 %v1098
      %v1283 = vunpack.c.l.b16 %v1099
      %v1284 = vunpack.c.h.b16 %v1099
      %v1285 = vunpack.c.l.b16 %v1100
      %v1286 = vunpack.c.h.b16 %v1100
      %v1287 = vunpack.c.l.b16 %v1101
      %v1288 = vunpack.c.h.b16 %v1101
      %v1289 = vunpack.c.l.b16 %v1102
      %v1290 = vunpack.c.h.b16 %v1102
      %v1291 = vunpack.c.l.b16 %v1103
      %v1292 = vunpack.c.h.b16 %v1103
      %v1293 = vunpack.c.l.b16 %v1104
      %v1294 = vunpack.c.h.b16 %v1104
      %v1295 = vunpack.c.l.b16 %v1105
      %v1296 = vunpack.c.h.b16 %v1105
      %v1297 = vunpack.c.l.b16 %v1106
      %v1298 = vunpack.c.h.b16 %v1106
      %v1299 = vpack.c.b16 %v1175, %v1171
      %v1300 = vpack.c.b16 %v1176, %v1172
      %v1301 = vpack.c.b16 %v1177, %v1173
      %v1302 = vpack.c.b16 %v1178, %v1174
      %v1303 = vpack.c.b16 %v1183, %v1179
      %v1304 = vpack.c.b16 %v1184, %v1180
      %v1305 = vpack.c.b16 %v1185, %v1181
      %v1306 = vpack.c.b16 %v1186, %v1182
      %v1307 = vpack.c.b16 %v1191, %v1187
      %v1308 = vpack.c.b16 %v1192, %v1188
      %v1309 = vpack.c.b16 %v1193, %v1189
      %v1310 = vpack.c.b16 %v1194, %v1190
      %v1311 = vpack.c.b16 %v1199, %v1195
      %v1312 = vpack.c.b16 %v1200, %v1196
      %v1313 = vpack.c.b16 %v1201, %v1197
      %v1314 = vpack.c.b16 %v1202, %v1198
      %v1315 = vpack.c.b16 %v1207, %v1203
      %v1316 = vpack.c.b16 %v1208, %v1204
      %v1317 = vpack.c.b16 %v1209, %v1205
      %v1318 = vpack.c.b16 %v1210, %v1206
      %v1319 = vpack.c.b16 %v1215, %v1211
      %v1320 = vpack.c.b16 %v1216, %v1212
      %v1321 = vpack.c.b16 %v1217, %v1213
      %v1322 = vpack.c.b16 %v1218, %v1214
      %v1323 = vpack.c.b16 %v1223, %v1219
      %v1324 = vpack.c.b16 %v1224, %v1220
      %v1325 = vpack.c.b16 %v1225, %v1221
      %v1326 = vpack.c.b16 %v1226, %v1222
      %v1327 = vpack.c.b16 %v1231, %v1227
      %v1328 = vpack.c.b16 %v1232, %v1228
      %v1329 = vpack.c.b16 %v1233, %v1229
      %v1330 = vpack.c.b16 %v1234, %v1230
      %v1331 = vpack.c.b16 %v1239, %v1235
      %v1332 = vpack.c.b16 %v1240, %v1236
      %v1333 = vpack.c.b16 %v1241, %v1237
      %v1334 = vpack.c.b16 %v1242, %v1238
      %v1335 = vpack.c.b16 %v1247, %v1243
      %v1336 = vpack.c.b16 %v1248, %v1244
      %v1337 = vpack.c.b16 %v1249, %v1245
      %v1338 = vpack.c.b16 %v1250, %v1246
      %v1339 = vpack.c.b16 %v1255, %v1251
      %v1340 = vpack.c.b16 %v1256, %v1252
      %v1341 = vpack.c.b16 %v1257, %v1253
      %v1342 = vpack.c.b16 %v1258, %v1254
      %v1343 = vpack.c.b16 %v1263, %v1259
      %v1344 = vpack.c.b16 %v1264, %v1260
      %v1345 = vpack.c.b16 %v1265, %v1261
      %v1346 = vpack.c.b16 %v1266, %v1262
      %v1347 = vpack.c.b16 %v1271, %v1267
      %v1348 = vpack.c.b16 %v1272, %v1268
      %v1349 = vpack.c.b16 %v1273, %v1269
      %v1350 = vpack.c.b16 %v1274, %v1270
      %v1351 = vpack.c.b16 %v1279, %v1275
      %v1352 = vpack.c.b16 %v1280, %v1276
      %v1353 = vpack.c.b16 %v1281, %v1277
      %v1354 = vpack.c.b16 %v1282, %v1278
      %v1355 = vpack.c.b16 %v1287, %v1283
      %v1356 = vpack.c.b16 %v1288, %v1284
      %v1357 = vpack.c.b16 %v1289, %v1285
      %v1358 = vpack.c.b16 %v1290, %v1286
      %v1359 = vpack.c.b16 %v1295, %v1291
      %v1360 = vpack.c.b16 %v1296, %v1292
      %v1361 = vpack.c.b16 %v1297, %v1293
      %v1362 = vpack.c.b16 %v1298, %v1294
      %1427 = vmatprep.subr.bf16.mxu0 %v1328
      %1428 = vmatpush1.bf16.msra.mxu0 %v1327
      %1429 = vmatprep.subr.bf16.mxu0 %v1324
      %1430 = vmatpush1.bf16.msra.mxu0 %v1323
      %1431 = vmatprep.subr.bf16.mxu0 %v1320
      %1432 = vmatpush1.bf16.msra.mxu0 %v1319
      %1433 = vmatprep.subr.bf16.mxu0 %v1316
      %1434 = vmatpush1.bf16.msra.mxu0 %v1315
      %1435 = vmatprep.subr.bf16.mxu0 %v1312
      %1436 = vmatpush1.bf16.msra.mxu0 %v1311
      %1437 = vmatprep.subr.bf16.mxu0 %v1308
      %1438 = vmatpush1.bf16.msra.mxu0 %v1307
      %1439 = vmatprep.subr.bf16.mxu0 %v1304
      %1440 = vmatpush1.bf16.msra.mxu0 %v1303
      %1441 = vmatprep.subr.bf16.mxu0 %v1300
      %1442 = vmatpush1.bf16.msra.mxu0 %v1299
      %1443 = vmatprep.subr.bf16.mxu0 %v1360
      %1444 = vmatpush2.bf16.msra.mxu0 %v1359
      %1445 = vmatprep.subr.bf16.mxu0 %v1356
      %1446 = vmatpush2.bf16.msra.mxu0 %v1355
      %1447 = vmatprep.subr.bf16.mxu0 %v1352
      %1448 = vmatpush2.bf16.msra.mxu0 %v1351
      %1449 = vmatprep.subr.bf16.mxu0 %v1348
      %1450 = vmatpush2.bf16.msra.mxu0 %v1347
      %1451 = vmatprep.subr.bf16.mxu0 %v1344
      %1452 = vmatpush2.bf16.msra.mxu0 %v1343
      %1453 = vmatprep.subr.bf16.mxu0 %v1340
      %1454 = vmatpush2.bf16.msra.mxu0 %v1339
      %1455 = vmatprep.subr.bf16.mxu0 %v1336
      %1456 = vmatpush2.bf16.msra.mxu0 %v1335
      %1457 = vmatprep.subr.bf16.mxu0 %v1332
      %1458 = vmatpush2.bf16.msra.mxu0 %v1331
      %1459 = vmatprep.mubr.bf16.mxu0 %v1042
      %1460 = vmatmul.mubr.bf16.gmra.mxu0 %v1041
      %v1461 = vpop.f32.mrf.mxu0
      %v1462 = vadd.f32 0.0, %v1461
      %v1463 = vpop.f32.mrf.mxu0
      %v1464 = vadd.f32 0.0, %v1463
      %v1465 = vpop.f32.mrf.mxu0
      %v1466 = vpop.f32.mrf.mxu0
      %1467 = vdwg.mxu0
      %1468 = vmatprep.subr.bf16.mxu0 %v1330
      %1469 = vmatpush1.bf16.msra.mxu0 %v1329
      %1470 = vmatprep.subr.bf16.mxu0 %v1326
      %1471 = vmatpush1.bf16.msra.mxu0 %v1325
      %1472 = vmatprep.subr.bf16.mxu0 %v1322
      %1473 = vmatpush1.bf16.msra.mxu0 %v1321
      %1474 = vmatprep.subr.bf16.mxu0 %v1318
      %1475 = vmatpush1.bf16.msra.mxu0 %v1317
      %1476 = vmatprep.subr.bf16.mxu0 %v1314
      %1477 = vmatpush1.bf16.msra.mxu0 %v1313
      %1478 = vmatprep.subr.bf16.mxu0 %v1310
      %1479 = vmatpush1.bf16.msra.mxu0 %v1309
      %1480 = vmatprep.subr.bf16.mxu0 %v1306
      %1481 = vmatpush1.bf16.msra.mxu0 %v1305
      %1482 = vmatprep.subr.bf16.mxu0 %v1302
      %1483 = vmatpush1.bf16.msra.mxu0 %v1301
      %1484 = vmatprep.subr.bf16.mxu0 %v1362
      %1485 = vmatpush2.bf16.msra.mxu0 %v1361
      %1486 = vmatprep.subr.bf16.mxu0 %v1358
      %1487 = vmatpush2.bf16.msra.mxu0 %v1357
      %1488 = vmatprep.subr.bf16.mxu0 %v1354
      %1489 = vmatpush2.bf16.msra.mxu0 %v1353
      %1490 = vmatprep.subr.bf16.mxu0 %v1350
      %1491 = vmatpush2.bf16.msra.mxu0 %v1349
      %1492 = vmatprep.subr.bf16.mxu0 %v1346
      %1493 = vmatpush2.bf16.msra.mxu0 %v1345
      %1494 = vmatprep.subr.bf16.mxu0 %v1342
      %1495 = vmatpush2.bf16.msra.mxu0 %v1341
      %1496 = vmatprep.subr.bf16.mxu0 %v1338
      %1497 = vmatpush2.bf16.msra.mxu0 %v1337
      %1498 = vmatprep.subr.bf16.mxu0 %v1334
      %1499 = vmatpush2.bf16.msra.mxu0 %v1333
      %1500 = vmatprep.mubr.bf16.mxu0 %v1042
      %1501 = vmatmul.mubr.bf16.gmra.mxu0 %v1041
      %v1502 = vpop.f32.mrf.mxu0
      %v1503 = vadd.f32 0.0, %v1502
      %v1504 = vpop.f32.mrf.mxu0
      %v1505 = vadd.f32 0.0, %v1504
      %v1506 = vpop.f32.mrf.mxu0
      %v1507 = vpop.f32.mrf.mxu0
      %1508 = vdwg.mxu0
      %v1513 = vcombine.low %v1462, %v1464
      %v1514 = vcombine.low %v1503, %v1505
      %v1516 = vunpack.c.l.s4 1966171168
      %v1517 = vunpack.c.0.s8 %v1516
      %v1518 = vlaneseq
      %v1519 = vshrl.u32 %v1518, 7
      %v1520 = vsub.s32 %v1517, %v1519
      %v1521 = vrot.slane %v1513, %v1520
      %v1523 = vunpack.c.l.s4 1966171168
      %v1524 = vunpack.c.0.s8 %v1523
      %v1525 = vlaneseq
      %v1526 = vshrl.u32 %v1525, 7
      %v1527 = vsub.s32 %v1524, %v1526
      %v1528 = vrot.slane %v1514, %v1527
      %v1529 = vcombine.low %v1521, %v1528
      %v1531 = vunpack.c.l.s4 1966171168
      %v1532 = vunpack.c.0.s8 %v1531
      %v1533 = vlaneseq
      %v1534 = vshrl.u32 %v1533, 7
      %v1535 = vsub.s32 %v1532, %v1534
      %v1536 = vrot.slane %v1529, %v1535
      %v1538 = vadd.f32 %v1040, %v1536
      %s1539 = scalar_lea.vmem %s7, 512
      %v1540 = vld [vmem:[%s1539] sm:$0xff]
      %v1541 = vld [vmem:[%s1539 + $0x8] sm:$0xff]
      %v1542 = vld [vmem:[%s1539 + $0x10] sm:$0xff]
      %v1543 = vld [vmem:[%s1539 + $0x18] sm:$0xff]
      %v1544 = vld [vmem:[%s1539 + $0x20] sm:$0xff]
      %v1545 = vld [vmem:[%s1539 + $0x28] sm:$0xff]
      %v1546 = vld [vmem:[%s1539 + $0x30] sm:$0xff]
      %v1547 = vld [vmem:[%s1539 + $0x38] sm:$0xff]
      %v1548 = vld [vmem:[%s1539 + $0x40] sm:$0xff]
      %v1549 = vld [vmem:[%s1539 + $0x48] sm:$0xff]
      %v1550 = vld [vmem:[%s1539 + $0x50] sm:$0xff]
      %v1551 = vld [vmem:[%s1539 + $0x58] sm:$0xff]
      %v1552 = vld [vmem:[%s1539 + $0x60] sm:$0xff]
      %v1553 = vld [vmem:[%s1539 + $0x68] sm:$0xff]
      %v1554 = vld [vmem:[%s1539 + $0x70] sm:$0xff]
      %v1555 = vld [vmem:[%s1539 + $0x78] sm:$0xff]
      %v1556 = vld [vmem:[%s1539 + $0x80] sm:$0xff]
      %v1557 = vld [vmem:[%s1539 + $0x88] sm:$0xff]
      %v1558 = vld [vmem:[%s1539 + $0x90] sm:$0xff]
      %v1559 = vld [vmem:[%s1539 + $0x98] sm:$0xff]
      %v1560 = vld [vmem:[%s1539 + $0xa0] sm:$0xff]
      %v1561 = vld [vmem:[%s1539 + $0xa8] sm:$0xff]
      %v1562 = vld [vmem:[%s1539 + $0xb0] sm:$0xff]
      %v1563 = vld [vmem:[%s1539 + $0xb8] sm:$0xff]
      %v1564 = vld [vmem:[%s1539 + $0xc0] sm:$0xff]
      %v1565 = vld [vmem:[%s1539 + $0xc8] sm:$0xff]
      %v1566 = vld [vmem:[%s1539 + $0xd0] sm:$0xff]
      %v1567 = vld [vmem:[%s1539 + $0xd8] sm:$0xff]
      %v1568 = vld [vmem:[%s1539 + $0xe0] sm:$0xff]
      %v1569 = vld [vmem:[%s1539 + $0xe8] sm:$0xff]
      %v1570 = vld [vmem:[%s1539 + $0xf0] sm:$0xff]
      %v1571 = vld [vmem:[%s1539 + $0xf8] sm:$0xff]
      %v1572 = vld [vmem:[%s1539 + $0x100] sm:$0xff]
      %v1573 = vld [vmem:[%s1539 + $0x108] sm:$0xff]
      %v1574 = vld [vmem:[%s1539 + $0x110] sm:$0xff]
      %v1575 = vld [vmem:[%s1539 + $0x118] sm:$0xff]
      %v1576 = vld [vmem:[%s1539 + $0x120] sm:$0xff]
      %v1577 = vld [vmem:[%s1539 + $0x128] sm:$0xff]
      %v1578 = vld [vmem:[%s1539 + $0x130] sm:$0xff]
      %v1579 = vld [vmem:[%s1539 + $0x138] sm:$0xff]
      %v1580 = vld [vmem:[%s1539 + $0x140] sm:$0xff]
      %v1581 = vld [vmem:[%s1539 + $0x148] sm:$0xff]
      %v1582 = vld [vmem:[%s1539 + $0x150] sm:$0xff]
      %v1583 = vld [vmem:[%s1539 + $0x158] sm:$0xff]
      %v1584 = vld [vmem:[%s1539 + $0x160] sm:$0xff]
      %v1585 = vld [vmem:[%s1539 + $0x168] sm:$0xff]
      %v1586 = vld [vmem:[%s1539 + $0x170] sm:$0xff]
      %v1587 = vld [vmem:[%s1539 + $0x178] sm:$0xff]
      %v1588 = vld [vmem:[%s1539 + $0x180] sm:$0xff]
      %v1589 = vld [vmem:[%s1539 + $0x188] sm:$0xff]
      %v1590 = vld [vmem:[%s1539 + $0x190] sm:$0xff]
      %v1591 = vld [vmem:[%s1539 + $0x198] sm:$0xff]
      %v1592 = vld [vmem:[%s1539 + $0x1a0] sm:$0xff]
      %v1593 = vld [vmem:[%s1539 + $0x1a8] sm:$0xff]
      %v1594 = vld [vmem:[%s1539 + $0x1b0] sm:$0xff]
      %v1595 = vld [vmem:[%s1539 + $0x1b8] sm:$0xff]
      %v1596 = vld [vmem:[%s1539 + $0x1c0] sm:$0xff]
      %v1597 = vld [vmem:[%s1539 + $0x1c8] sm:$0xff]
      %v1598 = vld [vmem:[%s1539 + $0x1d0] sm:$0xff]
      %v1599 = vld [vmem:[%s1539 + $0x1d8] sm:$0xff]
      %v1600 = vld [vmem:[%s1539 + $0x1e0] sm:$0xff]
      %v1601 = vld [vmem:[%s1539 + $0x1e8] sm:$0xff]
      %v1602 = vld [vmem:[%s1539 + $0x1f0] sm:$0xff]
      %v1603 = vld [vmem:[%s1539 + $0x1f8] sm:$0xff]
      %v1605 = vshrl.u32 %v1041, 16
      %v1608 = vshrl.u32 %v1042, 16
      %v1676 = vunpack.c.l.b16 %v1540
      %v1677 = vunpack.c.h.b16 %v1540
      %v1678 = vunpack.c.l.b16 %v1541
      %v1679 = vunpack.c.h.b16 %v1541
      %v1680 = vunpack.c.l.b16 %v1542
      %v1681 = vunpack.c.h.b16 %v1542
      %v1682 = vunpack.c.l.b16 %v1543
      %v1683 = vunpack.c.h.b16 %v1543
      %v1684 = vunpack.c.l.b16 %v1544
      %v1685 = vunpack.c.h.b16 %v1544
      %v1686 = vunpack.c.l.b16 %v1545
      %v1687 = vunpack.c.h.b16 %v1545
      %v1688 = vunpack.c.l.b16 %v1546
      %v1689 = vunpack.c.h.b16 %v1546
      %v1690 = vunpack.c.l.b16 %v1547
      %v1691 = vunpack.c.h.b16 %v1547
      %v1692 = vunpack.c.l.b16 %v1548
      %v1693 = vunpack.c.h.b16 %v1548
      %v1694 = vunpack.c.l.b16 %v1549
      %v1695 = vunpack.c.h.b16 %v1549
      %v1696 = vunpack.c.l.b16 %v1550
      %v1697 = vunpack.c.h.b16 %v1550
      %v1698 = vunpack.c.l.b16 %v1551
      %v1699 = vunpack.c.h.b16 %v1551
      %v1700 = vunpack.c.l.b16 %v1552
      %v1701 = vunpack.c.h.b16 %v1552
      %v1702 = vunpack.c.l.b16 %v1553
      %v1703 = vunpack.c.h.b16 %v1553
      %v1704 = vunpack.c.l.b16 %v1554
      %v1705 = vunpack.c.h.b16 %v1554
      %v1706 = vunpack.c.l.b16 %v1555
      %v1707 = vunpack.c.h.b16 %v1555
      %v1708 = vunpack.c.l.b16 %v1556
      %v1709 = vunpack.c.h.b16 %v1556
      %v1710 = vunpack.c.l.b16 %v1557
      %v1711 = vunpack.c.h.b16 %v1557
      %v1712 = vunpack.c.l.b16 %v1558
      %v1713 = vunpack.c.h.b16 %v1558
      %v1714 = vunpack.c.l.b16 %v1559
      %v1715 = vunpack.c.h.b16 %v1559
      %v1716 = vunpack.c.l.b16 %v1560
      %v1717 = vunpack.c.h.b16 %v1560
      %v1718 = vunpack.c.l.b16 %v1561
      %v1719 = vunpack.c.h.b16 %v1561
      %v1720 = vunpack.c.l.b16 %v1562
      %v1721 = vunpack.c.h.b16 %v1562
      %v1722 = vunpack.c.l.b16 %v1563
      %v1723 = vunpack.c.h.b16 %v1563
      %v1724 = vunpack.c.l.b16 %v1564
      %v1725 = vunpack.c.h.b16 %v1564
      %v1726 = vunpack.c.l.b16 %v1565
      %v1727 = vunpack.c.h.b16 %v1565
      %v1728 = vunpack.c.l.b16 %v1566
      %v1729 = vunpack.c.h.b16 %v1566
      %v1730 = vunpack.c.l.b16 %v1567
      %v1731 = vunpack.c.h.b16 %v1567
      %v1732 = vunpack.c.l.b16 %v1568
      %v1733 = vunpack.c.h.b16 %v1568
      %v1734 = vunpack.c.l.b16 %v1569
      %v1735 = vunpack.c.h.b16 %v1569
      %v1736 = vunpack.c.l.b16 %v1570
      %v1737 = vunpack.c.h.b16 %v1570
      %v1738 = vunpack.c.l.b16 %v1571
      %v1739 = vunpack.c.h.b16 %v1571
      %v1740 = vunpack.c.l.b16 %v1572
      %v1741 = vunpack.c.h.b16 %v1572
      %v1742 = vunpack.c.l.b16 %v1573
      %v1743 = vunpack.c.h.b16 %v1573
      %v1744 = vunpack.c.l.b16 %v1574
      %v1745 = vunpack.c.h.b16 %v1574
      %v1746 = vunpack.c.l.b16 %v1575
      %v1747 = vunpack.c.h.b16 %v1575
      %v1748 = vunpack.c.l.b16 %v1576
      %v1749 = vunpack.c.h.b16 %v1576
      %v1750 = vunpack.c.l.b16 %v1577
      %v1751 = vunpack.c.h.b16 %v1577
      %v1752 = vunpack.c.l.b16 %v1578
      %v1753 = vunpack.c.h.b16 %v1578
      %v1754 = vunpack.c.l.b16 %v1579
      %v1755 = vunpack.c.h.b16 %v1579
      %v1756 = vunpack.c.l.b16 %v1580
      %v1757 = vunpack.c.h.b16 %v1580
      %v1758 = vunpack.c.l.b16 %v1581
      %v1759 = vunpack.c.h.b16 %v1581
      %v1760 = vunpack.c.l.b16 %v1582
      %v1761 = vunpack.c.h.b16 %v1582
      %v1762 = vunpack.c.l.b16 %v1583
      %v1763 = vunpack.c.h.b16 %v1583
      %v1764 = vunpack.c.l.b16 %v1584
      %v1765 = vunpack.c.h.b16 %v1584
      %v1766 = vunpack.c.l.b16 %v1585
      %v1767 = vunpack.c.h.b16 %v1585
      %v1768 = vunpack.c.l.b16 %v1586
      %v1769 = vunpack.c.h.b16 %v1586
      %v1770 = vunpack.c.l.b16 %v1587
      %v1771 = vunpack.c.h.b16 %v1587
      %v1772 = vunpack.c.l.b16 %v1588
      %v1773 = vunpack.c.h.b16 %v1588
      %v1774 = vunpack.c.l.b16 %v1589
      %v1775 = vunpack.c.h.b16 %v1589
      %v1776 = vunpack.c.l.b16 %v1590
      %v1777 = vunpack.c.h.b16 %v1590
      %v1778 = vunpack.c.l.b16 %v1591
      %v1779 = vunpack.c.h.b16 %v1591
      %v1780 = vunpack.c.l.b16 %v1592
      %v1781 = vunpack.c.h.b16 %v1592
      %v1782 = vunpack.c.l.b16 %v1593
      %v1783 = vunpack.c.h.b16 %v1593
      %v1784 = vunpack.c.l.b16 %v1594
      %v1785 = vunpack.c.h.b16 %v1594
      %v1786 = vunpack.c.l.b16 %v1595
      %v1787 = vunpack.c.h.b16 %v1595
      %v1788 = vunpack.c.l.b16 %v1596
      %v1789 = vunpack.c.h.b16 %v1596
      %v1790 = vunpack.c.l.b16 %v1597
      %v1791 = vunpack.c.h.b16 %v1597
      %v1792 = vunpack.c.l.b16 %v1598
      %v1793 = vunpack.c.h.b16 %v1598
      %v1794 = vunpack.c.l.b16 %v1599
      %v1795 = vunpack.c.h.b16 %v1599
      %v1796 = vunpack.c.l.b16 %v1600
      %v1797 = vunpack.c.h.b16 %v1600
      %v1798 = vunpack.c.l.b16 %v1601
      %v1799 = vunpack.c.h.b16 %v1601
      %v1800 = vunpack.c.l.b16 %v1602
      %v1801 = vunpack.c.h.b16 %v1602
      %v1802 = vunpack.c.l.b16 %v1603
      %v1803 = vunpack.c.h.b16 %v1603
      %v1804 = vpack.c.b16 %v1680, %v1676
      %v1805 = vpack.c.b16 %v1681, %v1677
      %v1806 = vpack.c.b16 %v1682, %v1678
      %v1807 = vpack.c.b16 %v1683, %v1679
      %v1808 = vpack.c.b16 %v1688, %v1684
      %v1809 = vpack.c.b16 %v1689, %v1685
      %v1810 = vpack.c.b16 %v1690, %v1686
      %v1811 = vpack.c.b16 %v1691, %v1687
      %v1812 = vpack.c.b16 %v1696, %v1692
      %v1813 = vpack.c.b16 %v1697, %v1693
      %v1814 = vpack.c.b16 %v1698, %v1694
      %v1815 = vpack.c.b16 %v1699, %v1695
      %v1816 = vpack.c.b16 %v1704, %v1700
      %v1817 = vpack.c.b16 %v1705, %v1701
      %v1818 = vpack.c.b16 %v1706, %v1702
      %v1819 = vpack.c.b16 %v1707, %v1703
      %v1820 = vpack.c.b16 %v1712, %v1708
      %v1821 = vpack.c.b16 %v1713, %v1709
      %v1822 = vpack.c.b16 %v1714, %v1710
      %v1823 = vpack.c.b16 %v1715, %v1711
      %v1824 = vpack.c.b16 %v1720, %v1716
      %v1825 = vpack.c.b16 %v1721, %v1717
      %v1826 = vpack.c.b16 %v1722, %v1718
      %v1827 = vpack.c.b16 %v1723, %v1719
      %v1828 = vpack.c.b16 %v1728, %v1724
      %v1829 = vpack.c.b16 %v1729, %v1725
      %v1830 = vpack.c.b16 %v1730, %v1726
      %v1831 = vpack.c.b16 %v1731, %v1727
      %v1832 = vpack.c.b16 %v1736, %v1732
      %v1833 = vpack.c.b16 %v1737, %v1733
      %v1834 = vpack.c.b16 %v1738, %v1734
      %v1835 = vpack.c.b16 %v1739, %v1735
      %v1836 = vpack.c.b16 %v1744, %v1740
      %v1837 = vpack.c.b16 %v1745, %v1741
      %v1838 = vpack.c.b16 %v1746, %v1742
      %v1839 = vpack.c.b16 %v1747, %v1743
      %v1840 = vpack.c.b16 %v1752, %v1748
      %v1841 = vpack.c.b16 %v1753, %v1749
      %v1842 = vpack.c.b16 %v1754, %v1750
      %v1843 = vpack.c.b16 %v1755, %v1751
      %v1844 = vpack.c.b16 %v1760, %v1756
      %v1845 = vpack.c.b16 %v1761, %v1757
      %v1846 = vpack.c.b16 %v1762, %v1758
      %v1847 = vpack.c.b16 %v1763, %v1759
      %v1848 = vpack.c.b16 %v1768, %v1764
      %v1849 = vpack.c.b16 %v1769, %v1765
      %v1850 = vpack.c.b16 %v1770, %v1766
      %v1851 = vpack.c.b16 %v1771, %v1767
      %v1852 = vpack.c.b16 %v1776, %v1772
      %v1853 = vpack.c.b16 %v1777, %v1773
      %v1854 = vpack.c.b16 %v1778, %v1774
      %v1855 = vpack.c.b16 %v1779, %v1775
      %v1856 = vpack.c.b16 %v1784, %v1780
      %v1857 = vpack.c.b16 %v1785, %v1781
      %v1858 = vpack.c.b16 %v1786, %v1782
      %v1859 = vpack.c.b16 %v1787, %v1783
      %v1860 = vpack.c.b16 %v1792, %v1788
      %v1861 = vpack.c.b16 %v1793, %v1789
      %v1862 = vpack.c.b16 %v1794, %v1790
      %v1863 = vpack.c.b16 %v1795, %v1791
      %v1864 = vpack.c.b16 %v1800, %v1796
      %v1865 = vpack.c.b16 %v1801, %v1797
      %v1866 = vpack.c.b16 %v1802, %v1798
      %v1867 = vpack.c.b16 %v1803, %v1799
      %1932 = vmatprep.subr.bf16.mxu0 %v1833
      %1933 = vmatpush1.bf16.msra.mxu0 %v1832
      %1934 = vmatprep.subr.bf16.mxu0 %v1829
      %1935 = vmatpush1.bf16.msra.mxu0 %v1828
      %1936 = vmatprep.subr.bf16.mxu0 %v1825
      %1937 = vmatpush1.bf16.msra.mxu0 %v1824
      %1938 = vmatprep.subr.bf16.mxu0 %v1821
      %1939 = vmatpush1.bf16.msra.mxu0 %v1820
      %1940 = vmatprep.subr.bf16.mxu0 %v1817
      %1941 = vmatpush1.bf16.msra.mxu0 %v1816
      %1942 = vmatprep.subr.bf16.mxu0 %v1813
      %1943 = vmatpush1.bf16.msra.mxu0 %v1812
      %1944 = vmatprep.subr.bf16.mxu0 %v1809
      %1945 = vmatpush1.bf16.msra.mxu0 %v1808
      %1946 = vmatprep.subr.bf16.mxu0 %v1805
      %1947 = vmatpush1.bf16.msra.mxu0 %v1804
      %1948 = vmatprep.subr.bf16.mxu0 %v1865
      %1949 = vmatpush2.bf16.msra.mxu0 %v1864
      %1950 = vmatprep.subr.bf16.mxu0 %v1861
      %1951 = vmatpush2.bf16.msra.mxu0 %v1860
      %1952 = vmatprep.subr.bf16.mxu0 %v1857
      %1953 = vmatpush2.bf16.msra.mxu0 %v1856
      %1954 = vmatprep.subr.bf16.mxu0 %v1853
      %1955 = vmatpush2.bf16.msra.mxu0 %v1852
      %1956 = vmatprep.subr.bf16.mxu0 %v1849
      %1957 = vmatpush2.bf16.msra.mxu0 %v1848
      %1958 = vmatprep.subr.bf16.mxu0 %v1845
      %1959 = vmatpush2.bf16.msra.mxu0 %v1844
      %1960 = vmatprep.subr.bf16.mxu0 %v1841
      %1961 = vmatpush2.bf16.msra.mxu0 %v1840
      %1962 = vmatprep.subr.bf16.mxu0 %v1837
      %1963 = vmatpush2.bf16.msra.mxu0 %v1836
      %1964 = vmatprep.mubr.bf16.mxu0 %v1608
      %1965 = vmatmul.mubr.bf16.gmra.mxu0 %v1605
      %v1966 = vpop.f32.mrf.mxu0
      %v1967 = vadd.f32 0.0, %v1966
      %v1968 = vpop.f32.mrf.mxu0
      %v1969 = vadd.f32 0.0, %v1968
      %v1970 = vpop.f32.mrf.mxu0
      %v1971 = vpop.f32.mrf.mxu0
      %1972 = vdwg.mxu0
      %1973 = vmatprep.subr.bf16.mxu0 %v1835
      %1974 = vmatpush1.bf16.msra.mxu0 %v1834
      %1975 = vmatprep.subr.bf16.mxu0 %v1831
      %1976 = vmatpush1.bf16.msra.mxu0 %v1830
      %1977 = vmatprep.subr.bf16.mxu0 %v1827
      %1978 = vmatpush1.bf16.msra.mxu0 %v1826
      %1979 = vmatprep.subr.bf16.mxu0 %v1823
      %1980 = vmatpush1.bf16.msra.mxu0 %v1822
      %1981 = vmatprep.subr.bf16.mxu0 %v1819
      %1982 = vmatpush1.bf16.msra.mxu0 %v1818
      %1983 = vmatprep.subr.bf16.mxu0 %v1815
      %1984 = vmatpush1.bf16.msra.mxu0 %v1814
      %1985 = vmatprep.subr.bf16.mxu0 %v1811
      %1986 = vmatpush1.bf16.msra.mxu0 %v1810
      %1987 = vmatprep.subr.bf16.mxu0 %v1807
      %1988 = vmatpush1.bf16.msra.mxu0 %v1806
      %1989 = vmatprep.subr.bf16.mxu0 %v1867
      %1990 = vmatpush2.bf16.msra.mxu0 %v1866
      %1991 = vmatprep.subr.bf16.mxu0 %v1863
      %1992 = vmatpush2.bf16.msra.mxu0 %v1862
      %1993 = vmatprep.subr.bf16.mxu0 %v1859
      %1994 = vmatpush2.bf16.msra.mxu0 %v1858
      %1995 = vmatprep.subr.bf16.mxu0 %v1855
      %1996 = vmatpush2.bf16.msra.mxu0 %v1854
      %1997 = vmatprep.subr.bf16.mxu0 %v1851
      %1998 = vmatpush2.bf16.msra.mxu0 %v1850
      %1999 = vmatprep.subr.bf16.mxu0 %v1847
      %2000 = vmatpush2.bf16.msra.mxu0 %v1846
      %2001 = vmatprep.subr.bf16.mxu0 %v1843
      %2002 = vmatpush2.bf16.msra.mxu0 %v1842
      %2003 = vmatprep.subr.bf16.mxu0 %v1839
      %2004 = vmatpush2.bf16.msra.mxu0 %v1838
      %2005 = vmatprep.mubr.bf16.mxu0 %v1608
      %2006 = vmatmul.mubr.bf16.gmra.mxu0 %v1605
      %v2007 = vpop.f32.mrf.mxu0
      %v2008 = vadd.f32 0.0, %v2007
      %v2009 = vpop.f32.mrf.mxu0
      %v2010 = vadd.f32 0.0, %v2009
      %v2011 = vpop.f32.mrf.mxu0
      %v2012 = vpop.f32.mrf.mxu0
      %2013 = vdwg.mxu0
      %v2018 = vcombine.low %v1967, %v1969
      %v2019 = vcombine.low %v2008, %v2010
      %v2021 = vunpack.c.l.s4 1966171168
      %v2022 = vunpack.c.0.s8 %v2021
      %v2023 = vlaneseq
      %v2024 = vshrl.u32 %v2023, 7
      %v2025 = vsub.s32 %v2022, %v2024
      %v2026 = vrot.slane %v2018, %v2025
      %v2028 = vunpack.c.l.s4 1966171168
      %v2029 = vunpack.c.0.s8 %v2028
      %v2030 = vlaneseq
      %v2031 = vshrl.u32 %v2030, 7
      %v2032 = vsub.s32 %v2029, %v2031
      %v2033 = vrot.slane %v2019, %v2032
      %v2034 = vcombine.low %v2026, %v2033
      %v2036 = vunpack.c.l.s4 1966171168
      %v2037 = vunpack.c.0.s8 %v2036
      %v2038 = vlaneseq
      %v2039 = vshrl.u32 %v2038, 7
      %v2040 = vsub.s32 %v2037, %v2039
      %v2041 = vrot.slane %v2034, %v2040
      %v2043 = vadd.f32 %v1538, %v2041
      %s2044 = scalar_lea.vmem %s7, 1024
      %v2045 = vld [vmem:[%s2044] sm:$0xff]
      %v2046 = vld [vmem:[%s2044 + $0x8] sm:$0xff]
      %v2047 = vld [vmem:[%s2044 + $0x10] sm:$0xff]
      %v2048 = vld [vmem:[%s2044 + $0x18] sm:$0xff]
      %v2049 = vld [vmem:[%s2044 + $0x20] sm:$0xff]
      %v2050 = vld [vmem:[%s2044 + $0x28] sm:$0xff]
      %v2051 = vld [vmem:[%s2044 + $0x30] sm:$0xff]
      %v2052 = vld [vmem:[%s2044 + $0x38] sm:$0xff]
      %v2053 = vld [vmem:[%s2044 + $0x40] sm:$0xff]
      %v2054 = vld [vmem:[%s2044 + $0x48] sm:$0xff]
      %v2055 = vld [vmem:[%s2044 + $0x50] sm:$0xff]
      %v2056 = vld [vmem:[%s2044 + $0x58] sm:$0xff]
      %v2057 = vld [vmem:[%s2044 + $0x60] sm:$0xff]
      %v2058 = vld [vmem:[%s2044 + $0x68] sm:$0xff]
      %v2059 = vld [vmem:[%s2044 + $0x70] sm:$0xff]
      %v2060 = vld [vmem:[%s2044 + $0x78] sm:$0xff]
      %v2061 = vld [vmem:[%s2044 + $0x80] sm:$0xff]
      %v2062 = vld [vmem:[%s2044 + $0x88] sm:$0xff]
      %v2063 = vld [vmem:[%s2044 + $0x90] sm:$0xff]
      %v2064 = vld [vmem:[%s2044 + $0x98] sm:$0xff]
      %v2065 = vld [vmem:[%s2044 + $0xa0] sm:$0xff]
      %v2066 = vld [vmem:[%s2044 + $0xa8] sm:$0xff]
      %v2067 = vld [vmem:[%s2044 + $0xb0] sm:$0xff]
      %v2068 = vld [vmem:[%s2044 + $0xb8] sm:$0xff]
      %v2069 = vld [vmem:[%s2044 + $0xc0] sm:$0xff]
      %v2070 = vld [vmem:[%s2044 + $0xc8] sm:$0xff]
      %v2071 = vld [vmem:[%s2044 + $0xd0] sm:$0xff]
      %v2072 = vld [vmem:[%s2044 + $0xd8] sm:$0xff]
      %v2073 = vld [vmem:[%s2044 + $0xe0] sm:$0xff]
      %v2074 = vld [vmem:[%s2044 + $0xe8] sm:$0xff]
      %v2075 = vld [vmem:[%s2044 + $0xf0] sm:$0xff]
      %v2076 = vld [vmem:[%s2044 + $0xf8] sm:$0xff]
      %v2077 = vld [vmem:[%s2044 + $0x100] sm:$0xff]
      %v2078 = vld [vmem:[%s2044 + $0x108] sm:$0xff]
      %v2079 = vld [vmem:[%s2044 + $0x110] sm:$0xff]
      %v2080 = vld [vmem:[%s2044 + $0x118] sm:$0xff]
      %v2081 = vld [vmem:[%s2044 + $0x120] sm:$0xff]
      %v2082 = vld [vmem:[%s2044 + $0x128] sm:$0xff]
      %v2083 = vld [vmem:[%s2044 + $0x130] sm:$0xff]
      %v2084 = vld [vmem:[%s2044 + $0x138] sm:$0xff]
      %v2085 = vld [vmem:[%s2044 + $0x140] sm:$0xff]
      %v2086 = vld [vmem:[%s2044 + $0x148] sm:$0xff]
      %v2087 = vld [vmem:[%s2044 + $0x150] sm:$0xff]
      %v2088 = vld [vmem:[%s2044 + $0x158] sm:$0xff]
      %v2089 = vld [vmem:[%s2044 + $0x160] sm:$0xff]
      %v2090 = vld [vmem:[%s2044 + $0x168] sm:$0xff]
      %v2091 = vld [vmem:[%s2044 + $0x170] sm:$0xff]
      %v2092 = vld [vmem:[%s2044 + $0x178] sm:$0xff]
      %v2093 = vld [vmem:[%s2044 + $0x180] sm:$0xff]
      %v2094 = vld [vmem:[%s2044 + $0x188] sm:$0xff]
      %v2095 = vld [vmem:[%s2044 + $0x190] sm:$0xff]
      %v2096 = vld [vmem:[%s2044 + $0x198] sm:$0xff]
      %v2097 = vld [vmem:[%s2044 + $0x1a0] sm:$0xff]
      %v2098 = vld [vmem:[%s2044 + $0x1a8] sm:$0xff]
      %v2099 = vld [vmem:[%s2044 + $0x1b0] sm:$0xff]
      %v2100 = vld [vmem:[%s2044 + $0x1b8] sm:$0xff]
      %v2101 = vld [vmem:[%s2044 + $0x1c0] sm:$0xff]
      %v2102 = vld [vmem:[%s2044 + $0x1c8] sm:$0xff]
      %v2103 = vld [vmem:[%s2044 + $0x1d0] sm:$0xff]
      %v2104 = vld [vmem:[%s2044 + $0x1d8] sm:$0xff]
      %v2105 = vld [vmem:[%s2044 + $0x1e0] sm:$0xff]
      %v2106 = vld [vmem:[%s2044 + $0x1e8] sm:$0xff]
      %v2107 = vld [vmem:[%s2044 + $0x1f0] sm:$0xff]
      %v2108 = vld [vmem:[%s2044 + $0x1f8] sm:$0xff]
      %v2111 = vrot.slane %v1041, 1
      %v2112 = vrot.slane %v1042, 1
      %v2179 = vunpack.c.l.b16 %v2045
      %v2180 = vunpack.c.h.b16 %v2045
      %v2181 = vunpack.c.l.b16 %v2046
      %v2182 = vunpack.c.h.b16 %v2046
      %v2183 = vunpack.c.l.b16 %v2047
      %v2184 = vunpack.c.h.b16 %v2047
      %v2185 = vunpack.c.l.b16 %v2048
      %v2186 = vunpack.c.h.b16 %v2048
      %v2187 = vunpack.c.l.b16 %v2049
      %v2188 = vunpack.c.h.b16 %v2049
      %v2189 = vunpack.c.l.b16 %v2050
      %v2190 = vunpack.c.h.b16 %v2050
      %v2191 = vunpack.c.l.b16 %v2051
      %v2192 = vunpack.c.h.b16 %v2051
      %v2193 = vunpack.c.l.b16 %v2052
      %v2194 = vunpack.c.h.b16 %v2052
      %v2195 = vunpack.c.l.b16 %v2053
      %v2196 = vunpack.c.h.b16 %v2053
      %v2197 = vunpack.c.l.b16 %v2054
      %v2198 = vunpack.c.h.b16 %v2054
      %v2199 = vunpack.c.l.b16 %v2055
      %v2200 = vunpack.c.h.b16 %v2055
      %v2201 = vunpack.c.l.b16 %v2056
      %v2202 = vunpack.c.h.b16 %v2056
      %v2203 = vunpack.c.l.b16 %v2057
      %v2204 = vunpack.c.h.b16 %v2057
      %v2205 = vunpack.c.l.b16 %v2058
      %v2206 = vunpack.c.h.b16 %v2058
      %v2207 = vunpack.c.l.b16 %v2059
      %v2208 = vunpack.c.h.b16 %v2059
      %v2209 = vunpack.c.l.b16 %v2060
      %v2210 = vunpack.c.h.b16 %v2060
      %v2211 = vunpack.c.l.b16 %v2061
      %v2212 = vunpack.c.h.b16 %v2061
      %v2213 = vunpack.c.l.b16 %v2062
      %v2214 = vunpack.c.h.b16 %v2062
      %v2215 = vunpack.c.l.b16 %v2063
      %v2216 = vunpack.c.h.b16 %v2063
      %v2217 = vunpack.c.l.b16 %v2064
      %v2218 = vunpack.c.h.b16 %v2064
      %v2219 = vunpack.c.l.b16 %v2065
      %v2220 = vunpack.c.h.b16 %v2065
      %v2221 = vunpack.c.l.b16 %v2066
      %v2222 = vunpack.c.h.b16 %v2066
      %v2223 = vunpack.c.l.b16 %v2067
      %v2224 = vunpack.c.h.b16 %v2067
      %v2225 = vunpack.c.l.b16 %v2068
      %v2226 = vunpack.c.h.b16 %v2068
      %v2227 = vunpack.c.l.b16 %v2069
      %v2228 = vunpack.c.h.b16 %v2069
      %v2229 = vunpack.c.l.b16 %v2070
      %v2230 = vunpack.c.h.b16 %v2070
      %v2231 = vunpack.c.l.b16 %v2071
      %v2232 = vunpack.c.h.b16 %v2071
      %v2233 = vunpack.c.l.b16 %v2072
      %v2234 = vunpack.c.h.b16 %v2072
      %v2235 = vunpack.c.l.b16 %v2073
      %v2236 = vunpack.c.h.b16 %v2073
      %v2237 = vunpack.c.l.b16 %v2074
      %v2238 = vunpack.c.h.b16 %v2074
      %v2239 = vunpack.c.l.b16 %v2075
      %v2240 = vunpack.c.h.b16 %v2075
      %v2241 = vunpack.c.l.b16 %v2076
      %v2242 = vunpack.c.h.b16 %v2076
      %v2243 = vunpack.c.l.b16 %v2077
      %v2244 = vunpack.c.h.b16 %v2077
      %v2245 = vunpack.c.l.b16 %v2078
      %v2246 = vunpack.c.h.b16 %v2078
      %v2247 = vunpack.c.l.b16 %v2079
      %v2248 = vunpack.c.h.b16 %v2079
      %v2249 = vunpack.c.l.b16 %v2080
      %v2250 = vunpack.c.h.b16 %v2080
      %v2251 = vunpack.c.l.b16 %v2081
      %v2252 = vunpack.c.h.b16 %v2081
      %v2253 = vunpack.c.l.b16 %v2082
      %v2254 = vunpack.c.h.b16 %v2082
      %v2255 = vunpack.c.l.b16 %v2083
      %v2256 = vunpack.c.h.b16 %v2083
      %v2257 = vunpack.c.l.b16 %v2084
      %v2258 = vunpack.c.h.b16 %v2084
      %v2259 = vunpack.c.l.b16 %v2085
      %v2260 = vunpack.c.h.b16 %v2085
      %v2261 = vunpack.c.l.b16 %v2086
      %v2262 = vunpack.c.h.b16 %v2086
      %v2263 = vunpack.c.l.b16 %v2087
      %v2264 = vunpack.c.h.b16 %v2087
      %v2265 = vunpack.c.l.b16 %v2088
      %v2266 = vunpack.c.h.b16 %v2088
      %v2267 = vunpack.c.l.b16 %v2089
      %v2268 = vunpack.c.h.b16 %v2089
      %v2269 = vunpack.c.l.b16 %v2090
      %v2270 = vunpack.c.h.b16 %v2090
      %v2271 = vunpack.c.l.b16 %v2091
      %v2272 = vunpack.c.h.b16 %v2091
      %v2273 = vunpack.c.l.b16 %v2092
      %v2274 = vunpack.c.h.b16 %v2092
      %v2275 = vunpack.c.l.b16 %v2093
      %v2276 = vunpack.c.h.b16 %v2093
      %v2277 = vunpack.c.l.b16 %v2094
      %v2278 = vunpack.c.h.b16 %v2094
      %v2279 = vunpack.c.l.b16 %v2095
      %v2280 = vunpack.c.h.b16 %v2095
      %v2281 = vunpack.c.l.b16 %v2096
      %v2282 = vunpack.c.h.b16 %v2096
      %v2283 = vunpack.c.l.b16 %v2097
      %v2284 = vunpack.c.h.b16 %v2097
      %v2285 = vunpack.c.l.b16 %v2098
      %v2286 = vunpack.c.h.b16 %v2098
      %v2287 = vunpack.c.l.b16 %v2099
      %v2288 = vunpack.c.h.b16 %v2099
      %v2289 = vunpack.c.l.b16 %v2100
      %v2290 = vunpack.c.h.b16 %v2100
      %v2291 = vunpack.c.l.b16 %v2101
      %v2292 = vunpack.c.h.b16 %v2101
      %v2293 = vunpack.c.l.b16 %v2102
      %v2294 = vunpack.c.h.b16 %v2102
      %v2295 = vunpack.c.l.b16 %v2103
      %v2296 = vunpack.c.h.b16 %v2103
      %v2297 = vunpack.c.l.b16 %v2104
      %v2298 = vunpack.c.h.b16 %v2104
      %v2299 = vunpack.c.l.b16 %v2105
      %v2300 = vunpack.c.h.b16 %v2105
      %v2301 = vunpack.c.l.b16 %v2106
      %v2302 = vunpack.c.h.b16 %v2106
      %v2303 = vunpack.c.l.b16 %v2107
      %v2304 = vunpack.c.h.b16 %v2107
      %v2305 = vunpack.c.l.b16 %v2108
      %v2306 = vunpack.c.h.b16 %v2108
      %v2307 = vpack.c.b16 %v2183, %v2179
      %v2308 = vpack.c.b16 %v2184, %v2180
      %v2309 = vpack.c.b16 %v2185, %v2181
      %v2310 = vpack.c.b16 %v2186, %v2182
      %v2311 = vpack.c.b16 %v2191, %v2187
      %v2312 = vpack.c.b16 %v2192, %v2188
      %v2313 = vpack.c.b16 %v2193, %v2189
      %v2314 = vpack.c.b16 %v2194, %v2190
      %v2315 = vpack.c.b16 %v2199, %v2195
      %v2316 = vpack.c.b16 %v2200, %v2196
      %v2317 = vpack.c.b16 %v2201, %v2197
      %v2318 = vpack.c.b16 %v2202, %v2198
      %v2319 = vpack.c.b16 %v2207, %v2203
      %v2320 = vpack.c.b16 %v2208, %v2204
      %v2321 = vpack.c.b16 %v2209, %v2205
      %v2322 = vpack.c.b16 %v2210, %v2206
      %v2323 = vpack.c.b16 %v2215, %v2211
      %v2324 = vpack.c.b16 %v2216, %v2212
      %v2325 = vpack.c.b16 %v2217, %v2213
      %v2326 = vpack.c.b16 %v2218, %v2214
      %v2327 = vpack.c.b16 %v2223, %v2219
      %v2328 = vpack.c.b16 %v2224, %v2220
      %v2329 = vpack.c.b16 %v2225, %v2221
      %v2330 = vpack.c.b16 %v2226, %v2222
      %v2331 = vpack.c.b16 %v2231, %v2227
      %v2332 = vpack.c.b16 %v2232, %v2228
      %v2333 = vpack.c.b16 %v2233, %v2229
      %v2334 = vpack.c.b16 %v2234, %v2230
      %v2335 = vpack.c.b16 %v2239, %v2235
      %v2336 = vpack.c.b16 %v2240, %v2236
      %v2337 = vpack.c.b16 %v2241, %v2237
      %v2338 = vpack.c.b16 %v2242, %v2238
      %v2339 = vpack.c.b16 %v2247, %v2243
      %v2340 = vpack.c.b16 %v2248, %v2244
      %v2341 = vpack.c.b16 %v2249, %v2245
      %v2342 = vpack.c.b16 %v2250, %v2246
      %v2343 = vpack.c.b16 %v2255, %v2251
      %v2344 = vpack.c.b16 %v2256, %v2252
      %v2345 = vpack.c.b16 %v2257, %v2253
      %v2346 = vpack.c.b16 %v2258, %v2254
      %v2347 = vpack.c.b16 %v2263, %v2259
      %v2348 = vpack.c.b16 %v2264, %v2260
      %v2349 = vpack.c.b16 %v2265, %v2261
      %v2350 = vpack.c.b16 %v2266, %v2262
      %v2351 = vpack.c.b16 %v2271, %v2267
      %v2352 = vpack.c.b16 %v2272, %v2268
      %v2353 = vpack.c.b16 %v2273, %v2269
      %v2354 = vpack.c.b16 %v2274, %v2270
      %v2355 = vpack.c.b16 %v2279, %v2275
      %v2356 = vpack.c.b16 %v2280, %v2276
      %v2357 = vpack.c.b16 %v2281, %v2277
      %v2358 = vpack.c.b16 %v2282, %v2278
      %v2359 = vpack.c.b16 %v2287, %v2283
      %v2360 = vpack.c.b16 %v2288, %v2284
      %v2361 = vpack.c.b16 %v2289, %v2285
      %v2362 = vpack.c.b16 %v2290, %v2286
      %v2363 = vpack.c.b16 %v2295, %v2291
      %v2364 = vpack.c.b16 %v2296, %v2292
      %v2365 = vpack.c.b16 %v2297, %v2293
      %v2366 = vpack.c.b16 %v2298, %v2294
      %v2367 = vpack.c.b16 %v2303, %v2299
      %v2368 = vpack.c.b16 %v2304, %v2300
      %v2369 = vpack.c.b16 %v2305, %v2301
      %v2370 = vpack.c.b16 %v2306, %v2302
      %2435 = vmatprep.subr.bf16.mxu0 %v2336
      %2436 = vmatpush1.bf16.msra.mxu0 %v2335
      %2437 = vmatprep.subr.bf16.mxu0 %v2332
      %2438 = vmatpush1.bf16.msra.mxu0 %v2331
      %2439 = vmatprep.subr.bf16.mxu0 %v2328
      %2440 = vmatpush1.bf16.msra.mxu0 %v2327
      %2441 = vmatprep.subr.bf16.mxu0 %v2324
      %2442 = vmatpush1.bf16.msra.mxu0 %v2323
      %2443 = vmatprep.subr.bf16.mxu0 %v2320
      %2444 = vmatpush1.bf16.msra.mxu0 %v2319
      %2445 = vmatprep.subr.bf16.mxu0 %v2316
      %2446 = vmatpush1.bf16.msra.mxu0 %v2315
      %2447 = vmatprep.subr.bf16.mxu0 %v2312
      %2448 = vmatpush1.bf16.msra.mxu0 %v2311
      %2449 = vmatprep.subr.bf16.mxu0 %v2308
      %2450 = vmatpush1.bf16.msra.mxu0 %v2307
      %2451 = vmatprep.subr.bf16.mxu0 %v2368
      %2452 = vmatpush2.bf16.msra.mxu0 %v2367
      %2453 = vmatprep.subr.bf16.mxu0 %v2364
      %2454 = vmatpush2.bf16.msra.mxu0 %v2363
      %2455 = vmatprep.subr.bf16.mxu0 %v2360
      %2456 = vmatpush2.bf16.msra.mxu0 %v2359
      %2457 = vmatprep.subr.bf16.mxu0 %v2356
      %2458 = vmatpush2.bf16.msra.mxu0 %v2355
      %2459 = vmatprep.subr.bf16.mxu0 %v2352
      %2460 = vmatpush2.bf16.msra.mxu0 %v2351
      %2461 = vmatprep.subr.bf16.mxu0 %v2348
      %2462 = vmatpush2.bf16.msra.mxu0 %v2347
      %2463 = vmatprep.subr.bf16.mxu0 %v2344
      %2464 = vmatpush2.bf16.msra.mxu0 %v2343
      %2465 = vmatprep.subr.bf16.mxu0 %v2340
      %2466 = vmatpush2.bf16.msra.mxu0 %v2339
      %2467 = vmatprep.mubr.bf16.mxu0 %v2112
      %2468 = vmatmul.mubr.bf16.gmra.mxu0 %v2111
      %v2469 = vpop.f32.mrf.mxu0
      %v2470 = vadd.f32 0.0, %v2469
      %v2471 = vpop.f32.mrf.mxu0
      %v2472 = vadd.f32 0.0, %v2471
      %v2473 = vpop.f32.mrf.mxu0
      %v2474 = vpop.f32.mrf.mxu0
      %2475 = vdwg.mxu0
      %2476 = vmatprep.subr.bf16.mxu0 %v2338
      %2477 = vmatpush1.bf16.msra.mxu0 %v2337
      %2478 = vmatprep.subr.bf16.mxu0 %v2334
      %2479 = vmatpush1.bf16.msra.mxu0 %v2333
      %2480 = vmatprep.subr.bf16.mxu0 %v2330
      %2481 = vmatpush1.bf16.msra.mxu0 %v2329
      %2482 = vmatprep.subr.bf16.mxu0 %v2326
      %2483 = vmatpush1.bf16.msra.mxu0 %v2325
      %2484 = vmatprep.subr.bf16.mxu0 %v2322
      %2485 = vmatpush1.bf16.msra.mxu0 %v2321
      %2486 = vmatprep.subr.bf16.mxu0 %v2318
      %2487 = vmatpush1.bf16.msra.mxu0 %v2317
      %2488 = vmatprep.subr.bf16.mxu0 %v2314
      %2489 = vmatpush1.bf16.msra.mxu0 %v2313
      %2490 = vmatprep.subr.bf16.mxu0 %v2310
      %2491 = vmatpush1.bf16.msra.mxu0 %v2309
      %2492 = vmatprep.subr.bf16.mxu0 %v2370
      %2493 = vmatpush2.bf16.msra.mxu0 %v2369
      %2494 = vmatprep.subr.bf16.mxu0 %v2366
      %2495 = vmatpush2.bf16.msra.mxu0 %v2365
      %2496 = vmatprep.subr.bf16.mxu0 %v2362
      %2497 = vmatpush2.bf16.msra.mxu0 %v2361
      %2498 = vmatprep.subr.bf16.mxu0 %v2358
      %2499 = vmatpush2.bf16.msra.mxu0 %v2357
      %2500 = vmatprep.subr.bf16.mxu0 %v2354
      %2501 = vmatpush2.bf16.msra.mxu0 %v2353
      %2502 = vmatprep.subr.bf16.mxu0 %v2350
      %2503 = vmatpush2.bf16.msra.mxu0 %v2349
      %2504 = vmatprep.subr.bf16.mxu0 %v2346
      %2505 = vmatpush2.bf16.msra.mxu0 %v2345
      %2506 = vmatprep.subr.bf16.mxu0 %v2342
      %2507 = vmatpush2.bf16.msra.mxu0 %v2341
      %2508 = vmatprep.mubr.bf16.mxu0 %v2112
      %2509 = vmatmul.mubr.bf16.gmra.mxu0 %v2111
      %v2510 = vpop.f32.mrf.mxu0
      %v2511 = vadd.f32 0.0, %v2510
      %v2512 = vpop.f32.mrf.mxu0
      %v2513 = vadd.f32 0.0, %v2512
      %v2514 = vpop.f32.mrf.mxu0
      %v2515 = vpop.f32.mrf.mxu0
      %2516 = vdwg.mxu0
      %v2521 = vcombine.low %v2470, %v2472
      %v2522 = vcombine.low %v2511, %v2513
      %v2524 = vunpack.c.l.s4 1966171168
      %v2525 = vunpack.c.0.s8 %v2524
      %v2526 = vlaneseq
      %v2527 = vshrl.u32 %v2526, 7
      %v2528 = vsub.s32 %v2525, %v2527
      %v2529 = vrot.slane %v2521, %v2528
      %v2531 = vunpack.c.l.s4 1966171168
      %v2532 = vunpack.c.0.s8 %v2531
      %v2533 = vlaneseq
      %v2534 = vshrl.u32 %v2533, 7
      %v2535 = vsub.s32 %v2532, %v2534
      %v2536 = vrot.slane %v2522, %v2535
      %v2537 = vcombine.low %v2529, %v2536
      %v2539 = vunpack.c.l.s4 1966171168
      %v2540 = vunpack.c.0.s8 %v2539
      %v2541 = vlaneseq
      %v2542 = vshrl.u32 %v2541, 7
      %v2543 = vsub.s32 %v2540, %v2542
      %v2544 = vrot.slane %v2537, %v2543
      %v2546 = vadd.f32 %v2043, %v2544
      %s2547 = scalar_lea.vmem %s7, 1536
      %v2548 = vld [vmem:[%s2547] sm:$0xff]
      %v2549 = vld [vmem:[%s2547 + $0x8] sm:$0xff]
      %v2550 = vld [vmem:[%s2547 + $0x10] sm:$0xff]
      %v2551 = vld [vmem:[%s2547 + $0x18] sm:$0xff]
      %v2552 = vld [vmem:[%s2547 + $0x20] sm:$0xff]
      %v2553 = vld [vmem:[%s2547 + $0x28] sm:$0xff]
      %v2554 = vld [vmem:[%s2547 + $0x30] sm:$0xff]
      %v2555 = vld [vmem:[%s2547 + $0x38] sm:$0xff]
      %v2556 = vld [vmem:[%s2547 + $0x40] sm:$0xff]
      %v2557 = vld [vmem:[%s2547 + $0x48] sm:$0xff]
      %v2558 = vld [vmem:[%s2547 + $0x50] sm:$0xff]
      %v2559 = vld [vmem:[%s2547 + $0x58] sm:$0xff]
      %v2560 = vld [vmem:[%s2547 + $0x60] sm:$0xff]
      %v2561 = vld [vmem:[%s2547 + $0x68] sm:$0xff]
      %v2562 = vld [vmem:[%s2547 + $0x70] sm:$0xff]
      %v2563 = vld [vmem:[%s2547 + $0x78] sm:$0xff]
      %v2564 = vld [vmem:[%s2547 + $0x80] sm:$0xff]
      %v2565 = vld [vmem:[%s2547 + $0x88] sm:$0xff]
      %v2566 = vld [vmem:[%s2547 + $0x90] sm:$0xff]
      %v2567 = vld [vmem:[%s2547 + $0x98] sm:$0xff]
      %v2568 = vld [vmem:[%s2547 + $0xa0] sm:$0xff]
      %v2569 = vld [vmem:[%s2547 + $0xa8] sm:$0xff]
      %v2570 = vld [vmem:[%s2547 + $0xb0] sm:$0xff]
      %v2571 = vld [vmem:[%s2547 + $0xb8] sm:$0xff]
      %v2572 = vld [vmem:[%s2547 + $0xc0] sm:$0xff]
      %v2573 = vld [vmem:[%s2547 + $0xc8] sm:$0xff]
      %v2574 = vld [vmem:[%s2547 + $0xd0] sm:$0xff]
      %v2575 = vld [vmem:[%s2547 + $0xd8] sm:$0xff]
      %v2576 = vld [vmem:[%s2547 + $0xe0] sm:$0xff]
      %v2577 = vld [vmem:[%s2547 + $0xe8] sm:$0xff]
      %v2578 = vld [vmem:[%s2547 + $0xf0] sm:$0xff]
      %v2579 = vld [vmem:[%s2547 + $0xf8] sm:$0xff]
      %v2580 = vld [vmem:[%s2547 + $0x100] sm:$0xff]
      %v2581 = vld [vmem:[%s2547 + $0x108] sm:$0xff]
      %v2582 = vld [vmem:[%s2547 + $0x110] sm:$0xff]
      %v2583 = vld [vmem:[%s2547 + $0x118] sm:$0xff]
      %v2584 = vld [vmem:[%s2547 + $0x120] sm:$0xff]
      %v2585 = vld [vmem:[%s2547 + $0x128] sm:$0xff]
      %v2586 = vld [vmem:[%s2547 + $0x130] sm:$0xff]
      %v2587 = vld [vmem:[%s2547 + $0x138] sm:$0xff]
      %v2588 = vld [vmem:[%s2547 + $0x140] sm:$0xff]
      %v2589 = vld [vmem:[%s2547 + $0x148] sm:$0xff]
      %v2590 = vld [vmem:[%s2547 + $0x150] sm:$0xff]
      %v2591 = vld [vmem:[%s2547 + $0x158] sm:$0xff]
      %v2592 = vld [vmem:[%s2547 + $0x160] sm:$0xff]
      %v2593 = vld [vmem:[%s2547 + $0x168] sm:$0xff]
      %v2594 = vld [vmem:[%s2547 + $0x170] sm:$0xff]
      %v2595 = vld [vmem:[%s2547 + $0x178] sm:$0xff]
      %v2596 = vld [vmem:[%s2547 + $0x180] sm:$0xff]
      %v2597 = vld [vmem:[%s2547 + $0x188] sm:$0xff]
      %v2598 = vld [vmem:[%s2547 + $0x190] sm:$0xff]
      %v2599 = vld [vmem:[%s2547 + $0x198] sm:$0xff]
      %v2600 = vld [vmem:[%s2547 + $0x1a0] sm:$0xff]
      %v2601 = vld [vmem:[%s2547 + $0x1a8] sm:$0xff]
      %v2602 = vld [vmem:[%s2547 + $0x1b0] sm:$0xff]
      %v2603 = vld [vmem:[%s2547 + $0x1b8] sm:$0xff]
      %v2604 = vld [vmem:[%s2547 + $0x1c0] sm:$0xff]
      %v2605 = vld [vmem:[%s2547 + $0x1c8] sm:$0xff]
      %v2606 = vld [vmem:[%s2547 + $0x1d0] sm:$0xff]
      %v2607 = vld [vmem:[%s2547 + $0x1d8] sm:$0xff]
      %v2608 = vld [vmem:[%s2547 + $0x1e0] sm:$0xff]
      %v2609 = vld [vmem:[%s2547 + $0x1e8] sm:$0xff]
      %v2610 = vld [vmem:[%s2547 + $0x1f0] sm:$0xff]
      %v2611 = vld [vmem:[%s2547 + $0x1f8] sm:$0xff]
      %v2612 = vrot.slane %v1605, 1
      %v2613 = vrot.slane %v1608, 1
      %v2680 = vunpack.c.l.b16 %v2548
      %v2681 = vunpack.c.h.b16 %v2548
      %v2682 = vunpack.c.l.b16 %v2549
      %v2683 = vunpack.c.h.b16 %v2549
      %v2684 = vunpack.c.l.b16 %v2550
      %v2685 = vunpack.c.h.b16 %v2550
      %v2686 = vunpack.c.l.b16 %v2551
      %v2687 = vunpack.c.h.b16 %v2551
      %v2688 = vunpack.c.l.b16 %v2552
      %v2689 = vunpack.c.h.b16 %v2552
      %v2690 = vunpack.c.l.b16 %v2553
      %v2691 = vunpack.c.h.b16 %v2553
      %v2692 = vunpack.c.l.b16 %v2554
      %v2693 = vunpack.c.h.b16 %v2554
      %v2694 = vunpack.c.l.b16 %v2555
      %v2695 = vunpack.c.h.b16 %v2555
      %v2696 = vunpack.c.l.b16 %v2556
      %v2697 = vunpack.c.h.b16 %v2556
      %v2698 = vunpack.c.l.b16 %v2557
      %v2699 = vunpack.c.h.b16 %v2557
      %v2700 = vunpack.c.l.b16 %v2558
      %v2701 = vunpack.c.h.b16 %v2558
      %v2702 = vunpack.c.l.b16 %v2559
      %v2703 = vunpack.c.h.b16 %v2559
      %v2704 = vunpack.c.l.b16 %v2560
      %v2705 = vunpack.c.h.b16 %v2560
      %v2706 = vunpack.c.l.b16 %v2561
      %v2707 = vunpack.c.h.b16 %v2561
      %v2708 = vunpack.c.l.b16 %v2562
      %v2709 = vunpack.c.h.b16 %v2562
      %v2710 = vunpack.c.l.b16 %v2563
      %v2711 = vunpack.c.h.b16 %v2563
      %v2712 = vunpack.c.l.b16 %v2564
      %v2713 = vunpack.c.h.b16 %v2564
      %v2714 = vunpack.c.l.b16 %v2565
      %v2715 = vunpack.c.h.b16 %v2565
      %v2716 = vunpack.c.l.b16 %v2566
      %v2717 = vunpack.c.h.b16 %v2566
      %v2718 = vunpack.c.l.b16 %v2567
      %v2719 = vunpack.c.h.b16 %v2567
      %v2720 = vunpack.c.l.b16 %v2568
      %v2721 = vunpack.c.h.b16 %v2568
      %v2722 = vunpack.c.l.b16 %v2569
      %v2723 = vunpack.c.h.b16 %v2569
      %v2724 = vunpack.c.l.b16 %v2570
      %v2725 = vunpack.c.h.b16 %v2570
      %v2726 = vunpack.c.l.b16 %v2571
      %v2727 = vunpack.c.h.b16 %v2571
      %v2728 = vunpack.c.l.b16 %v2572
      %v2729 = vunpack.c.h.b16 %v2572
      %v2730 = vunpack.c.l.b16 %v2573
      %v2731 = vunpack.c.h.b16 %v2573
      %v2732 = vunpack.c.l.b16 %v2574
      %v2733 = vunpack.c.h.b16 %v2574
      %v2734 = vunpack.c.l.b16 %v2575
      %v2735 = vunpack.c.h.b16 %v2575
      %v2736 = vunpack.c.l.b16 %v2576
      %v2737 = vunpack.c.h.b16 %v2576
      %v2738 = vunpack.c.l.b16 %v2577
      %v2739 = vunpack.c.h.b16 %v2577
      %v2740 = vunpack.c.l.b16 %v2578
      %v2741 = vunpack.c.h.b16 %v2578
      %v2742 = vunpack.c.l.b16 %v2579
      %v2743 = vunpack.c.h.b16 %v2579
      %v2744 = vunpack.c.l.b16 %v2580
      %v2745 = vunpack.c.h.b16 %v2580
      %v2746 = vunpack.c.l.b16 %v2581
      %v2747 = vunpack.c.h.b16 %v2581
      %v2748 = vunpack.c.l.b16 %v2582
      %v2749 = vunpack.c.h.b16 %v2582
      %v2750 = vunpack.c.l.b16 %v2583
      %v2751 = vunpack.c.h.b16 %v2583
      %v2752 = vunpack.c.l.b16 %v2584
      %v2753 = vunpack.c.h.b16 %v2584
      %v2754 = vunpack.c.l.b16 %v2585
      %v2755 = vunpack.c.h.b16 %v2585
      %v2756 = vunpack.c.l.b16 %v2586
      %v2757 = vunpack.c.h.b16 %v2586
      %v2758 = vunpack.c.l.b16 %v2587
      %v2759 = vunpack.c.h.b16 %v2587
      %v2760 = vunpack.c.l.b16 %v2588
      %v2761 = vunpack.c.h.b16 %v2588
      %v2762 = vunpack.c.l.b16 %v2589
      %v2763 = vunpack.c.h.b16 %v2589
      %v2764 = vunpack.c.l.b16 %v2590
      %v2765 = vunpack.c.h.b16 %v2590
      %v2766 = vunpack.c.l.b16 %v2591
      %v2767 = vunpack.c.h.b16 %v2591
      %v2768 = vunpack.c.l.b16 %v2592
      %v2769 = vunpack.c.h.b16 %v2592
      %v2770 = vunpack.c.l.b16 %v2593
      %v2771 = vunpack.c.h.b16 %v2593
      %v2772 = vunpack.c.l.b16 %v2594
      %v2773 = vunpack.c.h.b16 %v2594
      %v2774 = vunpack.c.l.b16 %v2595
      %v2775 = vunpack.c.h.b16 %v2595
      %v2776 = vunpack.c.l.b16 %v2596
      %v2777 = vunpack.c.h.b16 %v2596
      %v2778 = vunpack.c.l.b16 %v2597
      %v2779 = vunpack.c.h.b16 %v2597
      %v2780 = vunpack.c.l.b16 %v2598
      %v2781 = vunpack.c.h.b16 %v2598
      %v2782 = vunpack.c.l.b16 %v2599
      %v2783 = vunpack.c.h.b16 %v2599
      %v2784 = vunpack.c.l.b16 %v2600
      %v2785 = vunpack.c.h.b16 %v2600
      %v2786 = vunpack.c.l.b16 %v2601
      %v2787 = vunpack.c.h.b16 %v2601
      %v2788 = vunpack.c.l.b16 %v2602
      %v2789 = vunpack.c.h.b16 %v2602
      %v2790 = vunpack.c.l.b16 %v2603
      %v2791 = vunpack.c.h.b16 %v2603
      %v2792 = vunpack.c.l.b16 %v2604
      %v2793 = vunpack.c.h.b16 %v2604
      %v2794 = vunpack.c.l.b16 %v2605
      %v2795 = vunpack.c.h.b16 %v2605
      %v2796 = vunpack.c.l.b16 %v2606
      %v2797 = vunpack.c.h.b16 %v2606
      %v2798 = vunpack.c.l.b16 %v2607
      %v2799 = vunpack.c.h.b16 %v2607
      %v2800 = vunpack.c.l.b16 %v2608
      %v2801 = vunpack.c.h.b16 %v2608
      %v2802 = vunpack.c.l.b16 %v2609
      %v2803 = vunpack.c.h.b16 %v2609
      %v2804 = vunpack.c.l.b16 %v2610
      %v2805 = vunpack.c.h.b16 %v2610
      %v2806 = vunpack.c.l.b16 %v2611
      %v2807 = vunpack.c.h.b16 %v2611
      %v2808 = vpack.c.b16 %v2684, %v2680
      %v2809 = vpack.c.b16 %v2685, %v2681
      %v2810 = vpack.c.b16 %v2686, %v2682
      %v2811 = vpack.c.b16 %v2687, %v2683
      %v2812 = vpack.c.b16 %v2692, %v2688
      %v2813 = vpack.c.b16 %v2693, %v2689
      %v2814 = vpack.c.b16 %v2694, %v2690
      %v2815 = vpack.c.b16 %v2695, %v2691
      %v2816 = vpack.c.b16 %v2700, %v2696
      %v2817 = vpack.c.b16 %v2701, %v2697
      %v2818 = vpack.c.b16 %v2702, %v2698
      %v2819 = vpack.c.b16 %v2703, %v2699
      %v2820 = vpack.c.b16 %v2708, %v2704
      %v2821 = vpack.c.b16 %v2709, %v2705
      %v2822 = vpack.c.b16 %v2710, %v2706
      %v2823 = vpack.c.b16 %v2711, %v2707
      %v2824 = vpack.c.b16 %v2716, %v2712
      %v2825 = vpack.c.b16 %v2717, %v2713
      %v2826 = vpack.c.b16 %v2718, %v2714
      %v2827 = vpack.c.b16 %v2719, %v2715
      %v2828 = vpack.c.b16 %v2724, %v2720
      %v2829 = vpack.c.b16 %v2725, %v2721
      %v2830 = vpack.c.b16 %v2726, %v2722
      %v2831 = vpack.c.b16 %v2727, %v2723
      %v2832 = vpack.c.b16 %v2732, %v2728
      %v2833 = vpack.c.b16 %v2733, %v2729
      %v2834 = vpack.c.b16 %v2734, %v2730
      %v2835 = vpack.c.b16 %v2735, %v2731
      %v2836 = vpack.c.b16 %v2740, %v2736
      %v2837 = vpack.c.b16 %v2741, %v2737
      %v2838 = vpack.c.b16 %v2742, %v2738
      %v2839 = vpack.c.b16 %v2743, %v2739
      %v2840 = vpack.c.b16 %v2748, %v2744
      %v2841 = vpack.c.b16 %v2749, %v2745
      %v2842 = vpack.c.b16 %v2750, %v2746
      %v2843 = vpack.c.b16 %v2751, %v2747
      %v2844 = vpack.c.b16 %v2756, %v2752
      %v2845 = vpack.c.b16 %v2757, %v2753
      %v2846 = vpack.c.b16 %v2758, %v2754
      %v2847 = vpack.c.b16 %v2759, %v2755
      %v2848 = vpack.c.b16 %v2764, %v2760
      %v2849 = vpack.c.b16 %v2765, %v2761
      %v2850 = vpack.c.b16 %v2766, %v2762
      %v2851 = vpack.c.b16 %v2767, %v2763
      %v2852 = vpack.c.b16 %v2772, %v2768
      %v2853 = vpack.c.b16 %v2773, %v2769
      %v2854 = vpack.c.b16 %v2774, %v2770
      %v2855 = vpack.c.b16 %v2775, %v2771
      %v2856 = vpack.c.b16 %v2780, %v2776
      %v2857 = vpack.c.b16 %v2781, %v2777
      %v2858 = vpack.c.b16 %v2782, %v2778
      %v2859 = vpack.c.b16 %v2783, %v2779
      %v2860 = vpack.c.b16 %v2788, %v2784
      %v2861 = vpack.c.b16 %v2789, %v2785
      %v2862 = vpack.c.b16 %v2790, %v2786
      %v2863 = vpack.c.b16 %v2791, %v2787
      %v2864 = vpack.c.b16 %v2796, %v2792
      %v2865 = vpack.c.b16 %v2797, %v2793
      %v2866 = vpack.c.b16 %v2798, %v2794
      %v2867 = vpack.c.b16 %v2799, %v2795
      %v2868 = vpack.c.b16 %v2804, %v2800
      %v2869 = vpack.c.b16 %v2805, %v2801
      %v2870 = vpack.c.b16 %v2806, %v2802
      %v2871 = vpack.c.b16 %v2807, %v2803
      %2936 = vmatprep.subr.bf16.mxu0 %v2837
      %2937 = vmatpush1.bf16.msra.mxu0 %v2836
      %2938 = vmatprep.subr.bf16.mxu0 %v2833
      %2939 = vmatpush1.bf16.msra.mxu0 %v2832
      %2940 = vmatprep.subr.bf16.mxu0 %v2829
      %2941 = vmatpush1.bf16.msra.mxu0 %v2828
      %2942 = vmatprep.subr.bf16.mxu0 %v2825
      %2943 = vmatpush1.bf16.msra.mxu0 %v2824
      %2944 = vmatprep.subr.bf16.mxu0 %v2821
      %2945 = vmatpush1.bf16.msra.mxu0 %v2820
      %2946 = vmatprep.subr.bf16.mxu0 %v2817
      %2947 = vmatpush1.bf16.msra.mxu0 %v2816
      %2948 = vmatprep.subr.bf16.mxu0 %v2813
      %2949 = vmatpush1.bf16.msra.mxu0 %v2812
      %2950 = vmatprep.subr.bf16.mxu0 %v2809
      %2951 = vmatpush1.bf16.msra.mxu0 %v2808
      %2952 = vmatprep.subr.bf16.mxu0 %v2869
      %2953 = vmatpush2.bf16.msra.mxu0 %v2868
      %2954 = vmatprep.subr.bf16.mxu0 %v2865
      %2955 = vmatpush2.bf16.msra.mxu0 %v2864
      %2956 = vmatprep.subr.bf16.mxu0 %v2861
      %2957 = vmatpush2.bf16.msra.mxu0 %v2860
      %2958 = vmatprep.subr.bf16.mxu0 %v2857
      %2959 = vmatpush2.bf16.msra.mxu0 %v2856
      %2960 = vmatprep.subr.bf16.mxu0 %v2853
      %2961 = vmatpush2.bf16.msra.mxu0 %v2852
      %2962 = vmatprep.subr.bf16.mxu0 %v2849
      %2963 = vmatpush2.bf16.msra.mxu0 %v2848
      %2964 = vmatprep.subr.bf16.mxu0 %v2845
      %2965 = vmatpush2.bf16.msra.mxu0 %v2844
      %2966 = vmatprep.subr.bf16.mxu0 %v2841
      %2967 = vmatpush2.bf16.msra.mxu0 %v2840
      %2968 = vmatprep.mubr.bf16.mxu0 %v2613
      %2969 = vmatmul.mubr.bf16.gmra.mxu0 %v2612
      %v2970 = vpop.f32.mrf.mxu0
      %v2971 = vadd.f32 0.0, %v2970
      %v2972 = vpop.f32.mrf.mxu0
      %v2973 = vadd.f32 0.0, %v2972
      %v2974 = vpop.f32.mrf.mxu0
      %v2975 = vpop.f32.mrf.mxu0
      %2976 = vdwg.mxu0
      %2977 = vmatprep.subr.bf16.mxu0 %v2839
      %2978 = vmatpush1.bf16.msra.mxu0 %v2838
      %2979 = vmatprep.subr.bf16.mxu0 %v2835
      %2980 = vmatpush1.bf16.msra.mxu0 %v2834
      %2981 = vmatprep.subr.bf16.mxu0 %v2831
      %2982 = vmatpush1.bf16.msra.mxu0 %v2830
      %2983 = vmatprep.subr.bf16.mxu0 %v2827
      %2984 = vmatpush1.bf16.msra.mxu0 %v2826
      %2985 = vmatprep.subr.bf16.mxu0 %v2823
      %2986 = vmatpush1.bf16.msra.mxu0 %v2822
      %2987 = vmatprep.subr.bf16.mxu0 %v2819
      %2988 = vmatpush1.bf16.msra.mxu0 %v2818
      %2989 = vmatprep.subr.bf16.mxu0 %v2815
      %2990 = vmatpush1.bf16.msra.mxu0 %v2814
      %2991 = vmatprep.subr.bf16.mxu0 %v2811
      %2992 = vmatpush1.bf16.msra.mxu0 %v2810
      %2993 = vmatprep.subr.bf16.mxu0 %v2871
      %2994 = vmatpush2.bf16.msra.mxu0 %v2870
      %2995 = vmatprep.subr.bf16.mxu0 %v2867
      %2996 = vmatpush2.bf16.msra.mxu0 %v2866
      %2997 = vmatprep.subr.bf16.mxu0 %v2863
      %2998 = vmatpush2.bf16.msra.mxu0 %v2862
      %2999 = vmatprep.subr.bf16.mxu0 %v2859
      %3000 = vmatpush2.bf16.msra.mxu0 %v2858
      %3001 = vmatprep.subr.bf16.mxu0 %v2855
      %3002 = vmatpush2.bf16.msra.mxu0 %v2854
      %3003 = vmatprep.subr.bf16.mxu0 %v2851
      %3004 = vmatpush2.bf16.msra.mxu0 %v2850
      %3005 = vmatprep.subr.bf16.mxu0 %v2847
      %3006 = vmatpush2.bf16.msra.mxu0 %v2846
      %3007 = vmatprep.subr.bf16.mxu0 %v2843
      %3008 = vmatpush2.bf16.msra.mxu0 %v2842
      %3009 = vmatprep.mubr.bf16.mxu0 %v2613
      %3010 = vmatmul.mubr.bf16.gmra.mxu0 %v2612
      %v3011 = vpop.f32.mrf.mxu0
      %v3012 = vadd.f32 0.0, %v3011
      %v3013 = vpop.f32.mrf.mxu0
      %v3014 = vadd.f32 0.0, %v3013
      %v3015 = vpop.f32.mrf.mxu0
      %v3016 = vpop.f32.mrf.mxu0
      %3017 = vdwg.mxu0
      %v3022 = vcombine.low %v2971, %v2973
      %v3023 = vcombine.low %v3012, %v3014
      %v3025 = vunpack.c.l.s4 1966171168
      %v3026 = vunpack.c.0.s8 %v3025
      %v3027 = vlaneseq
      %v3028 = vshrl.u32 %v3027, 7
      %v3029 = vsub.s32 %v3026, %v3028
      %v3030 = vrot.slane %v3022, %v3029
      %v3032 = vunpack.c.l.s4 1966171168
      %v3033 = vunpack.c.0.s8 %v3032
      %v3034 = vlaneseq
      %v3035 = vshrl.u32 %v3034, 7
      %v3036 = vsub.s32 %v3033, %v3035
      %v3037 = vrot.slane %v3023, %v3036
      %v3038 = vcombine.low %v3030, %v3037
      %v3040 = vunpack.c.l.s4 1966171168
      %v3041 = vunpack.c.0.s8 %v3040
      %v3042 = vlaneseq
      %v3043 = vshrl.u32 %v3042, 7
      %v3044 = vsub.s32 %v3041, %v3043
      %v3045 = vrot.slane %v3038, %v3044
      %v3047 = vadd.f32 %v2546, %v3045
      %s3048 = scalar_lea.vmem %s7, 2048
      %v3049 = vld [vmem:[%s3048] sm:$0xff]
      %v3050 = vld [vmem:[%s3048 + $0x8] sm:$0xff]
      %v3051 = vld [vmem:[%s3048 + $0x10] sm:$0xff]
      %v3052 = vld [vmem:[%s3048 + $0x18] sm:$0xff]
      %v3053 = vld [vmem:[%s3048 + $0x20] sm:$0xff]
      %v3054 = vld [vmem:[%s3048 + $0x28] sm:$0xff]
      %v3055 = vld [vmem:[%s3048 + $0x30] sm:$0xff]
      %v3056 = vld [vmem:[%s3048 + $0x38] sm:$0xff]
      %v3057 = vld [vmem:[%s3048 + $0x40] sm:$0xff]
      %v3058 = vld [vmem:[%s3048 + $0x48] sm:$0xff]
      %v3059 = vld [vmem:[%s3048 + $0x50] sm:$0xff]
      %v3060 = vld [vmem:[%s3048 + $0x58] sm:$0xff]
      %v3061 = vld [vmem:[%s3048 + $0x60] sm:$0xff]
      %v3062 = vld [vmem:[%s3048 + $0x68] sm:$0xff]
      %v3063 = vld [vmem:[%s3048 + $0x70] sm:$0xff]
      %v3064 = vld [vmem:[%s3048 + $0x78] sm:$0xff]
      %v3065 = vld [vmem:[%s3048 + $0x80] sm:$0xff]
      %v3066 = vld [vmem:[%s3048 + $0x88] sm:$0xff]
      %v3067 = vld [vmem:[%s3048 + $0x90] sm:$0xff]
      %v3068 = vld [vmem:[%s3048 + $0x98] sm:$0xff]
      %v3069 = vld [vmem:[%s3048 + $0xa0] sm:$0xff]
      %v3070 = vld [vmem:[%s3048 + $0xa8] sm:$0xff]
      %v3071 = vld [vmem:[%s3048 + $0xb0] sm:$0xff]
      %v3072 = vld [vmem:[%s3048 + $0xb8] sm:$0xff]
      %v3073 = vld [vmem:[%s3048 + $0xc0] sm:$0xff]
      %v3074 = vld [vmem:[%s3048 + $0xc8] sm:$0xff]
      %v3075 = vld [vmem:[%s3048 + $0xd0] sm:$0xff]
      %v3076 = vld [vmem:[%s3048 + $0xd8] sm:$0xff]
      %v3077 = vld [vmem:[%s3048 + $0xe0] sm:$0xff]
      %v3078 = vld [vmem:[%s3048 + $0xe8] sm:$0xff]
      %v3079 = vld [vmem:[%s3048 + $0xf0] sm:$0xff]
      %v3080 = vld [vmem:[%s3048 + $0xf8] sm:$0xff]
      %v3081 = vld [vmem:[%s3048 + $0x100] sm:$0xff]
      %v3082 = vld [vmem:[%s3048 + $0x108] sm:$0xff]
      %v3083 = vld [vmem:[%s3048 + $0x110] sm:$0xff]
      %v3084 = vld [vmem:[%s3048 + $0x118] sm:$0xff]
      %v3085 = vld [vmem:[%s3048 + $0x120] sm:$0xff]
      %v3086 = vld [vmem:[%s3048 + $0x128] sm:$0xff]
      %v3087 = vld [vmem:[%s3048 + $0x130] sm:$0xff]
      %v3088 = vld [vmem:[%s3048 + $0x138] sm:$0xff]
      %v3089 = vld [vmem:[%s3048 + $0x140] sm:$0xff]
      %v3090 = vld [vmem:[%s3048 + $0x148] sm:$0xff]
      %v3091 = vld [vmem:[%s3048 + $0x150] sm:$0xff]
      %v3092 = vld [vmem:[%s3048 + $0x158] sm:$0xff]
      %v3093 = vld [vmem:[%s3048 + $0x160] sm:$0xff]
      %v3094 = vld [vmem:[%s3048 + $0x168] sm:$0xff]
      %v3095 = vld [vmem:[%s3048 + $0x170] sm:$0xff]
      %v3096 = vld [vmem:[%s3048 + $0x178] sm:$0xff]
      %v3097 = vld [vmem:[%s3048 + $0x180] sm:$0xff]
      %v3098 = vld [vmem:[%s3048 + $0x188] sm:$0xff]
      %v3099 = vld [vmem:[%s3048 + $0x190] sm:$0xff]
      %v3100 = vld [vmem:[%s3048 + $0x198] sm:$0xff]
      %v3101 = vld [vmem:[%s3048 + $0x1a0] sm:$0xff]
      %v3102 = vld [vmem:[%s3048 + $0x1a8] sm:$0xff]
      %v3103 = vld [vmem:[%s3048 + $0x1b0] sm:$0xff]
      %v3104 = vld [vmem:[%s3048 + $0x1b8] sm:$0xff]
      %v3105 = vld [vmem:[%s3048 + $0x1c0] sm:$0xff]
      %v3106 = vld [vmem:[%s3048 + $0x1c8] sm:$0xff]
      %v3107 = vld [vmem:[%s3048 + $0x1d0] sm:$0xff]
      %v3108 = vld [vmem:[%s3048 + $0x1d8] sm:$0xff]
      %v3109 = vld [vmem:[%s3048 + $0x1e0] sm:$0xff]
      %v3110 = vld [vmem:[%s3048 + $0x1e8] sm:$0xff]
      %v3111 = vld [vmem:[%s3048 + $0x1f0] sm:$0xff]
      %v3112 = vld [vmem:[%s3048 + $0x1f8] sm:$0xff]
      %v3113 = vrot.slane %v1041, 2
      %v3114 = vrot.slane %v1042, 2
      %v3181 = vunpack.c.l.b16 %v3049
      %v3182 = vunpack.c.h.b16 %v3049
      %v3183 = vunpack.c.l.b16 %v3050
      %v3184 = vunpack.c.h.b16 %v3050
      %v3185 = vunpack.c.l.b16 %v3051
      %v3186 = vunpack.c.h.b16 %v3051
      %v3187 = vunpack.c.l.b16 %v3052
      %v3188 = vunpack.c.h.b16 %v3052
      %v3189 = vunpack.c.l.b16 %v3053
      %v3190 = vunpack.c.h.b16 %v3053
      %v3191 = vunpack.c.l.b16 %v3054
      %v3192 = vunpack.c.h.b16 %v3054
      %v3193 = vunpack.c.l.b16 %v3055
      %v3194 = vunpack.c.h.b16 %v3055
      %v3195 = vunpack.c.l.b16 %v3056
      %v3196 = vunpack.c.h.b16 %v3056
      %v3197 = vunpack.c.l.b16 %v3057
      %v3198 = vunpack.c.h.b16 %v3057
      %v3199 = vunpack.c.l.b16 %v3058
      %v3200 = vunpack.c.h.b16 %v3058
      %v3201 = vunpack.c.l.b16 %v3059
      %v3202 = vunpack.c.h.b16 %v3059
      %v3203 = vunpack.c.l.b16 %v3060
      %v3204 = vunpack.c.h.b16 %v3060
      %v3205 = vunpack.c.l.b16 %v3061
      %v3206 = vunpack.c.h.b16 %v3061
      %v3207 = vunpack.c.l.b16 %v3062
      %v3208 = vunpack.c.h.b16 %v3062
      %v3209 = vunpack.c.l.b16 %v3063
      %v3210 = vunpack.c.h.b16 %v3063
      %v3211 = vunpack.c.l.b16 %v3064
      %v3212 = vunpack.c.h.b16 %v3064
      %v3213 = vunpack.c.l.b16 %v3065
      %v3214 = vunpack.c.h.b16 %v3065
      %v3215 = vunpack.c.l.b16 %v3066
      %v3216 = vunpack.c.h.b16 %v3066
      %v3217 = vunpack.c.l.b16 %v3067
      %v3218 = vunpack.c.h.b16 %v3067
      %v3219 = vunpack.c.l.b16 %v3068
      %v3220 = vunpack.c.h.b16 %v3068
      %v3221 = vunpack.c.l.b16 %v3069
      %v3222 = vunpack.c.h.b16 %v3069
      %v3223 = vunpack.c.l.b16 %v3070
      %v3224 = vunpack.c.h.b16 %v3070
      %v3225 = vunpack.c.l.b16 %v3071
      %v3226 = vunpack.c.h.b16 %v3071
      %v3227 = vunpack.c.l.b16 %v3072
      %v3228 = vunpack.c.h.b16 %v3072
      %v3229 = vunpack.c.l.b16 %v3073
      %v3230 = vunpack.c.h.b16 %v3073
      %v3231 = vunpack.c.l.b16 %v3074
      %v3232 = vunpack.c.h.b16 %v3074
      %v3233 = vunpack.c.l.b16 %v3075
      %v3234 = vunpack.c.h.b16 %v3075
      %v3235 = vunpack.c.l.b16 %v3076
      %v3236 = vunpack.c.h.b16 %v3076
      %v3237 = vunpack.c.l.b16 %v3077
      %v3238 = vunpack.c.h.b16 %v3077
      %v3239 = vunpack.c.l.b16 %v3078
      %v3240 = vunpack.c.h.b16 %v3078
      %v3241 = vunpack.c.l.b16 %v3079
      %v3242 = vunpack.c.h.b16 %v3079
      %v3243 = vunpack.c.l.b16 %v3080
      %v3244 = vunpack.c.h.b16 %v3080
      %v3245 = vunpack.c.l.b16 %v3081
      %v3246 = vunpack.c.h.b16 %v3081
      %v3247 = vunpack.c.l.b16 %v3082
      %v3248 = vunpack.c.h.b16 %v3082
      %v3249 = vunpack.c.l.b16 %v3083
      %v3250 = vunpack.c.h.b16 %v3083
      %v3251 = vunpack.c.l.b16 %v3084
      %v3252 = vunpack.c.h.b16 %v3084
      %v3253 = vunpack.c.l.b16 %v3085
      %v3254 = vunpack.c.h.b16 %v3085
      %v3255 = vunpack.c.l.b16 %v3086
      %v3256 = vunpack.c.h.b16 %v3086
      %v3257 = vunpack.c.l.b16 %v3087
      %v3258 = vunpack.c.h.b16 %v3087
      %v3259 = vunpack.c.l.b16 %v3088
      %v3260 = vunpack.c.h.b16 %v3088
      %v3261 = vunpack.c.l.b16 %v3089
      %v3262 = vunpack.c.h.b16 %v3089
      %v3263 = vunpack.c.l.b16 %v3090
      %v3264 = vunpack.c.h.b16 %v3090
      %v3265 = vunpack.c.l.b16 %v3091
      %v3266 = vunpack.c.h.b16 %v3091
      %v3267 = vunpack.c.l.b16 %v3092
      %v3268 = vunpack.c.h.b16 %v3092
      %v3269 = vunpack.c.l.b16 %v3093
      %v3270 = vunpack.c.h.b16 %v3093
      %v3271 = vunpack.c.l.b16 %v3094
      %v3272 = vunpack.c.h.b16 %v3094
      %v3273 = vunpack.c.l.b16 %v3095
      %v3274 = vunpack.c.h.b16 %v3095
      %v3275 = vunpack.c.l.b16 %v3096
      %v3276 = vunpack.c.h.b16 %v3096
      %v3277 = vunpack.c.l.b16 %v3097
      %v3278 = vunpack.c.h.b16 %v3097
      %v3279 = vunpack.c.l.b16 %v3098
      %v3280 = vunpack.c.h.b16 %v3098
      %v3281 = vunpack.c.l.b16 %v3099
      %v3282 = vunpack.c.h.b16 %v3099
      %v3283 = vunpack.c.l.b16 %v3100
      %v3284 = vunpack.c.h.b16 %v3100
      %v3285 = vunpack.c.l.b16 %v3101
      %v3286 = vunpack.c.h.b16 %v3101
      %v3287 = vunpack.c.l.b16 %v3102
      %v3288 = vunpack.c.h.b16 %v3102
      %v3289 = vunpack.c.l.b16 %v3103
      %v3290 = vunpack.c.h.b16 %v3103
      %v3291 = vunpack.c.l.b16 %v3104
      %v3292 = vunpack.c.h.b16 %v3104
      %v3293 = vunpack.c.l.b16 %v3105
      %v3294 = vunpack.c.h.b16 %v3105
      %v3295 = vunpack.c.l.b16 %v3106
      %v3296 = vunpack.c.h.b16 %v3106
      %v3297 = vunpack.c.l.b16 %v3107
      %v3298 = vunpack.c.h.b16 %v3107
      %v3299 = vunpack.c.l.b16 %v3108
      %v3300 = vunpack.c.h.b16 %v3108
      %v3301 = vunpack.c.l.b16 %v3109
      %v3302 = vunpack.c.h.b16 %v3109
      %v3303 = vunpack.c.l.b16 %v3110
      %v3304 = vunpack.c.h.b16 %v3110
      %v3305 = vunpack.c.l.b16 %v3111
      %v3306 = vunpack.c.h.b16 %v3111
      %v3307 = vunpack.c.l.b16 %v3112
      %v3308 = vunpack.c.h.b16 %v3112
      %v3309 = vpack.c.b16 %v3185, %v3181
      %v3310 = vpack.c.b16 %v3186, %v3182
      %v3311 = vpack.c.b16 %v3187, %v3183
      %v3312 = vpack.c.b16 %v3188, %v3184
      %v3313 = vpack.c.b16 %v3193, %v3189
      %v3314 = vpack.c.b16 %v3194, %v3190
      %v3315 = vpack.c.b16 %v3195, %v3191
      %v3316 = vpack.c.b16 %v3196, %v3192
      %v3317 = vpack.c.b16 %v3201, %v3197
      %v3318 = vpack.c.b16 %v3202, %v3198
      %v3319 = vpack.c.b16 %v3203, %v3199
      %v3320 = vpack.c.b16 %v3204, %v3200
      %v3321 = vpack.c.b16 %v3209, %v3205
      %v3322 = vpack.c.b16 %v3210, %v3206
      %v3323 = vpack.c.b16 %v3211, %v3207
      %v3324 = vpack.c.b16 %v3212, %v3208
      %v3325 = vpack.c.b16 %v3217, %v3213
      %v3326 = vpack.c.b16 %v3218, %v3214
      %v3327 = vpack.c.b16 %v3219, %v3215
      %v3328 = vpack.c.b16 %v3220, %v3216
      %v3329 = vpack.c.b16 %v3225, %v3221
      %v3330 = vpack.c.b16 %v3226, %v3222
      %v3331 = vpack.c.b16 %v3227, %v3223
      %v3332 = vpack.c.b16 %v3228, %v3224
      %v3333 = vpack.c.b16 %v3233, %v3229
      %v3334 = vpack.c.b16 %v3234, %v3230
      %v3335 = vpack.c.b16 %v3235, %v3231
      %v3336 = vpack.c.b16 %v3236, %v3232
      %v3337 = vpack.c.b16 %v3241, %v3237
      %v3338 = vpack.c.b16 %v3242, %v3238
      %v3339 = vpack.c.b16 %v3243, %v3239
      %v3340 = vpack.c.b16 %v3244, %v3240
      %v3341 = vpack.c.b16 %v3249, %v3245
      %v3342 = vpack.c.b16 %v3250, %v3246
      %v3343 = vpack.c.b16 %v3251, %v3247
      %v3344 = vpack.c.b16 %v3252, %v3248
      %v3345 = vpack.c.b16 %v3257, %v3253
      %v3346 = vpack.c.b16 %v3258, %v3254
      %v3347 = vpack.c.b16 %v3259, %v3255
      %v3348 = vpack.c.b16 %v3260, %v3256
      %v3349 = vpack.c.b16 %v3265, %v3261
      %v3350 = vpack.c.b16 %v3266, %v3262
      %v3351 = vpack.c.b16 %v3267, %v3263
      %v3352 = vpack.c.b16 %v3268, %v3264
      %v3353 = vpack.c.b16 %v3273, %v3269
      %v3354 = vpack.c.b16 %v3274, %v3270
      %v3355 = vpack.c.b16 %v3275, %v3271
      %v3356 = vpack.c.b16 %v3276, %v3272
      %v3357 = vpack.c.b16 %v3281, %v3277
      %v3358 = vpack.c.b16 %v3282, %v3278
      %v3359 = vpack.c.b16 %v3283, %v3279
      %v3360 = vpack.c.b16 %v3284, %v3280
      %v3361 = vpack.c.b16 %v3289, %v3285
      %v3362 = vpack.c.b16 %v3290, %v3286
      %v3363 = vpack.c.b16 %v3291, %v3287
      %v3364 = vpack.c.b16 %v3292, %v3288
      %v3365 = vpack.c.b16 %v3297, %v3293
      %v3366 = vpack.c.b16 %v3298, %v3294
      %v3367 = vpack.c.b16 %v3299, %v3295
      %v3368 = vpack.c.b16 %v3300, %v3296
      %v3369 = vpack.c.b16 %v3305, %v3301
      %v3370 = vpack.c.b16 %v3306, %v3302
      %v3371 = vpack.c.b16 %v3307, %v3303
      %v3372 = vpack.c.b16 %v3308, %v3304
      %3437 = vmatprep.subr.bf16.mxu0 %v3338
      %3438 = vmatpush1.bf16.msra.mxu0 %v3337
      %3439 = vmatprep.subr.bf16.mxu0 %v3334
      %3440 = vmatpush1.bf16.msra.mxu0 %v3333
      %3441 = vmatprep.subr.bf16.mxu0 %v3330
      %3442 = vmatpush1.bf16.msra.mxu0 %v3329
      %3443 = vmatprep.subr.bf16.mxu0 %v3326
      %3444 = vmatpush1.bf16.msra.mxu0 %v3325
      %3445 = vmatprep.subr.bf16.mxu0 %v3322
      %3446 = vmatpush1.bf16.msra.mxu0 %v3321
      %3447 = vmatprep.subr.bf16.mxu0 %v3318
      %3448 = vmatpush1.bf16.msra.mxu0 %v3317
      %3449 = vmatprep.subr.bf16.mxu0 %v3314
      %3450 = vmatpush1.bf16.msra.mxu0 %v3313
      %3451 = vmatprep.subr.bf16.mxu0 %v3310
      %3452 = vmatpush1.bf16.msra.mxu0 %v3309
      %3453 = vmatprep.subr.bf16.mxu0 %v3370
      %3454 = vmatpush2.bf16.msra.mxu0 %v3369
      %3455 = vmatprep.subr.bf16.mxu0 %v3366
      %3456 = vmatpush2.bf16.msra.mxu0 %v3365
      %3457 = vmatprep.subr.bf16.mxu0 %v3362
      %3458 = vmatpush2.bf16.msra.mxu0 %v3361
      %3459 = vmatprep.subr.bf16.mxu0 %v3358
      %3460 = vmatpush2.bf16.msra.mxu0 %v3357
      %3461 = vmatprep.subr.bf16.mxu0 %v3354
      %3462 = vmatpush2.bf16.msra.mxu0 %v3353
      %3463 = vmatprep.subr.bf16.mxu0 %v3350
      %3464 = vmatpush2.bf16.msra.mxu0 %v3349
      %3465 = vmatprep.subr.bf16.mxu0 %v3346
      %3466 = vmatpush2.bf16.msra.mxu0 %v3345
      %3467 = vmatprep.subr.bf16.mxu0 %v3342
      %3468 = vmatpush2.bf16.msra.mxu0 %v3341
      %3469 = vmatprep.mubr.bf16.mxu0 %v3114
      %3470 = vmatmul.mubr.bf16.gmra.mxu0 %v3113
      %v3471 = vpop.f32.mrf.mxu0
      %v3472 = vadd.f32 0.0, %v3471
      %v3473 = vpop.f32.mrf.mxu0
      %v3474 = vadd.f32 0.0, %v3473
      %v3475 = vpop.f32.mrf.mxu0
      %v3476 = vpop.f32.mrf.mxu0
      %3477 = vdwg.mxu0
      %3478 = vmatprep.subr.bf16.mxu0 %v3340
      %3479 = vmatpush1.bf16.msra.mxu0 %v3339
      %3480 = vmatprep.subr.bf16.mxu0 %v3336
      %3481 = vmatpush1.bf16.msra.mxu0 %v3335
      %3482 = vmatprep.subr.bf16.mxu0 %v3332
      %3483 = vmatpush1.bf16.msra.mxu0 %v3331
      %3484 = vmatprep.subr.bf16.mxu0 %v3328
      %3485 = vmatpush1.bf16.msra.mxu0 %v3327
      %3486 = vmatprep.subr.bf16.mxu0 %v3324
      %3487 = vmatpush1.bf16.msra.mxu0 %v3323
      %3488 = vmatprep.subr.bf16.mxu0 %v3320
      %3489 = vmatpush1.bf16.msra.mxu0 %v3319
      %3490 = vmatprep.subr.bf16.mxu0 %v3316
      %3491 = vmatpush1.bf16.msra.mxu0 %v3315
      %3492 = vmatprep.subr.bf16.mxu0 %v3312
      %3493 = vmatpush1.bf16.msra.mxu0 %v3311
      %3494 = vmatprep.subr.bf16.mxu0 %v3372
      %3495 = vmatpush2.bf16.msra.mxu0 %v3371
      %3496 = vmatprep.subr.bf16.mxu0 %v3368
      %3497 = vmatpush2.bf16.msra.mxu0 %v3367
      %3498 = vmatprep.subr.bf16.mxu0 %v3364
      %3499 = vmatpush2.bf16.msra.mxu0 %v3363
      %3500 = vmatprep.subr.bf16.mxu0 %v3360
      %3501 = vmatpush2.bf16.msra.mxu0 %v3359
      %3502 = vmatprep.subr.bf16.mxu0 %v3356
      %3503 = vmatpush2.bf16.msra.mxu0 %v3355
      %3504 = vmatprep.subr.bf16.mxu0 %v3352
      %3505 = vmatpush2.bf16.msra.mxu0 %v3351
      %3506 = vmatprep.subr.bf16.mxu0 %v3348
      %3507 = vmatpush2.bf16.msra.mxu0 %v3347
      %3508 = vmatprep.subr.bf16.mxu0 %v3344
      %3509 = vmatpush2.bf16.msra.mxu0 %v3343
      %3510 = vmatprep.mubr.bf16.mxu0 %v3114
      %3511 = vmatmul.mubr.bf16.gmra.mxu0 %v3113
      %v3512 = vpop.f32.mrf.mxu0
      %v3513 = vadd.f32 0.0, %v3512
      %v3514 = vpop.f32.mrf.mxu0
      %v3515 = vadd.f32 0.0, %v3514
      %v3516 = vpop.f32.mrf.mxu0
      %v3517 = vpop.f32.mrf.mxu0
      %3518 = vdwg.mxu0
      %v3523 = vcombine.low %v3472, %v3474
      %v3524 = vcombine.low %v3513, %v3515
      %v3526 = vunpack.c.l.s4 1966171168
      %v3527 = vunpack.c.0.s8 %v3526
      %v3528 = vlaneseq
      %v3529 = vshrl.u32 %v3528, 7
      %v3530 = vsub.s32 %v3527, %v3529
      %v3531 = vrot.slane %v3523, %v3530
      %v3533 = vunpack.c.l.s4 1966171168
      %v3534 = vunpack.c.0.s8 %v3533
      %v3535 = vlaneseq
      %v3536 = vshrl.u32 %v3535, 7
      %v3537 = vsub.s32 %v3534, %v3536
      %v3538 = vrot.slane %v3524, %v3537
      %v3539 = vcombine.low %v3531, %v3538
      %v3541 = vunpack.c.l.s4 1966171168
      %v3542 = vunpack.c.0.s8 %v3541
      %v3543 = vlaneseq
      %v3544 = vshrl.u32 %v3543, 7
      %v3545 = vsub.s32 %v3542, %v3544
      %v3546 = vrot.slane %v3539, %v3545
      %v3548 = vadd.f32 %v3047, %v3546
      %s3549 = scalar_lea.vmem %s7, 2560
      %v3550 = vld [vmem:[%s3549] sm:$0xff]
      %v3551 = vld [vmem:[%s3549 + $0x8] sm:$0xff]
      %v3552 = vld [vmem:[%s3549 + $0x10] sm:$0xff]
      %v3553 = vld [vmem:[%s3549 + $0x18] sm:$0xff]
      %v3554 = vld [vmem:[%s3549 + $0x20] sm:$0xff]
      %v3555 = vld [vmem:[%s3549 + $0x28] sm:$0xff]
      %v3556 = vld [vmem:[%s3549 + $0x30] sm:$0xff]
      %v3557 = vld [vmem:[%s3549 + $0x38] sm:$0xff]
      %v3558 = vld [vmem:[%s3549 + $0x40] sm:$0xff]
      %v3559 = vld [vmem:[%s3549 + $0x48] sm:$0xff]
      %v3560 = vld [vmem:[%s3549 + $0x50] sm:$0xff]
      %v3561 = vld [vmem:[%s3549 + $0x58] sm:$0xff]
      %v3562 = vld [vmem:[%s3549 + $0x60] sm:$0xff]
      %v3563 = vld [vmem:[%s3549 + $0x68] sm:$0xff]
      %v3564 = vld [vmem:[%s3549 + $0x70] sm:$0xff]
      %v3565 = vld [vmem:[%s3549 + $0x78] sm:$0xff]
      %v3566 = vld [vmem:[%s3549 + $0x80] sm:$0xff]
      %v3567 = vld [vmem:[%s3549 + $0x88] sm:$0xff]
      %v3568 = vld [vmem:[%s3549 + $0x90] sm:$0xff]
      %v3569 = vld [vmem:[%s3549 + $0x98] sm:$0xff]
      %v3570 = vld [vmem:[%s3549 + $0xa0] sm:$0xff]
      %v3571 = vld [vmem:[%s3549 + $0xa8] sm:$0xff]
      %v3572 = vld [vmem:[%s3549 + $0xb0] sm:$0xff]
      %v3573 = vld [vmem:[%s3549 + $0xb8] sm:$0xff]
      %v3574 = vld [vmem:[%s3549 + $0xc0] sm:$0xff]
      %v3575 = vld [vmem:[%s3549 + $0xc8] sm:$0xff]
      %v3576 = vld [vmem:[%s3549 + $0xd0] sm:$0xff]
      %v3577 = vld [vmem:[%s3549 + $0xd8] sm:$0xff]
      %v3578 = vld [vmem:[%s3549 + $0xe0] sm:$0xff]
      %v3579 = vld [vmem:[%s3549 + $0xe8] sm:$0xff]
      %v3580 = vld [vmem:[%s3549 + $0xf0] sm:$0xff]
      %v3581 = vld [vmem:[%s3549 + $0xf8] sm:$0xff]
      %v3582 = vld [vmem:[%s3549 + $0x100] sm:$0xff]
      %v3583 = vld [vmem:[%s3549 + $0x108] sm:$0xff]
      %v3584 = vld [vmem:[%s3549 + $0x110] sm:$0xff]
      %v3585 = vld [vmem:[%s3549 + $0x118] sm:$0xff]
      %v3586 = vld [vmem:[%s3549 + $0x120] sm:$0xff]
      %v3587 = vld [vmem:[%s3549 + $0x128] sm:$0xff]
      %v3588 = vld [vmem:[%s3549 + $0x130] sm:$0xff]
      %v3589 = vld [vmem:[%s3549 + $0x138] sm:$0xff]
      %v3590 = vld [vmem:[%s3549 + $0x140] sm:$0xff]
      %v3591 = vld [vmem:[%s3549 + $0x148] sm:$0xff]
      %v3592 = vld [vmem:[%s3549 + $0x150] sm:$0xff]
      %v3593 = vld [vmem:[%s3549 + $0x158] sm:$0xff]
      %v3594 = vld [vmem:[%s3549 + $0x160] sm:$0xff]
      %v3595 = vld [vmem:[%s3549 + $0x168] sm:$0xff]
      %v3596 = vld [vmem:[%s3549 + $0x170] sm:$0xff]
      %v3597 = vld [vmem:[%s3549 + $0x178] sm:$0xff]
      %v3598 = vld [vmem:[%s3549 + $0x180] sm:$0xff]
      %v3599 = vld [vmem:[%s3549 + $0x188] sm:$0xff]
      %v3600 = vld [vmem:[%s3549 + $0x190] sm:$0xff]
      %v3601 = vld [vmem:[%s3549 + $0x198] sm:$0xff]
      %v3602 = vld [vmem:[%s3549 + $0x1a0] sm:$0xff]
      %v3603 = vld [vmem:[%s3549 + $0x1a8] sm:$0xff]
      %v3604 = vld [vmem:[%s3549 + $0x1b0] sm:$0xff]
      %v3605 = vld [vmem:[%s3549 + $0x1b8] sm:$0xff]
      %v3606 = vld [vmem:[%s3549 + $0x1c0] sm:$0xff]
      %v3607 = vld [vmem:[%s3549 + $0x1c8] sm:$0xff]
      %v3608 = vld [vmem:[%s3549 + $0x1d0] sm:$0xff]
      %v3609 = vld [vmem:[%s3549 + $0x1d8] sm:$0xff]
      %v3610 = vld [vmem:[%s3549 + $0x1e0] sm:$0xff]
      %v3611 = vld [vmem:[%s3549 + $0x1e8] sm:$0xff]
      %v3612 = vld [vmem:[%s3549 + $0x1f0] sm:$0xff]
      %v3613 = vld [vmem:[%s3549 + $0x1f8] sm:$0xff]
      %v3614 = vrot.slane %v1605, 2
      %v3615 = vrot.slane %v1608, 2
      %v3682 = vunpack.c.l.b16 %v3550
      %v3683 = vunpack.c.h.b16 %v3550
      %v3684 = vunpack.c.l.b16 %v3551
      %v3685 = vunpack.c.h.b16 %v3551
      %v3686 = vunpack.c.l.b16 %v3552
      %v3687 = vunpack.c.h.b16 %v3552
      %v3688 = vunpack.c.l.b16 %v3553
      %v3689 = vunpack.c.h.b16 %v3553
      %v3690 = vunpack.c.l.b16 %v3554
      %v3691 = vunpack.c.h.b16 %v3554
      %v3692 = vunpack.c.l.b16 %v3555
      %v3693 = vunpack.c.h.b16 %v3555
      %v3694 = vunpack.c.l.b16 %v3556
      %v3695 = vunpack.c.h.b16 %v3556
      %v3696 = vunpack.c.l.b16 %v3557
      %v3697 = vunpack.c.h.b16 %v3557
      %v3698 = vunpack.c.l.b16 %v3558
      %v3699 = vunpack.c.h.b16 %v3558
      %v3700 = vunpack.c.l.b16 %v3559
      %v3701 = vunpack.c.h.b16 %v3559
      %v3702 = vunpack.c.l.b16 %v3560
      %v3703 = vunpack.c.h.b16 %v3560
      %v3704 = vunpack.c.l.b16 %v3561
      %v3705 = vunpack.c.h.b16 %v3561
      %v3706 = vunpack.c.l.b16 %v3562
      %v3707 = vunpack.c.h.b16 %v3562
      %v3708 = vunpack.c.l.b16 %v3563
      %v3709 = vunpack.c.h.b16 %v3563
      %v3710 = vunpack.c.l.b16 %v3564
      %v3711 = vunpack.c.h.b16 %v3564
      %v3712 = vunpack.c.l.b16 %v3565
      %v3713 = vunpack.c.h.b16 %v3565
      %v3714 = vunpack.c.l.b16 %v3566
      %v3715 = vunpack.c.h.b16 %v3566
      %v3716 = vunpack.c.l.b16 %v3567
      %v3717 = vunpack.c.h.b16 %v3567
      %v3718 = vunpack.c.l.b16 %v3568
      %v3719 = vunpack.c.h.b16 %v3568
      %v3720 = vunpack.c.l.b16 %v3569
      %v3721 = vunpack.c.h.b16 %v3569
      %v3722 = vunpack.c.l.b16 %v3570
      %v3723 = vunpack.c.h.b16 %v3570
      %v3724 = vunpack.c.l.b16 %v3571
      %v3725 = vunpack.c.h.b16 %v3571
      %v3726 = vunpack.c.l.b16 %v3572
      %v3727 = vunpack.c.h.b16 %v3572
      %v3728 = vunpack.c.l.b16 %v3573
      %v3729 = vunpack.c.h.b16 %v3573
      %v3730 = vunpack.c.l.b16 %v3574
      %v3731 = vunpack.c.h.b16 %v3574
      %v3732 = vunpack.c.l.b16 %v3575
      %v3733 = vunpack.c.h.b16 %v3575
      %v3734 = vunpack.c.l.b16 %v3576
      %v3735 = vunpack.c.h.b16 %v3576
      %v3736 = vunpack.c.l.b16 %v3577
      %v3737 = vunpack.c.h.b16 %v3577
      %v3738 = vunpack.c.l.b16 %v3578
      %v3739 = vunpack.c.h.b16 %v3578
      %v3740 = vunpack.c.l.b16 %v3579
      %v3741 = vunpack.c.h.b16 %v3579
      %v3742 = vunpack.c.l.b16 %v3580
      %v3743 = vunpack.c.h.b16 %v3580
      %v3744 = vunpack.c.l.b16 %v3581
      %v3745 = vunpack.c.h.b16 %v3581
      %v3746 = vunpack.c.l.b16 %v3582
      %v3747 = vunpack.c.h.b16 %v3582
      %v3748 = vunpack.c.l.b16 %v3583
      %v3749 = vunpack.c.h.b16 %v3583
      %v3750 = vunpack.c.l.b16 %v3584
      %v3751 = vunpack.c.h.b16 %v3584
      %v3752 = vunpack.c.l.b16 %v3585
      %v3753 = vunpack.c.h.b16 %v3585
      %v3754 = vunpack.c.l.b16 %v3586
      %v3755 = vunpack.c.h.b16 %v3586
      %v3756 = vunpack.c.l.b16 %v3587
      %v3757 = vunpack.c.h.b16 %v3587
      %v3758 = vunpack.c.l.b16 %v3588
      %v3759 = vunpack.c.h.b16 %v3588
      %v3760 = vunpack.c.l.b16 %v3589
      %v3761 = vunpack.c.h.b16 %v3589
      %v3762 = vunpack.c.l.b16 %v3590
      %v3763 = vunpack.c.h.b16 %v3590
      %v3764 = vunpack.c.l.b16 %v3591
      %v3765 = vunpack.c.h.b16 %v3591
      %v3766 = vunpack.c.l.b16 %v3592
      %v3767 = vunpack.c.h.b16 %v3592
      %v3768 = vunpack.c.l.b16 %v3593
      %v3769 = vunpack.c.h.b16 %v3593
      %v3770 = vunpack.c.l.b16 %v3594
      %v3771 = vunpack.c.h.b16 %v3594
      %v3772 = vunpack.c.l.b16 %v3595
      %v3773 = vunpack.c.h.b16 %v3595
      %v3774 = vunpack.c.l.b16 %v3596
      %v3775 = vunpack.c.h.b16 %v3596
      %v3776 = vunpack.c.l.b16 %v3597
      %v3777 = vunpack.c.h.b16 %v3597
      %v3778 = vunpack.c.l.b16 %v3598
      %v3779 = vunpack.c.h.b16 %v3598
      %v3780 = vunpack.c.l.b16 %v3599
      %v3781 = vunpack.c.h.b16 %v3599
      %v3782 = vunpack.c.l.b16 %v3600
      %v3783 = vunpack.c.h.b16 %v3600
      %v3784 = vunpack.c.l.b16 %v3601
      %v3785 = vunpack.c.h.b16 %v3601
      %v3786 = vunpack.c.l.b16 %v3602
      %v3787 = vunpack.c.h.b16 %v3602
      %v3788 = vunpack.c.l.b16 %v3603
      %v3789 = vunpack.c.h.b16 %v3603
      %v3790 = vunpack.c.l.b16 %v3604
      %v3791 = vunpack.c.h.b16 %v3604
      %v3792 = vunpack.c.l.b16 %v3605
      %v3793 = vunpack.c.h.b16 %v3605
      %v3794 = vunpack.c.l.b16 %v3606
      %v3795 = vunpack.c.h.b16 %v3606
      %v3796 = vunpack.c.l.b16 %v3607
      %v3797 = vunpack.c.h.b16 %v3607
      %v3798 = vunpack.c.l.b16 %v3608
      %v3799 = vunpack.c.h.b16 %v3608
      %v3800 = vunpack.c.l.b16 %v3609
      %v3801 = vunpack.c.h.b16 %v3609
      %v3802 = vunpack.c.l.b16 %v3610
      %v3803 = vunpack.c.h.b16 %v3610
      %v3804 = vunpack.c.l.b16 %v3611
      %v3805 = vunpack.c.h.b16 %v3611
      %v3806 = vunpack.c.l.b16 %v3612
      %v3807 = vunpack.c.h.b16 %v3612
      %v3808 = vunpack.c.l.b16 %v3613
      %v3809 = vunpack.c.h.b16 %v3613
      %v3810 = vpack.c.b16 %v3686, %v3682
      %v3811 = vpack.c.b16 %v3687, %v3683
      %v3812 = vpack.c.b16 %v3688, %v3684
      %v3813 = vpack.c.b16 %v3689, %v3685
      %v3814 = vpack.c.b16 %v3694, %v3690
      %v3815 = vpack.c.b16 %v3695, %v3691
      %v3816 = vpack.c.b16 %v3696, %v3692
      %v3817 = vpack.c.b16 %v3697, %v3693
      %v3818 = vpack.c.b16 %v3702, %v3698
      %v3819 = vpack.c.b16 %v3703, %v3699
      %v3820 = vpack.c.b16 %v3704, %v3700
      %v3821 = vpack.c.b16 %v3705, %v3701
      %v3822 = vpack.c.b16 %v3710, %v3706
      %v3823 = vpack.c.b16 %v3711, %v3707
      %v3824 = vpack.c.b16 %v3712, %v3708
      %v3825 = vpack.c.b16 %v3713, %v3709
      %v3826 = vpack.c.b16 %v3718, %v3714
      %v3827 = vpack.c.b16 %v3719, %v3715
      %v3828 = vpack.c.b16 %v3720, %v3716
      %v3829 = vpack.c.b16 %v3721, %v3717
      %v3830 = vpack.c.b16 %v3726, %v3722
      %v3831 = vpack.c.b16 %v3727, %v3723
      %v3832 = vpack.c.b16 %v3728, %v3724
      %v3833 = vpack.c.b16 %v3729, %v3725
      %v3834 = vpack.c.b16 %v3734, %v3730
      %v3835 = vpack.c.b16 %v3735, %v3731
      %v3836 = vpack.c.b16 %v3736, %v3732
      %v3837 = vpack.c.b16 %v3737, %v3733
      %v3838 = vpack.c.b16 %v3742, %v3738
      %v3839 = vpack.c.b16 %v3743, %v3739
      %v3840 = vpack.c.b16 %v3744, %v3740
      %v3841 = vpack.c.b16 %v3745, %v3741
      %v3842 = vpack.c.b16 %v3750, %v3746
      %v3843 = vpack.c.b16 %v3751, %v3747
      %v3844 = vpack.c.b16 %v3752, %v3748
      %v3845 = vpack.c.b16 %v3753, %v3749
      %v3846 = vpack.c.b16 %v3758, %v3754
      %v3847 = vpack.c.b16 %v3759, %v3755
      %v3848 = vpack.c.b16 %v3760, %v3756
      %v3849 = vpack.c.b16 %v3761, %v3757
      %v3850 = vpack.c.b16 %v3766, %v3762
      %v3851 = vpack.c.b16 %v3767, %v3763
      %v3852 = vpack.c.b16 %v3768, %v3764
      %v3853 = vpack.c.b16 %v3769, %v3765
      %v3854 = vpack.c.b16 %v3774, %v3770
      %v3855 = vpack.c.b16 %v3775, %v3771
      %v3856 = vpack.c.b16 %v3776, %v3772
      %v3857 = vpack.c.b16 %v3777, %v3773
      %v3858 = vpack.c.b16 %v3782, %v3778
      %v3859 = vpack.c.b16 %v3783, %v3779
      %v3860 = vpack.c.b16 %v3784, %v3780
      %v3861 = vpack.c.b16 %v3785, %v3781
      %v3862 = vpack.c.b16 %v3790, %v3786
      %v3863 = vpack.c.b16 %v3791, %v3787
      %v3864 = vpack.c.b16 %v3792, %v3788
      %v3865 = vpack.c.b16 %v3793, %v3789
      %v3866 = vpack.c.b16 %v3798, %v3794
      %v3867 = vpack.c.b16 %v3799, %v3795
      %v3868 = vpack.c.b16 %v3800, %v3796
      %v3869 = vpack.c.b16 %v3801, %v3797
      %v3870 = vpack.c.b16 %v3806, %v3802
      %v3871 = vpack.c.b16 %v3807, %v3803
      %v3872 = vpack.c.b16 %v3808, %v3804
      %v3873 = vpack.c.b16 %v3809, %v3805
      %3938 = vmatprep.subr.bf16.mxu0 %v3839
      %3939 = vmatpush1.bf16.msra.mxu0 %v3838
      %3940 = vmatprep.subr.bf16.mxu0 %v3835
      %3941 = vmatpush1.bf16.msra.mxu0 %v3834
      %3942 = vmatprep.subr.bf16.mxu0 %v3831
      %3943 = vmatpush1.bf16.msra.mxu0 %v3830
      %3944 = vmatprep.subr.bf16.mxu0 %v3827
      %3945 = vmatpush1.bf16.msra.mxu0 %v3826
      %3946 = vmatprep.subr.bf16.mxu0 %v3823
      %3947 = vmatpush1.bf16.msra.mxu0 %v3822
      %3948 = vmatprep.subr.bf16.mxu0 %v3819
      %3949 = vmatpush1.bf16.msra.mxu0 %v3818
      %3950 = vmatprep.subr.bf16.mxu0 %v3815
      %3951 = vmatpush1.bf16.msra.mxu0 %v3814
      %3952 = vmatprep.subr.bf16.mxu0 %v3811
      %3953 = vmatpush1.bf16.msra.mxu0 %v3810
      %3954 = vmatprep.subr.bf16.mxu0 %v3871
      %3955 = vmatpush2.bf16.msra.mxu0 %v3870
      %3956 = vmatprep.subr.bf16.mxu0 %v3867
      %3957 = vmatpush2.bf16.msra.mxu0 %v3866
      %3958 = vmatprep.subr.bf16.mxu0 %v3863
      %3959 = vmatpush2.bf16.msra.mxu0 %v3862
      %3960 = vmatprep.subr.bf16.mxu0 %v3859
      %3961 = vmatpush2.bf16.msra.mxu0 %v3858
      %3962 = vmatprep.subr.bf16.mxu0 %v3855
      %3963 = vmatpush2.bf16.msra.mxu0 %v3854
      %3964 = vmatprep.subr.bf16.mxu0 %v3851
      %3965 = vmatpush2.bf16.msra.mxu0 %v3850
      %3966 = vmatprep.subr.bf16.mxu0 %v3847
      %3967 = vmatpush2.bf16.msra.mxu0 %v3846
      %3968 = vmatprep.subr.bf16.mxu0 %v3843
      %3969 = vmatpush2.bf16.msra.mxu0 %v3842
      %3970 = vmatprep.mubr.bf16.mxu0 %v3615
      %3971 = vmatmul.mubr.bf16.gmra.mxu0 %v3614
      %v3972 = vpop.f32.mrf.mxu0
      %v3973 = vadd.f32 0.0, %v3972
      %v3974 = vpop.f32.mrf.mxu0
      %v3975 = vadd.f32 0.0, %v3974
      %v3976 = vpop.f32.mrf.mxu0
      %v3977 = vpop.f32.mrf.mxu0
      %3978 = vdwg.mxu0
      %3979 = vmatprep.subr.bf16.mxu0 %v3841
      %3980 = vmatpush1.bf16.msra.mxu0 %v3840
      %3981 = vmatprep.subr.bf16.mxu0 %v3837
      %3982 = vmatpush1.bf16.msra.mxu0 %v3836
      %3983 = vmatprep.subr.bf16.mxu0 %v3833
      %3984 = vmatpush1.bf16.msra.mxu0 %v3832
      %3985 = vmatprep.subr.bf16.mxu0 %v3829
      %3986 = vmatpush1.bf16.msra.mxu0 %v3828
      %3987 = vmatprep.subr.bf16.mxu0 %v3825
      %3988 = vmatpush1.bf16.msra.mxu0 %v3824
      %3989 = vmatprep.subr.bf16.mxu0 %v3821
      %3990 = vmatpush1.bf16.msra.mxu0 %v3820
      %3991 = vmatprep.subr.bf16.mxu0 %v3817
      %3992 = vmatpush1.bf16.msra.mxu0 %v3816
      %3993 = vmatprep.subr.bf16.mxu0 %v3813
      %3994 = vmatpush1.bf16.msra.mxu0 %v3812
      %3995 = vmatprep.subr.bf16.mxu0 %v3873
      %3996 = vmatpush2.bf16.msra.mxu0 %v3872
      %3997 = vmatprep.subr.bf16.mxu0 %v3869
      %3998 = vmatpush2.bf16.msra.mxu0 %v3868
      %3999 = vmatprep.subr.bf16.mxu0 %v3865
      %4000 = vmatpush2.bf16.msra.mxu0 %v3864
      %4001 = vmatprep.subr.bf16.mxu0 %v3861
      %4002 = vmatpush2.bf16.msra.mxu0 %v3860
      %4003 = vmatprep.subr.bf16.mxu0 %v3857
      %4004 = vmatpush2.bf16.msra.mxu0 %v3856
      %4005 = vmatprep.subr.bf16.mxu0 %v3853
      %4006 = vmatpush2.bf16.msra.mxu0 %v3852
      %4007 = vmatprep.subr.bf16.mxu0 %v3849
      %4008 = vmatpush2.bf16.msra.mxu0 %v3848
      %4009 = vmatprep.subr.bf16.mxu0 %v3845
      %4010 = vmatpush2.bf16.msra.mxu0 %v3844
      %4011 = vmatprep.mubr.bf16.mxu0 %v3615
      %4012 = vmatmul.mubr.bf16.gmra.mxu0 %v3614
      %v4013 = vpop.f32.mrf.mxu0
      %v4014 = vadd.f32 0.0, %v4013
      %v4015 = vpop.f32.mrf.mxu0
      %v4016 = vadd.f32 0.0, %v4015
      %v4017 = vpop.f32.mrf.mxu0
      %v4018 = vpop.f32.mrf.mxu0
      %4019 = vdwg.mxu0
      %v4024 = vcombine.low %v3973, %v3975
      %v4025 = vcombine.low %v4014, %v4016
      %v4027 = vunpack.c.l.s4 1966171168
      %v4028 = vunpack.c.0.s8 %v4027
      %v4029 = vlaneseq
      %v4030 = vshrl.u32 %v4029, 7
      %v4031 = vsub.s32 %v4028, %v4030
      %v4032 = vrot.slane %v4024, %v4031
      %v4034 = vunpack.c.l.s4 1966171168
      %v4035 = vunpack.c.0.s8 %v4034
      %v4036 = vlaneseq
      %v4037 = vshrl.u32 %v4036, 7
      %v4038 = vsub.s32 %v4035, %v4037
      %v4039 = vrot.slane %v4025, %v4038
      %v4040 = vcombine.low %v4032, %v4039
      %v4042 = vunpack.c.l.s4 1966171168
      %v4043 = vunpack.c.0.s8 %v4042
      %v4044 = vlaneseq
      %v4045 = vshrl.u32 %v4044, 7
      %v4046 = vsub.s32 %v4043, %v4045
      %v4047 = vrot.slane %v4040, %v4046
      %v4049 = vadd.f32 %v3548, %v4047
      %s4050 = scalar_lea.vmem %s7, 3072
      %v4051 = vld [vmem:[%s4050] sm:$0xff]
      %v4052 = vld [vmem:[%s4050 + $0x8] sm:$0xff]
      %v4053 = vld [vmem:[%s4050 + $0x10] sm:$0xff]
      %v4054 = vld [vmem:[%s4050 + $0x18] sm:$0xff]
      %v4055 = vld [vmem:[%s4050 + $0x20] sm:$0xff]
      %v4056 = vld [vmem:[%s4050 + $0x28] sm:$0xff]
      %v4057 = vld [vmem:[%s4050 + $0x30] sm:$0xff]
      %v4058 = vld [vmem:[%s4050 + $0x38] sm:$0xff]
      %v4059 = vld [vmem:[%s4050 + $0x40] sm:$0xff]
      %v4060 = vld [vmem:[%s4050 + $0x48] sm:$0xff]
      %v4061 = vld [vmem:[%s4050 + $0x50] sm:$0xff]
      %v4062 = vld [vmem:[%s4050 + $0x58] sm:$0xff]
      %v4063 = vld [vmem:[%s4050 + $0x60] sm:$0xff]
      %v4064 = vld [vmem:[%s4050 + $0x68] sm:$0xff]
      %v4065 = vld [vmem:[%s4050 + $0x70] sm:$0xff]
      %v4066 = vld [vmem:[%s4050 + $0x78] sm:$0xff]
      %v4067 = vld [vmem:[%s4050 + $0x80] sm:$0xff]
      %v4068 = vld [vmem:[%s4050 + $0x88] sm:$0xff]
      %v4069 = vld [vmem:[%s4050 + $0x90] sm:$0xff]
      %v4070 = vld [vmem:[%s4050 + $0x98] sm:$0xff]
      %v4071 = vld [vmem:[%s4050 + $0xa0] sm:$0xff]
      %v4072 = vld [vmem:[%s4050 + $0xa8] sm:$0xff]
      %v4073 = vld [vmem:[%s4050 + $0xb0] sm:$0xff]
      %v4074 = vld [vmem:[%s4050 + $0xb8] sm:$0xff]
      %v4075 = vld [vmem:[%s4050 + $0xc0] sm:$0xff]
      %v4076 = vld [vmem:[%s4050 + $0xc8] sm:$0xff]
      %v4077 = vld [vmem:[%s4050 + $0xd0] sm:$0xff]
      %v4078 = vld [vmem:[%s4050 + $0xd8] sm:$0xff]
      %v4079 = vld [vmem:[%s4050 + $0xe0] sm:$0xff]
      %v4080 = vld [vmem:[%s4050 + $0xe8] sm:$0xff]
      %v4081 = vld [vmem:[%s4050 + $0xf0] sm:$0xff]
      %v4082 = vld [vmem:[%s4050 + $0xf8] sm:$0xff]
      %v4083 = vld [vmem:[%s4050 + $0x100] sm:$0xff]
      %v4084 = vld [vmem:[%s4050 + $0x108] sm:$0xff]
      %v4085 = vld [vmem:[%s4050 + $0x110] sm:$0xff]
      %v4086 = vld [vmem:[%s4050 + $0x118] sm:$0xff]
      %v4087 = vld [vmem:[%s4050 + $0x120] sm:$0xff]
      %v4088 = vld [vmem:[%s4050 + $0x128] sm:$0xff]
      %v4089 = vld [vmem:[%s4050 + $0x130] sm:$0xff]
      %v4090 = vld [vmem:[%s4050 + $0x138] sm:$0xff]
      %v4091 = vld [vmem:[%s4050 + $0x140] sm:$0xff]
      %v4092 = vld [vmem:[%s4050 + $0x148] sm:$0xff]
      %v4093 = vld [vmem:[%s4050 + $0x150] sm:$0xff]
      %v4094 = vld [vmem:[%s4050 + $0x158] sm:$0xff]
      %v4095 = vld [vmem:[%s4050 + $0x160] sm:$0xff]
      %v4096 = vld [vmem:[%s4050 + $0x168] sm:$0xff]
      %v4097 = vld [vmem:[%s4050 + $0x170] sm:$0xff]
      %v4098 = vld [vmem:[%s4050 + $0x178] sm:$0xff]
      %v4099 = vld [vmem:[%s4050 + $0x180] sm:$0xff]
      %v4100 = vld [vmem:[%s4050 + $0x188] sm:$0xff]
      %v4101 = vld [vmem:[%s4050 + $0x190] sm:$0xff]
      %v4102 = vld [vmem:[%s4050 + $0x198] sm:$0xff]
      %v4103 = vld [vmem:[%s4050 + $0x1a0] sm:$0xff]
      %v4104 = vld [vmem:[%s4050 + $0x1a8] sm:$0xff]
      %v4105 = vld [vmem:[%s4050 + $0x1b0] sm:$0xff]
      %v4106 = vld [vmem:[%s4050 + $0x1b8] sm:$0xff]
      %v4107 = vld [vmem:[%s4050 + $0x1c0] sm:$0xff]
      %v4108 = vld [vmem:[%s4050 + $0x1c8] sm:$0xff]
      %v4109 = vld [vmem:[%s4050 + $0x1d0] sm:$0xff]
      %v4110 = vld [vmem:[%s4050 + $0x1d8] sm:$0xff]
      %v4111 = vld [vmem:[%s4050 + $0x1e0] sm:$0xff]
      %v4112 = vld [vmem:[%s4050 + $0x1e8] sm:$0xff]
      %v4113 = vld [vmem:[%s4050 + $0x1f0] sm:$0xff]
      %v4114 = vld [vmem:[%s4050 + $0x1f8] sm:$0xff]
      %v4115 = vrot.slane %v1041, 3
      %v4116 = vrot.slane %v1042, 3
      %v4183 = vunpack.c.l.b16 %v4051
      %v4184 = vunpack.c.h.b16 %v4051
      %v4185 = vunpack.c.l.b16 %v4052
      %v4186 = vunpack.c.h.b16 %v4052
      %v4187 = vunpack.c.l.b16 %v4053
      %v4188 = vunpack.c.h.b16 %v4053
      %v4189 = vunpack.c.l.b16 %v4054
      %v4190 = vunpack.c.h.b16 %v4054
      %v4191 = vunpack.c.l.b16 %v4055
      %v4192 = vunpack.c.h.b16 %v4055
      %v4193 = vunpack.c.l.b16 %v4056
      %v4194 = vunpack.c.h.b16 %v4056
      %v4195 = vunpack.c.l.b16 %v4057
      %v4196 = vunpack.c.h.b16 %v4057
      %v4197 = vunpack.c.l.b16 %v4058
      %v4198 = vunpack.c.h.b16 %v4058
      %v4199 = vunpack.c.l.b16 %v4059
      %v4200 = vunpack.c.h.b16 %v4059
      %v4201 = vunpack.c.l.b16 %v4060
      %v4202 = vunpack.c.h.b16 %v4060
      %v4203 = vunpack.c.l.b16 %v4061
      %v4204 = vunpack.c.h.b16 %v4061
      %v4205 = vunpack.c.l.b16 %v4062
      %v4206 = vunpack.c.h.b16 %v4062
      %v4207 = vunpack.c.l.b16 %v4063
      %v4208 = vunpack.c.h.b16 %v4063
      %v4209 = vunpack.c.l.b16 %v4064
      %v4210 = vunpack.c.h.b16 %v4064
      %v4211 = vunpack.c.l.b16 %v4065
      %v4212 = vunpack.c.h.b16 %v4065
      %v4213 = vunpack.c.l.b16 %v4066
      %v4214 = vunpack.c.h.b16 %v4066
      %v4215 = vunpack.c.l.b16 %v4067
      %v4216 = vunpack.c.h.b16 %v4067
      %v4217 = vunpack.c.l.b16 %v4068
      %v4218 = vunpack.c.h.b16 %v4068
      %v4219 = vunpack.c.l.b16 %v4069
      %v4220 = vunpack.c.h.b16 %v4069
      %v4221 = vunpack.c.l.b16 %v4070
      %v4222 = vunpack.c.h.b16 %v4070
      %v4223 = vunpack.c.l.b16 %v4071
      %v4224 = vunpack.c.h.b16 %v4071
      %v4225 = vunpack.c.l.b16 %v4072
      %v4226 = vunpack.c.h.b16 %v4072
      %v4227 = vunpack.c.l.b16 %v4073
      %v4228 = vunpack.c.h.b16 %v4073
      %v4229 = vunpack.c.l.b16 %v4074
      %v4230 = vunpack.c.h.b16 %v4074
      %v4231 = vunpack.c.l.b16 %v4075
      %v4232 = vunpack.c.h.b16 %v4075
      %v4233 = vunpack.c.l.b16 %v4076
      %v4234 = vunpack.c.h.b16 %v4076
      %v4235 = vunpack.c.l.b16 %v4077
      %v4236 = vunpack.c.h.b16 %v4077
      %v4237 = vunpack.c.l.b16 %v4078
      %v4238 = vunpack.c.h.b16 %v4078
      %v4239 = vunpack.c.l.b16 %v4079
      %v4240 = vunpack.c.h.b16 %v4079
      %v4241 = vunpack.c.l.b16 %v4080
      %v4242 = vunpack.c.h.b16 %v4080
      %v4243 = vunpack.c.l.b16 %v4081
      %v4244 = vunpack.c.h.b16 %v4081
      %v4245 = vunpack.c.l.b16 %v4082
      %v4246 = vunpack.c.h.b16 %v4082
      %v4247 = vunpack.c.l.b16 %v4083
      %v4248 = vunpack.c.h.b16 %v4083
      %v4249 = vunpack.c.l.b16 %v4084
      %v4250 = vunpack.c.h.b16 %v4084
      %v4251 = vunpack.c.l.b16 %v4085
      %v4252 = vunpack.c.h.b16 %v4085
      %v4253 = vunpack.c.l.b16 %v4086
      %v4254 = vunpack.c.h.b16 %v4086
      %v4255 = vunpack.c.l.b16 %v4087
      %v4256 = vunpack.c.h.b16 %v4087
      %v4257 = vunpack.c.l.b16 %v4088
      %v4258 = vunpack.c.h.b16 %v4088
      %v4259 = vunpack.c.l.b16 %v4089
      %v4260 = vunpack.c.h.b16 %v4089
      %v4261 = vunpack.c.l.b16 %v4090
      %v4262 = vunpack.c.h.b16 %v4090
      %v4263 = vunpack.c.l.b16 %v4091
      %v4264 = vunpack.c.h.b16 %v4091
      %v4265 = vunpack.c.l.b16 %v4092
      %v4266 = vunpack.c.h.b16 %v4092
      %v4267 = vunpack.c.l.b16 %v4093
      %v4268 = vunpack.c.h.b16 %v4093
      %v4269 = vunpack.c.l.b16 %v4094
      %v4270 = vunpack.c.h.b16 %v4094
      %v4271 = vunpack.c.l.b16 %v4095
      %v4272 = vunpack.c.h.b16 %v4095
      %v4273 = vunpack.c.l.b16 %v4096
      %v4274 = vunpack.c.h.b16 %v4096
      %v4275 = vunpack.c.l.b16 %v4097
      %v4276 = vunpack.c.h.b16 %v4097
      %v4277 = vunpack.c.l.b16 %v4098
      %v4278 = vunpack.c.h.b16 %v4098
      %v4279 = vunpack.c.l.b16 %v4099
      %v4280 = vunpack.c.h.b16 %v4099
      %v4281 = vunpack.c.l.b16 %v4100
      %v4282 = vunpack.c.h.b16 %v4100
      %v4283 = vunpack.c.l.b16 %v4101
      %v4284 = vunpack.c.h.b16 %v4101
      %v4285 = vunpack.c.l.b16 %v4102
      %v4286 = vunpack.c.h.b16 %v4102
      %v4287 = vunpack.c.l.b16 %v4103
      %v4288 = vunpack.c.h.b16 %v4103
      %v4289 = vunpack.c.l.b16 %v4104
      %v4290 = vunpack.c.h.b16 %v4104
      %v4291 = vunpack.c.l.b16 %v4105
      %v4292 = vunpack.c.h.b16 %v4105
      %v4293 = vunpack.c.l.b16 %v4106
      %v4294 = vunpack.c.h.b16 %v4106
      %v4295 = vunpack.c.l.b16 %v4107
      %v4296 = vunpack.c.h.b16 %v4107
      %v4297 = vunpack.c.l.b16 %v4108
      %v4298 = vunpack.c.h.b16 %v4108
      %v4299 = vunpack.c.l.b16 %v4109
      %v4300 = vunpack.c.h.b16 %v4109
      %v4301 = vunpack.c.l.b16 %v4110
      %v4302 = vunpack.c.h.b16 %v4110
      %v4303 = vunpack.c.l.b16 %v4111
      %v4304 = vunpack.c.h.b16 %v4111
      %v4305 = vunpack.c.l.b16 %v4112
      %v4306 = vunpack.c.h.b16 %v4112
      %v4307 = vunpack.c.l.b16 %v4113
      %v4308 = vunpack.c.h.b16 %v4113
      %v4309 = vunpack.c.l.b16 %v4114
      %v4310 = vunpack.c.h.b16 %v4114
      %v4311 = vpack.c.b16 %v4187, %v4183
      %v4312 = vpack.c.b16 %v4188, %v4184
      %v4313 = vpack.c.b16 %v4189, %v4185
      %v4314 = vpack.c.b16 %v4190, %v4186
      %v4315 = vpack.c.b16 %v4195, %v4191
      %v4316 = vpack.c.b16 %v4196, %v4192
      %v4317 = vpack.c.b16 %v4197, %v4193
      %v4318 = vpack.c.b16 %v4198, %v4194
      %v4319 = vpack.c.b16 %v4203, %v4199
      %v4320 = vpack.c.b16 %v4204, %v4200
      %v4321 = vpack.c.b16 %v4205, %v4201
      %v4322 = vpack.c.b16 %v4206, %v4202
      %v4323 = vpack.c.b16 %v4211, %v4207
      %v4324 = vpack.c.b16 %v4212, %v4208
      %v4325 = vpack.c.b16 %v4213, %v4209
      %v4326 = vpack.c.b16 %v4214, %v4210
      %v4327 = vpack.c.b16 %v4219, %v4215
      %v4328 = vpack.c.b16 %v4220, %v4216
      %v4329 = vpack.c.b16 %v4221, %v4217
      %v4330 = vpack.c.b16 %v4222, %v4218
      %v4331 = vpack.c.b16 %v4227, %v4223
      %v4332 = vpack.c.b16 %v4228, %v4224
      %v4333 = vpack.c.b16 %v4229, %v4225
      %v4334 = vpack.c.b16 %v4230, %v4226
      %v4335 = vpack.c.b16 %v4235, %v4231
      %v4336 = vpack.c.b16 %v4236, %v4232
      %v4337 = vpack.c.b16 %v4237, %v4233
      %v4338 = vpack.c.b16 %v4238, %v4234
      %v4339 = vpack.c.b16 %v4243, %v4239
      %v4340 = vpack.c.b16 %v4244, %v4240
      %v4341 = vpack.c.b16 %v4245, %v4241
      %v4342 = vpack.c.b16 %v4246, %v4242
      %v4343 = vpack.c.b16 %v4251, %v4247
      %v4344 = vpack.c.b16 %v4252, %v4248
      %v4345 = vpack.c.b16 %v4253, %v4249
      %v4346 = vpack.c.b16 %v4254, %v4250
      %v4347 = vpack.c.b16 %v4259, %v4255
      %v4348 = vpack.c.b16 %v4260, %v4256
      %v4349 = vpack.c.b16 %v4261, %v4257
      %v4350 = vpack.c.b16 %v4262, %v4258
      %v4351 = vpack.c.b16 %v4267, %v4263
      %v4352 = vpack.c.b16 %v4268, %v4264
      %v4353 = vpack.c.b16 %v4269, %v4265
      %v4354 = vpack.c.b16 %v4270, %v4266
      %v4355 = vpack.c.b16 %v4275, %v4271
      %v4356 = vpack.c.b16 %v4276, %v4272
      %v4357 = vpack.c.b16 %v4277, %v4273
      %v4358 = vpack.c.b16 %v4278, %v4274
      %v4359 = vpack.c.b16 %v4283, %v4279
      %v4360 = vpack.c.b16 %v4284, %v4280
      %v4361 = vpack.c.b16 %v4285, %v4281
      %v4362 = vpack.c.b16 %v4286, %v4282
      %v4363 = vpack.c.b16 %v4291, %v4287
      %v4364 = vpack.c.b16 %v4292, %v4288
      %v4365 = vpack.c.b16 %v4293, %v4289
      %v4366 = vpack.c.b16 %v4294, %v4290
      %v4367 = vpack.c.b16 %v4299, %v4295
      %v4368 = vpack.c.b16 %v4300, %v4296
      %v4369 = vpack.c.b16 %v4301, %v4297
      %v4370 = vpack.c.b16 %v4302, %v4298
      %v4371 = vpack.c.b16 %v4307, %v4303
      %v4372 = vpack.c.b16 %v4308, %v4304
      %v4373 = vpack.c.b16 %v4309, %v4305
      %v4374 = vpack.c.b16 %v4310, %v4306
      %4439 = vmatprep.subr.bf16.mxu0 %v4340
      %4440 = vmatpush1.bf16.msra.mxu0 %v4339
      %4441 = vmatprep.subr.bf16.mxu0 %v4336
      %4442 = vmatpush1.bf16.msra.mxu0 %v4335
      %4443 = vmatprep.subr.bf16.mxu0 %v4332
      %4444 = vmatpush1.bf16.msra.mxu0 %v4331
      %4445 = vmatprep.subr.bf16.mxu0 %v4328
      %4446 = vmatpush1.bf16.msra.mxu0 %v4327
      %4447 = vmatprep.subr.bf16.mxu0 %v4324
      %4448 = vmatpush1.bf16.msra.mxu0 %v4323
      %4449 = vmatprep.subr.bf16.mxu0 %v4320
      %4450 = vmatpush1.bf16.msra.mxu0 %v4319
      %4451 = vmatprep.subr.bf16.mxu0 %v4316
      %4452 = vmatpush1.bf16.msra.mxu0 %v4315
      %4453 = vmatprep.subr.bf16.mxu0 %v4312
      %4454 = vmatpush1.bf16.msra.mxu0 %v4311
      %4455 = vmatprep.subr.bf16.mxu0 %v4372
      %4456 = vmatpush2.bf16.msra.mxu0 %v4371
      %4457 = vmatprep.subr.bf16.mxu0 %v4368
      %4458 = vmatpush2.bf16.msra.mxu0 %v4367
      %4459 = vmatprep.subr.bf16.mxu0 %v4364
      %4460 = vmatpush2.bf16.msra.mxu0 %v4363
      %4461 = vmatprep.subr.bf16.mxu0 %v4360
      %4462 = vmatpush2.bf16.msra.mxu0 %v4359
      %4463 = vmatprep.subr.bf16.mxu0 %v4356
      %4464 = vmatpush2.bf16.msra.mxu0 %v4355
      %4465 = vmatprep.subr.bf16.mxu0 %v4352
      %4466 = vmatpush2.bf16.msra.mxu0 %v4351
      %4467 = vmatprep.subr.bf16.mxu0 %v4348
      %4468 = vmatpush2.bf16.msra.mxu0 %v4347
      %4469 = vmatprep.subr.bf16.mxu0 %v4344
      %4470 = vmatpush2.bf16.msra.mxu0 %v4343
      %4471 = vmatprep.mubr.bf16.mxu0 %v4116
      %4472 = vmatmul.mubr.bf16.gmra.mxu0 %v4115
      %v4473 = vpop.f32.mrf.mxu0
      %v4474 = vadd.f32 0.0, %v4473
      %v4475 = vpop.f32.mrf.mxu0
      %v4476 = vadd.f32 0.0, %v4475
      %v4477 = vpop.f32.mrf.mxu0
      %v4478 = vpop.f32.mrf.mxu0
      %4479 = vdwg.mxu0
      %4480 = vmatprep.subr.bf16.mxu0 %v4342
      %4481 = vmatpush1.bf16.msra.mxu0 %v4341
      %4482 = vmatprep.subr.bf16.mxu0 %v4338
      %4483 = vmatpush1.bf16.msra.mxu0 %v4337
      %4484 = vmatprep.subr.bf16.mxu0 %v4334
      %4485 = vmatpush1.bf16.msra.mxu0 %v4333
      %4486 = vmatprep.subr.bf16.mxu0 %v4330
      %4487 = vmatpush1.bf16.msra.mxu0 %v4329
      %4488 = vmatprep.subr.bf16.mxu0 %v4326
      %4489 = vmatpush1.bf16.msra.mxu0 %v4325
      %4490 = vmatprep.subr.bf16.mxu0 %v4322
      %4491 = vmatpush1.bf16.msra.mxu0 %v4321
      %4492 = vmatprep.subr.bf16.mxu0 %v4318
      %4493 = vmatpush1.bf16.msra.mxu0 %v4317
      %4494 = vmatprep.subr.bf16.mxu0 %v4314
      %4495 = vmatpush1.bf16.msra.mxu0 %v4313
      %4496 = vmatprep.subr.bf16.mxu0 %v4374
      %4497 = vmatpush2.bf16.msra.mxu0 %v4373
      %4498 = vmatprep.subr.bf16.mxu0 %v4370
      %4499 = vmatpush2.bf16.msra.mxu0 %v4369
      %4500 = vmatprep.subr.bf16.mxu0 %v4366
      %4501 = vmatpush2.bf16.msra.mxu0 %v4365
      %4502 = vmatprep.subr.bf16.mxu0 %v4362
      %4503 = vmatpush2.bf16.msra.mxu0 %v4361
      %4504 = vmatprep.subr.bf16.mxu0 %v4358
      %4505 = vmatpush2.bf16.msra.mxu0 %v4357
      %4506 = vmatprep.subr.bf16.mxu0 %v4354
      %4507 = vmatpush2.bf16.msra.mxu0 %v4353
      %4508 = vmatprep.subr.bf16.mxu0 %v4350
      %4509 = vmatpush2.bf16.msra.mxu0 %v4349
      %4510 = vmatprep.subr.bf16.mxu0 %v4346
      %4511 = vmatpush2.bf16.msra.mxu0 %v4345
      %4512 = vmatprep.mubr.bf16.mxu0 %v4116
      %4513 = vmatmul.mubr.bf16.gmra.mxu0 %v4115
      %v4514 = vpop.f32.mrf.mxu0
      %v4515 = vadd.f32 0.0, %v4514
      %v4516 = vpop.f32.mrf.mxu0
      %v4517 = vadd.f32 0.0, %v4516
      %v4518 = vpop.f32.mrf.mxu0
      %v4519 = vpop.f32.mrf.mxu0
      %4520 = vdwg.mxu0
      %v4525 = vcombine.low %v4474, %v4476
      %v4526 = vcombine.low %v4515, %v4517
      %v4528 = vunpack.c.l.s4 1966171168
      %v4529 = vunpack.c.0.s8 %v4528
      %v4530 = vlaneseq
      %v4531 = vshrl.u32 %v4530, 7
      %v4532 = vsub.s32 %v4529, %v4531
      %v4533 = vrot.slane %v4525, %v4532
      %v4535 = vunpack.c.l.s4 1966171168
      %v4536 = vunpack.c.0.s8 %v4535
      %v4537 = vlaneseq
      %v4538 = vshrl.u32 %v4537, 7
      %v4539 = vsub.s32 %v4536, %v4538
      %v4540 = vrot.slane %v4526, %v4539
      %v4541 = vcombine.low %v4533, %v4540
      %v4543 = vunpack.c.l.s4 1966171168
      %v4544 = vunpack.c.0.s8 %v4543
      %v4545 = vlaneseq
      %v4546 = vshrl.u32 %v4545, 7
      %v4547 = vsub.s32 %v4544, %v4546
      %v4548 = vrot.slane %v4541, %v4547
      %v4550 = vadd.f32 %v4049, %v4548
      %s4551 = scalar_lea.vmem %s7, 3584
      %v4552 = vld [vmem:[%s4551] sm:$0xff]
      %v4553 = vld [vmem:[%s4551 + $0x8] sm:$0xff]
      %v4554 = vld [vmem:[%s4551 + $0x10] sm:$0xff]
      %v4555 = vld [vmem:[%s4551 + $0x18] sm:$0xff]
      %v4556 = vld [vmem:[%s4551 + $0x20] sm:$0xff]
      %v4557 = vld [vmem:[%s4551 + $0x28] sm:$0xff]
      %v4558 = vld [vmem:[%s4551 + $0x30] sm:$0xff]
      %v4559 = vld [vmem:[%s4551 + $0x38] sm:$0xff]
      %v4560 = vld [vmem:[%s4551 + $0x40] sm:$0xff]
      %v4561 = vld [vmem:[%s4551 + $0x48] sm:$0xff]
      %v4562 = vld [vmem:[%s4551 + $0x50] sm:$0xff]
      %v4563 = vld [vmem:[%s4551 + $0x58] sm:$0xff]
      %v4564 = vld [vmem:[%s4551 + $0x60] sm:$0xff]
      %v4565 = vld [vmem:[%s4551 + $0x68] sm:$0xff]
      %v4566 = vld [vmem:[%s4551 + $0x70] sm:$0xff]
      %v4567 = vld [vmem:[%s4551 + $0x78] sm:$0xff]
      %v4568 = vld [vmem:[%s4551 + $0x80] sm:$0xff]
      %v4569 = vld [vmem:[%s4551 + $0x88] sm:$0xff]
      %v4570 = vld [vmem:[%s4551 + $0x90] sm:$0xff]
      %v4571 = vld [vmem:[%s4551 + $0x98] sm:$0xff]
      %v4572 = vld [vmem:[%s4551 + $0xa0] sm:$0xff]
      %v4573 = vld [vmem:[%s4551 + $0xa8] sm:$0xff]
      %v4574 = vld [vmem:[%s4551 + $0xb0] sm:$0xff]
      %v4575 = vld [vmem:[%s4551 + $0xb8] sm:$0xff]
      %v4576 = vld [vmem:[%s4551 + $0xc0] sm:$0xff]
      %v4577 = vld [vmem:[%s4551 + $0xc8] sm:$0xff]
      %v4578 = vld [vmem:[%s4551 + $0xd0] sm:$0xff]
      %v4579 = vld [vmem:[%s4551 + $0xd8] sm:$0xff]
      %v4580 = vld [vmem:[%s4551 + $0xe0] sm:$0xff]
      %v4581 = vld [vmem:[%s4551 + $0xe8] sm:$0xff]
      %v4582 = vld [vmem:[%s4551 + $0xf0] sm:$0xff]
      %v4583 = vld [vmem:[%s4551 + $0xf8] sm:$0xff]
      %v4584 = vld [vmem:[%s4551 + $0x100] sm:$0xff]
      %v4585 = vld [vmem:[%s4551 + $0x108] sm:$0xff]
      %v4586 = vld [vmem:[%s4551 + $0x110] sm:$0xff]
      %v4587 = vld [vmem:[%s4551 + $0x118] sm:$0xff]
      %v4588 = vld [vmem:[%s4551 + $0x120] sm:$0xff]
      %v4589 = vld [vmem:[%s4551 + $0x128] sm:$0xff]
      %v4590 = vld [vmem:[%s4551 + $0x130] sm:$0xff]
      %v4591 = vld [vmem:[%s4551 + $0x138] sm:$0xff]
      %v4592 = vld [vmem:[%s4551 + $0x140] sm:$0xff]
      %v4593 = vld [vmem:[%s4551 + $0x148] sm:$0xff]
      %v4594 = vld [vmem:[%s4551 + $0x150] sm:$0xff]
      %v4595 = vld [vmem:[%s4551 + $0x158] sm:$0xff]
      %v4596 = vld [vmem:[%s4551 + $0x160] sm:$0xff]
      %v4597 = vld [vmem:[%s4551 + $0x168] sm:$0xff]
      %v4598 = vld [vmem:[%s4551 + $0x170] sm:$0xff]
      %v4599 = vld [vmem:[%s4551 + $0x178] sm:$0xff]
      %v4600 = vld [vmem:[%s4551 + $0x180] sm:$0xff]
      %v4601 = vld [vmem:[%s4551 + $0x188] sm:$0xff]
      %v4602 = vld [vmem:[%s4551 + $0x190] sm:$0xff]
      %v4603 = vld [vmem:[%s4551 + $0x198] sm:$0xff]
      %v4604 = vld [vmem:[%s4551 + $0x1a0] sm:$0xff]
      %v4605 = vld [vmem:[%s4551 + $0x1a8] sm:$0xff]
      %v4606 = vld [vmem:[%s4551 + $0x1b0] sm:$0xff]
      %v4607 = vld [vmem:[%s4551 + $0x1b8] sm:$0xff]
      %v4608 = vld [vmem:[%s4551 + $0x1c0] sm:$0xff]
      %v4609 = vld [vmem:[%s4551 + $0x1c8] sm:$0xff]
      %v4610 = vld [vmem:[%s4551 + $0x1d0] sm:$0xff]
      %v4611 = vld [vmem:[%s4551 + $0x1d8] sm:$0xff]
      %v4612 = vld [vmem:[%s4551 + $0x1e0] sm:$0xff]
      %v4613 = vld [vmem:[%s4551 + $0x1e8] sm:$0xff]
      %v4614 = vld [vmem:[%s4551 + $0x1f0] sm:$0xff]
      %v4615 = vld [vmem:[%s4551 + $0x1f8] sm:$0xff]
      %v4616 = vrot.slane %v1605, 3
      %v4617 = vrot.slane %v1608, 3
      %v4684 = vunpack.c.l.b16 %v4552
      %v4685 = vunpack.c.h.b16 %v4552
      %v4686 = vunpack.c.l.b16 %v4553
      %v4687 = vunpack.c.h.b16 %v4553
      %v4688 = vunpack.c.l.b16 %v4554
      %v4689 = vunpack.c.h.b16 %v4554
      %v4690 = vunpack.c.l.b16 %v4555
      %v4691 = vunpack.c.h.b16 %v4555
      %v4692 = vunpack.c.l.b16 %v4556
      %v4693 = vunpack.c.h.b16 %v4556
      %v4694 = vunpack.c.l.b16 %v4557
      %v4695 = vunpack.c.h.b16 %v4557
      %v4696 = vunpack.c.l.b16 %v4558
      %v4697 = vunpack.c.h.b16 %v4558
      %v4698 = vunpack.c.l.b16 %v4559
      %v4699 = vunpack.c.h.b16 %v4559
      %v4700 = vunpack.c.l.b16 %v4560
      %v4701 = vunpack.c.h.b16 %v4560
      %v4702 = vunpack.c.l.b16 %v4561
      %v4703 = vunpack.c.h.b16 %v4561
      %v4704 = vunpack.c.l.b16 %v4562
      %v4705 = vunpack.c.h.b16 %v4562
      %v4706 = vunpack.c.l.b16 %v4563
      %v4707 = vunpack.c.h.b16 %v4563
      %v4708 = vunpack.c.l.b16 %v4564
      %v4709 = vunpack.c.h.b16 %v4564
      %v4710 = vunpack.c.l.b16 %v4565
      %v4711 = vunpack.c.h.b16 %v4565
      %v4712 = vunpack.c.l.b16 %v4566
      %v4713 = vunpack.c.h.b16 %v4566
      %v4714 = vunpack.c.l.b16 %v4567
      %v4715 = vunpack.c.h.b16 %v4567
      %v4716 = vunpack.c.l.b16 %v4568
      %v4717 = vunpack.c.h.b16 %v4568
      %v4718 = vunpack.c.l.b16 %v4569
      %v4719 = vunpack.c.h.b16 %v4569
      %v4720 = vunpack.c.l.b16 %v4570
      %v4721 = vunpack.c.h.b16 %v4570
      %v4722 = vunpack.c.l.b16 %v4571
      %v4723 = vunpack.c.h.b16 %v4571
      %v4724 = vunpack.c.l.b16 %v4572
      %v4725 = vunpack.c.h.b16 %v4572
      %v4726 = vunpack.c.l.b16 %v4573
      %v4727 = vunpack.c.h.b16 %v4573
      %v4728 = vunpack.c.l.b16 %v4574
      %v4729 = vunpack.c.h.b16 %v4574
      %v4730 = vunpack.c.l.b16 %v4575
      %v4731 = vunpack.c.h.b16 %v4575
      %v4732 = vunpack.c.l.b16 %v4576
      %v4733 = vunpack.c.h.b16 %v4576
      %v4734 = vunpack.c.l.b16 %v4577
      %v4735 = vunpack.c.h.b16 %v4577
      %v4736 = vunpack.c.l.b16 %v4578
      %v4737 = vunpack.c.h.b16 %v4578
      %v4738 = vunpack.c.l.b16 %v4579
      %v4739 = vunpack.c.h.b16 %v4579
      %v4740 = vunpack.c.l.b16 %v4580
      %v4741 = vunpack.c.h.b16 %v4580
      %v4742 = vunpack.c.l.b16 %v4581
      %v4743 = vunpack.c.h.b16 %v4581
      %v4744 = vunpack.c.l.b16 %v4582
      %v4745 = vunpack.c.h.b16 %v4582
      %v4746 = vunpack.c.l.b16 %v4583
      %v4747 = vunpack.c.h.b16 %v4583
      %v4748 = vunpack.c.l.b16 %v4584
      %v4749 = vunpack.c.h.b16 %v4584
      %v4750 = vunpack.c.l.b16 %v4585
      %v4751 = vunpack.c.h.b16 %v4585
      %v4752 = vunpack.c.l.b16 %v4586
      %v4753 = vunpack.c.h.b16 %v4586
      %v4754 = vunpack.c.l.b16 %v4587
      %v4755 = vunpack.c.h.b16 %v4587
      %v4756 = vunpack.c.l.b16 %v4588
      %v4757 = vunpack.c.h.b16 %v4588
      %v4758 = vunpack.c.l.b16 %v4589
      %v4759 = vunpack.c.h.b16 %v4589
      %v4760 = vunpack.c.l.b16 %v4590
      %v4761 = vunpack.c.h.b16 %v4590
      %v4762 = vunpack.c.l.b16 %v4591
      %v4763 = vunpack.c.h.b16 %v4591
      %v4764 = vunpack.c.l.b16 %v4592
      %v4765 = vunpack.c.h.b16 %v4592
      %v4766 = vunpack.c.l.b16 %v4593
      %v4767 = vunpack.c.h.b16 %v4593
      %v4768 = vunpack.c.l.b16 %v4594
      %v4769 = vunpack.c.h.b16 %v4594
      %v4770 = vunpack.c.l.b16 %v4595
      %v4771 = vunpack.c.h.b16 %v4595
      %v4772 = vunpack.c.l.b16 %v4596
      %v4773 = vunpack.c.h.b16 %v4596
      %v4774 = vunpack.c.l.b16 %v4597
      %v4775 = vunpack.c.h.b16 %v4597
      %v4776 = vunpack.c.l.b16 %v4598
      %v4777 = vunpack.c.h.b16 %v4598
      %v4778 = vunpack.c.l.b16 %v4599
      %v4779 = vunpack.c.h.b16 %v4599
      %v4780 = vunpack.c.l.b16 %v4600
      %v4781 = vunpack.c.h.b16 %v4600
      %v4782 = vunpack.c.l.b16 %v4601
      %v4783 = vunpack.c.h.b16 %v4601
      %v4784 = vunpack.c.l.b16 %v4602
      %v4785 = vunpack.c.h.b16 %v4602
      %v4786 = vunpack.c.l.b16 %v4603
      %v4787 = vunpack.c.h.b16 %v4603
      %v4788 = vunpack.c.l.b16 %v4604
      %v4789 = vunpack.c.h.b16 %v4604
      %v4790 = vunpack.c.l.b16 %v4605
      %v4791 = vunpack.c.h.b16 %v4605
      %v4792 = vunpack.c.l.b16 %v4606
      %v4793 = vunpack.c.h.b16 %v4606
      %v4794 = vunpack.c.l.b16 %v4607
      %v4795 = vunpack.c.h.b16 %v4607
      %v4796 = vunpack.c.l.b16 %v4608
      %v4797 = vunpack.c.h.b16 %v4608
      %v4798 = vunpack.c.l.b16 %v4609
      %v4799 = vunpack.c.h.b16 %v4609
      %v4800 = vunpack.c.l.b16 %v4610
      %v4801 = vunpack.c.h.b16 %v4610
      %v4802 = vunpack.c.l.b16 %v4611
      %v4803 = vunpack.c.h.b16 %v4611
      %v4804 = vunpack.c.l.b16 %v4612
      %v4805 = vunpack.c.h.b16 %v4612
      %v4806 = vunpack.c.l.b16 %v4613
      %v4807 = vunpack.c.h.b16 %v4613
      %v4808 = vunpack.c.l.b16 %v4614
      %v4809 = vunpack.c.h.b16 %v4614
      %v4810 = vunpack.c.l.b16 %v4615
      %v4811 = vunpack.c.h.b16 %v4615
      %v4812 = vpack.c.b16 %v4688, %v4684
      %v4813 = vpack.c.b16 %v4689, %v4685
      %v4814 = vpack.c.b16 %v4690, %v4686
      %v4815 = vpack.c.b16 %v4691, %v4687
      %v4816 = vpack.c.b16 %v4696, %v4692
      %v4817 = vpack.c.b16 %v4697, %v4693
      %v4818 = vpack.c.b16 %v4698, %v4694
      %v4819 = vpack.c.b16 %v4699, %v4695
      %v4820 = vpack.c.b16 %v4704, %v4700
      %v4821 = vpack.c.b16 %v4705, %v4701
      %v4822 = vpack.c.b16 %v4706, %v4702
      %v4823 = vpack.c.b16 %v4707, %v4703
      %v4824 = vpack.c.b16 %v4712, %v4708
      %v4825 = vpack.c.b16 %v4713, %v4709
      %v4826 = vpack.c.b16 %v4714, %v4710
      %v4827 = vpack.c.b16 %v4715, %v4711
      %v4828 = vpack.c.b16 %v4720, %v4716
      %v4829 = vpack.c.b16 %v4721, %v4717
      %v4830 = vpack.c.b16 %v4722, %v4718
      %v4831 = vpack.c.b16 %v4723, %v4719
      %v4832 = vpack.c.b16 %v4728, %v4724
      %v4833 = vpack.c.b16 %v4729, %v4725
      %v4834 = vpack.c.b16 %v4730, %v4726
      %v4835 = vpack.c.b16 %v4731, %v4727
      %v4836 = vpack.c.b16 %v4736, %v4732
      %v4837 = vpack.c.b16 %v4737, %v4733
      %v4838 = vpack.c.b16 %v4738, %v4734
      %v4839 = vpack.c.b16 %v4739, %v4735
      %v4840 = vpack.c.b16 %v4744, %v4740
      %v4841 = vpack.c.b16 %v4745, %v4741
      %v4842 = vpack.c.b16 %v4746, %v4742
      %v4843 = vpack.c.b16 %v4747, %v4743
      %v4844 = vpack.c.b16 %v4752, %v4748
      %v4845 = vpack.c.b16 %v4753, %v4749
      %v4846 = vpack.c.b16 %v4754, %v4750
      %v4847 = vpack.c.b16 %v4755, %v4751
      %v4848 = vpack.c.b16 %v4760, %v4756
      %v4849 = vpack.c.b16 %v4761, %v4757
      %v4850 = vpack.c.b16 %v4762, %v4758
      %v4851 = vpack.c.b16 %v4763, %v4759
      %v4852 = vpack.c.b16 %v4768, %v4764
      %v4853 = vpack.c.b16 %v4769, %v4765
      %v4854 = vpack.c.b16 %v4770, %v4766
      %v4855 = vpack.c.b16 %v4771, %v4767
      %v4856 = vpack.c.b16 %v4776, %v4772
      %v4857 = vpack.c.b16 %v4777, %v4773
      %v4858 = vpack.c.b16 %v4778, %v4774
      %v4859 = vpack.c.b16 %v4779, %v4775
      %v4860 = vpack.c.b16 %v4784, %v4780
      %v4861 = vpack.c.b16 %v4785, %v4781
      %v4862 = vpack.c.b16 %v4786, %v4782
      %v4863 = vpack.c.b16 %v4787, %v4783
      %v4864 = vpack.c.b16 %v4792, %v4788
      %v4865 = vpack.c.b16 %v4793, %v4789
      %v4866 = vpack.c.b16 %v4794, %v4790
      %v4867 = vpack.c.b16 %v4795, %v4791
      %v4868 = vpack.c.b16 %v4800, %v4796
      %v4869 = vpack.c.b16 %v4801, %v4797
      %v4870 = vpack.c.b16 %v4802, %v4798
      %v4871 = vpack.c.b16 %v4803, %v4799
      %v4872 = vpack.c.b16 %v4808, %v4804
      %v4873 = vpack.c.b16 %v4809, %v4805
      %v4874 = vpack.c.b16 %v4810, %v4806
      %v4875 = vpack.c.b16 %v4811, %v4807
      %4940 = vmatprep.subr.bf16.mxu0 %v4841
      %4941 = vmatpush1.bf16.msra.mxu0 %v4840
      %4942 = vmatprep.subr.bf16.mxu0 %v4837
      %4943 = vmatpush1.bf16.msra.mxu0 %v4836
      %4944 = vmatprep.subr.bf16.mxu0 %v4833
      %4945 = vmatpush1.bf16.msra.mxu0 %v4832
      %4946 = vmatprep.subr.bf16.mxu0 %v4829
      %4947 = vmatpush1.bf16.msra.mxu0 %v4828
      %4948 = vmatprep.subr.bf16.mxu0 %v4825
      %4949 = vmatpush1.bf16.msra.mxu0 %v4824
      %4950 = vmatprep.subr.bf16.mxu0 %v4821
      %4951 = vmatpush1.bf16.msra.mxu0 %v4820
      %4952 = vmatprep.subr.bf16.mxu0 %v4817
      %4953 = vmatpush1.bf16.msra.mxu0 %v4816
      %4954 = vmatprep.subr.bf16.mxu0 %v4813
      %4955 = vmatpush1.bf16.msra.mxu0 %v4812
      %4956 = vmatprep.subr.bf16.mxu0 %v4873
      %4957 = vmatpush2.bf16.msra.mxu0 %v4872
      %4958 = vmatprep.subr.bf16.mxu0 %v4869
      %4959 = vmatpush2.bf16.msra.mxu0 %v4868
      %4960 = vmatprep.subr.bf16.mxu0 %v4865
      %4961 = vmatpush2.bf16.msra.mxu0 %v4864
      %4962 = vmatprep.subr.bf16.mxu0 %v4861
      %4963 = vmatpush2.bf16.msra.mxu0 %v4860
      %4964 = vmatprep.subr.bf16.mxu0 %v4857
      %4965 = vmatpush2.bf16.msra.mxu0 %v4856
      %4966 = vmatprep.subr.bf16.mxu0 %v4853
      %4967 = vmatpush2.bf16.msra.mxu0 %v4852
      %4968 = vmatprep.subr.bf16.mxu0 %v4849
      %4969 = vmatpush2.bf16.msra.mxu0 %v4848
      %4970 = vmatprep.subr.bf16.mxu0 %v4845
      %4971 = vmatpush2.bf16.msra.mxu0 %v4844
      %4972 = vmatprep.mubr.bf16.mxu0 %v4617
      %4973 = vmatmul.mubr.bf16.gmra.mxu0 %v4616
      %v4974 = vpop.f32.mrf.mxu0
      %v4975 = vadd.f32 0.0, %v4974
      %v4976 = vpop.f32.mrf.mxu0
      %v4977 = vadd.f32 0.0, %v4976
      %v4978 = vpop.f32.mrf.mxu0
      %v4979 = vpop.f32.mrf.mxu0
      %4980 = vdwg.mxu0
      %4981 = vmatprep.subr.bf16.mxu0 %v4843
      %4982 = vmatpush1.bf16.msra.mxu0 %v4842
      %4983 = vmatprep.subr.bf16.mxu0 %v4839
      %4984 = vmatpush1.bf16.msra.mxu0 %v4838
      %4985 = vmatprep.subr.bf16.mxu0 %v4835
      %4986 = vmatpush1.bf16.msra.mxu0 %v4834
      %4987 = vmatprep.subr.bf16.mxu0 %v4831
      %4988 = vmatpush1.bf16.msra.mxu0 %v4830
      %4989 = vmatprep.subr.bf16.mxu0 %v4827
      %4990 = vmatpush1.bf16.msra.mxu0 %v4826
      %4991 = vmatprep.subr.bf16.mxu0 %v4823
      %4992 = vmatpush1.bf16.msra.mxu0 %v4822
      %4993 = vmatprep.subr.bf16.mxu0 %v4819
      %4994 = vmatpush1.bf16.msra.mxu0 %v4818
      %4995 = vmatprep.subr.bf16.mxu0 %v4815
      %4996 = vmatpush1.bf16.msra.mxu0 %v4814
      %4997 = vmatprep.subr.bf16.mxu0 %v4875
      %4998 = vmatpush2.bf16.msra.mxu0 %v4874
      %4999 = vmatprep.subr.bf16.mxu0 %v4871
      %5000 = vmatpush2.bf16.msra.mxu0 %v4870
      %5001 = vmatprep.subr.bf16.mxu0 %v4867
      %5002 = vmatpush2.bf16.msra.mxu0 %v4866
      %5003 = vmatprep.subr.bf16.mxu0 %v4863
      %5004 = vmatpush2.bf16.msra.mxu0 %v4862
      %5005 = vmatprep.subr.bf16.mxu0 %v4859
      %5006 = vmatpush2.bf16.msra.mxu0 %v4858
      %5007 = vmatprep.subr.bf16.mxu0 %v4855
      %5008 = vmatpush2.bf16.msra.mxu0 %v4854
      %5009 = vmatprep.subr.bf16.mxu0 %v4851
      %5010 = vmatpush2.bf16.msra.mxu0 %v4850
      %5011 = vmatprep.subr.bf16.mxu0 %v4847
      %5012 = vmatpush2.bf16.msra.mxu0 %v4846
      %5013 = vmatprep.mubr.bf16.mxu0 %v4617
      %5014 = vmatmul.mubr.bf16.gmra.mxu0 %v4616
      %v5015 = vpop.f32.mrf.mxu0
      %v5016 = vadd.f32 0.0, %v5015
      %v5017 = vpop.f32.mrf.mxu0
      %v5018 = vadd.f32 0.0, %v5017
      %v5019 = vpop.f32.mrf.mxu0
      %v5020 = vpop.f32.mrf.mxu0
      %5021 = vdwg.mxu0
      %v5026 = vcombine.low %v4975, %v4977
      %v5027 = vcombine.low %v5016, %v5018
      %v5029 = vunpack.c.l.s4 1966171168
      %v5030 = vunpack.c.0.s8 %v5029
      %v5031 = vlaneseq
      %v5032 = vshrl.u32 %v5031, 7
      %v5033 = vsub.s32 %v5030, %v5032
      %v5034 = vrot.slane %v5026, %v5033
      %v5036 = vunpack.c.l.s4 1966171168
      %v5037 = vunpack.c.0.s8 %v5036
      %v5038 = vlaneseq
      %v5039 = vshrl.u32 %v5038, 7
      %v5040 = vsub.s32 %v5037, %v5039
      %v5041 = vrot.slane %v5027, %v5040
      %v5042 = vcombine.low %v5034, %v5041
      %v5044 = vunpack.c.l.s4 1966171168
      %v5045 = vunpack.c.0.s8 %v5044
      %v5046 = vlaneseq
      %v5047 = vshrl.u32 %v5046, 7
      %v5048 = vsub.s32 %v5045, %v5047
      %v5049 = vrot.slane %v5042, %v5048
      %v5051 = vadd.f32 %v4550, %v5049
      %v5052 = vlaneseq
      %vm5053 = vcmp.ge.s32.totalorder %v5052, 0
      %vm5054 = vcmp.lt.s32.totalorder %v5052, 512
      %vm5055 = vmand %vm5053, %vm5054
      %5056 = vst.msk [vmem:[%s330] sm:$0xf] %vm5055, %v5051
      %p5057 = scmp.lt.s32.totalorder %s20, 1
      %s5058 = scalar_select %p5057, %s20, 1
      %s5059 = smul.addr %s5058, 4
      %s5060 = scalar_lea.vmem %s9, %s5059
      // Predicated region
      $region57: #{encoder_forward.1} parent=55 // pred_check
        %p5061 = pneg %p232
      $region58: #{encoder_forward.1} parent=55 // pred_check_branch
        %5063 = sbr.rel (%p5061) target = $region60
      $region59: #{encoder_forward.1} parent=55 // pred_region
        _
      $region60: #{encoder_forward.1} parent=55 // pred_fallthru
        _
    $region56: #{encoder_forward.1} parent=5 // pred_fallthru
      _
    %p5064 = scmp.le.s32.totalorder 2, %s15
    // Predicated region
    $region61: #{encoder_forward.1} parent=5 // pred_check
      %p5065 = pneg %p5064
    $region62: #{encoder_forward.1} parent=5 // pred_check_branch
      %5067 = sbr.rel (%p5065) target = $region64
    $region63: #{encoder_forward.1} parent=5 // pred_region
      %s5068 = ssub.s32 %s15, 2
      // Predicated region
      $region65: #{encoder_forward.1} parent=63 // pred_check
        %p5069 = pneg %p238
      $region66: #{encoder_forward.1} parent=63 // pred_check_branch
        %5071 = sbr.rel (%p5069) target = $region68
      $region67: #{encoder_forward.1} parent=63 // pred_region
        %p5072 = scmp.lt.s32.totalorder %s21, 1
        %s5073 = scalar_select %p5072, %s21, 1
        %s5074 = smul.addr %s5073, 4
        %s5075 = scalar_lea.vmem %s9, %s5074
      $region68: #{encoder_forward.1} parent=63 // pred_fallthru
        _
    $region64: #{encoder_forward.1} parent=5 // pred_fallthru
      _
  $region6: #{encoder_forward.1} parent=0 // loop_footer
    %s19 = sadd.s32 1, %s15
  $region7: #{encoder_forward.1} parent=0 // loop_footer_branch
    %14 = sbr.rel target = $region3
  $region8: #{encoder_forward.1} parent=0 // loop_exit
    _

</llo_original>
